<compile_context>
chip_gen: v6e
topology: v6e:2x2x1
jax: 0.10.0
libtpu: 0.0.40
codegen_flags: <defaults>
</compile_context>

<pallas_src>
import functools
import math

import jax
import jax.numpy as jnp
from jax import lax
from jax.experimental import pallas as pl
from jax.experimental.pallas import tpu as pltpu

# ---- reduced "bert-base"-style config (synthetic, small) ----
VOCAB = 100
HIDDEN = 128
N_LAYERS = 2
N_HEADS = 4
D_HEAD = HIDDEN // N_HEADS
INTERMEDIATE = 512
MAX_POS = 64
TYPE_VOCAB = 2
LN_EPS = 1e-12
FC_PAD = 128  # pad the Linear(hidden, 1) output to a lane-dense 128-wide tile


def _layer_norm(x, gamma, beta, eps):
    mu = jnp.mean(x, axis=-1, keepdims=True)
    xc = x - mu
    var = jnp.mean(xc * xc, axis=-1, keepdims=True)
    return xc * lax.rsqrt(var + eps) * gamma + beta


# --------------------------------------------------------------------------
# Single fused whole-model kernel
# --------------------------------------------------------------------------
def _bert_kernel(emb_ref, mask_ref, eg_ref, eb_ref,
                 wqkv_ref, bqkv_ref, wo_ref, bo_ref, g1_ref, b1_ref,
                 wi_ref, bi_ref, wo2_ref, bo2_ref, g2_ref, b2_ref,
                 wp_ref, bp_ref, wfc_ref, bfc_ref,
                 out_ref, h_ref,
                 *, scale, hidden, n_heads, d_head, eps):
    layer = pl.program_id(1)

    # Layer 0: fold embedding LayerNorm into the fused kernel (h lives in VMEM scratch).
    @pl.when(layer == 0)
    def _():
        h_ref[...] = _layer_norm(emb_ref[0].astype(jnp.float32),
                                 eg_ref[...], eb_ref[...], eps)

    h = h_ref[...]                                                       # (S, H) f32

    # Fused QKV projection: one (S, 3H) GEMM, bf16 MXU inputs, f32 accumulation.
    qkv = (jnp.dot(h.astype(jnp.bfloat16), wqkv_ref[0],
                   preferred_element_type=jnp.float32) + bqkv_ref[0])    # (S, 3H)

    # HF-style additive key mask, broadcast over query rows (no (S, S) bias in HBM).
    bias = (1.0 - mask_ref[0]) * -10000.0                                # (1, S)

    ctx_heads = []
    for hd in range(n_heads):                                            # unrolled at trace time
        q = qkv[:, hd * d_head:(hd + 1) * d_head]
        k = qkv[:, hidden + hd * d_head: hidden + (hd + 1) * d_head]
        v = qkv[:, 2 * hidden + hd * d_head: 2 * hidden + (hd + 1) * d_head]
        # Contract last dims of q and k directly (no explicit k.T through the XLU).
        s = lax.dot_general(q.astype(jnp.bfloat16), k.astype(jnp.bfloat16),
                            (((1,), (1,)), ((), ())),
                            preferred_element_type=jnp.float32) * scale + bias
        s = s - jnp.max(s, axis=-1, keepdims=True)
        p = jnp.exp(s)
        p = p / jnp.sum(p, axis=-1, keepdims=True)                       # exact softmax
        ctx_heads.append(jnp.dot(p.astype(jnp.bfloat16), v.astype(jnp.bfloat16),
                                 preferred_element_type=jnp.float32))
    ctx = jnp.concatenate(ctx_heads, axis=-1)                            # (S, H) f32

    # Output projection + residual + LayerNorm fused.
    y = (jnp.dot(ctx.astype(jnp.bfloat16), wo_ref[0],
                 preferred_element_type=jnp.float32) + bo_ref[0] + h)
    h1 = _layer_norm(y, g1_ref[0], b1_ref[0], eps)

    # GELU FFN + second projection + residual + LayerNorm fused.
    inter = (jnp.dot(h1.astype(jnp.bfloat16), wi_ref[0],
                     preferred_element_type=jnp.float32) + bi_ref[0])
    # TODO(synk): HF BERT uses exact erf-GELU; tanh approximation used here.
    inter = jax.nn.gelu(inter, approximate=True)
    y2 = (jnp.dot(inter.astype(jnp.bfloat16), wo2_ref[0],
                  preferred_element_type=jnp.float32) + bo2_ref[0] + h1)
    h2 = _layer_norm(y2, g2_ref[0], b2_ref[0], eps)
    h_ref[...] = h2

    # Last layer: fused pooler (tanh over [CLS]) + Linear(H, 1) (lane-padded output).
    @pl.when(layer == pl.num_programs(1) - 1)
    def _():
        cls = h2[0:1, :]                                                 # (1, H)
        pooled = jnp.tanh(jnp.dot(cls.astype(jnp.bfloat16), wp_ref[...],
                                  preferred_element_type=jnp.float32) + bp_ref[...])
        out = (jnp.dot(pooled.astype(jnp.bfloat16), wfc_ref[...],
                       preferred_element_type=jnp.float32) + bfc_ref[...])
        out_ref[0] = out.astype(out_ref.dtype)


def fused_bert(params, emb, mask3):
    B, S, H = emb.shape
    L = N_LAYERS
    kernel = functools.partial(
        _bert_kernel, scale=1.0 / math.sqrt(D_HEAD),
        hidden=HIDDEN, n_heads=N_HEADS, d_head=D_HEAD, eps=LN_EPS)

    per_batch = lambda b, l: (b, 0, 0)     # fetched once per batch (block idx const in l)
    per_layer = lambda b, l: (l, 0, 0)     # streamed layer weights
    const2 = lambda b, l: (0, 0)           # shared small params

    return pl.pallas_call(
        kernel,
        out_shape=jax.ShapeDtypeStruct((B, 1, FC_PAD), jnp.float32),
        grid_spec=pltpu.PrefetchScalarGridSpec(
            num_scalar_prefetch=0,
            grid=(B, L),
            in_specs=[
                pl.BlockSpec((1, S, H), per_batch),                 # emb (sum of 3 tables)
                pl.BlockSpec((1, 1, S), per_batch),                 # attention mask
                pl.BlockSpec((1, H), const2),                       # emb LN gamma
                pl.BlockSpec((1, H), const2),                       # emb LN beta
                pl.BlockSpec((1, H, 3 * H), per_layer),             # w_qkv (bf16)
                pl.BlockSpec((1, 1, 3 * H), per_layer),             # b_qkv
                pl.BlockSpec((1, H, H), per_layer),                 # wo (bf16)
                pl.BlockSpec((1, 1, H), per_layer),                 # bo
                pl.BlockSpec((1, 1, H), per_layer),                 # ln1 gamma
                pl.BlockSpec((1, 1, H), per_layer),                 # ln1 beta
                pl.BlockSpec((1, H, INTERMEDIATE), per_layer),      # wi (bf16)
                pl.BlockSpec((1, 1, INTERMEDIATE), per_layer),      # bi
                pl.BlockSpec((1, INTERMEDIATE, H), per_layer),      # wo2 (bf16)
                pl.BlockSpec((1, 1, H), per_layer),                 # bo2
                pl.BlockSpec((1, 1, H), per_layer),                 # ln2 gamma
                pl.BlockSpec((1, 1, H), per_layer),                 # ln2 beta
                pl.BlockSpec((H, H), const2),                       # pooler W (bf16)
                pl.BlockSpec((1, H), const2),                       # pooler b
                pl.BlockSpec((H, FC_PAD), const2),                  # fc W, lane-padded (bf16)
                pl.BlockSpec((1, FC_PAD), const2),                  # fc b, lane-padded
            ],
            out_specs=pl.BlockSpec((1, 1, FC_PAD), per_batch),
            scratch_shapes=[pltpu.VMEM((S, HIDDEN), jnp.float32)],  # resident activations
        ),
        compiler_params=pltpu.CompilerParams(
            dimension_semantics=("parallel", "arbitrary")),
    )(emb, mask3,
      params["emb_ln_g"], params["emb_ln_b"],
      params["w_qkv"], params["b_qkv"], params["wo"], params["bo"],
      params["ln1_g"], params["ln1_b"], params["wi"], params["bi"],
      params["wo2"], params["bo2"], params["ln2_g"], params["ln2_b"],
      params["wp"], params["bp"], params["wfc_padded"], params["bfc_padded"])


# --------------------------------------------------------------------------
# Params + model glue (embedding gather stays in JAX; everything else in the kernel)
# --------------------------------------------------------------------------
def init_params(key):
    keys = iter(jax.random.split(key, 32))

    def w(fan_in, fan_out):
        return jax.random.normal(next(keys), (fan_in, fan_out), jnp.float32) * 0.02

    params = {
        "word_emb": w(VOCAB, HIDDEN),
        "pos_emb": w(MAX_POS, HIDDEN),
        "type_emb": w(TYPE_VOCAB, HIDDEN),
        "emb_ln_g": jnp.ones((1, HIDDEN), jnp.float32),
        "emb_ln_b": jnp.zeros((1, HIDDEN), jnp.float32),
    }

    w_qkv, wo, wi, wo2 = [], [], [], []
    for _ in range(N_LAYERS):
        wq, wk, wv = w(HIDDEN, HIDDEN), w(HIDDEN, HIDDEN), w(HIDDEN, HIDDEN)
        w_qkv.append(jnp.concatenate([wq, wk, wv], axis=1))   # fused QKV: (H, 3H)
        wo.append(w(HIDDEN, HIDDEN))
        wi.append(w(HIDDEN, INTERMEDIATE))
        wo2.append(w(INTERMEDIATE, HIDDEN))

    # Per-layer weights stacked on a leading layer axis; matmul weights stored bf16.
    params.update(
        w_qkv=jnp.stack(w_qkv).astype(jnp.bfloat16),                    # (L, H, 3H)
        b_qkv=jnp.zeros((N_LAYERS, 1, 3 * HIDDEN), jnp.float32),
        wo=jnp.stack(wo).astype(jnp.bfloat16),                          # (L, H, H)
        bo=jnp.zeros((N_LAYERS, 1, HIDDEN), jnp.float32),
        ln1_g=jnp.ones((N_LAYERS, 1, HIDDEN), jnp.float32),
        ln1_b=jnp.zeros((N_LAYERS, 1, HIDDEN), jnp.float32),
        wi=jnp.stack(wi).astype(jnp.bfloat16),                          # (L, H, I)
        bi=jnp.zeros((N_LAYERS, 1, INTERMEDIATE), jnp.float32),
        wo2=jnp.stack(wo2).astype(jnp.bfloat16),                        # (L, I, H)
        bo2=jnp.zeros((N_LAYERS, 1, HIDDEN), jnp.float32),
        ln2_g=jnp.ones((N_LAYERS, 1, HIDDEN), jnp.float32),
        ln2_b=jnp.zeros((N_LAYERS, 1, HIDDEN), jnp.float32),
        wp=w(HIDDEN, HIDDEN).astype(jnp.bfloat16),                      # pooler
        bp=jnp.zeros((1, HIDDEN), jnp.float32),
    )
    wfc = w(HIDDEN, 1)                                                  # fc: Linear(H, 1)
    params["wfc_padded"] = jnp.pad(wfc, ((0, 0), (0, FC_PAD - 1))).astype(jnp.bfloat16)
    params["bfc_padded"] = jnp.zeros((1, FC_PAD), jnp.float32)
    return params


def bert_model_forward(params, ids, mask, token_type_ids):
    B, S = ids.shape
    # Embedding gathers stay in JAX glue; their sum is LayerNorm'd inside the kernel.
    emb = (
        params["word_emb"][ids]
        + params["pos_emb"][:S][None, :, :]
        + params["type_emb"][token_type_ids]
    ).astype(jnp.float32)                                               # (B, S, H)
    mask3 = mask.astype(jnp.float32).reshape(B, 1, S)
    out_padded = fused_bert(params, emb, mask3)                         # (B, 1, 128)
    return out_padded[:, 0, :1]                                         # (B, 1)


if __name__ == "__main__":
    key = jax.random.PRNGKey(0)
    pkey, ikey = jax.random.split(key)
    params = init_params(pkey)

    B, S = 2, 16
    ids = jax.random.randint(ikey, (B, S), 0, VOCAB, dtype=jnp.int32)
    mask = jnp.ones((B, S), jnp.int32).at[1, 12:].set(0)
    token_type_ids = jnp.zeros((B, S), jnp.int32).at[:, 8:].set(1)

    out = bert_model_forward(params, ids, mask, token_type_ids)
    out = jax.block_until_ready(out)
    assert out.shape == (B, 1) and out.dtype == jnp.float32
    print("KERNEL_OK")
</pallas_src>

<mosaic_0001>
module attributes {stable_mosaic.version = 11 : i64} {
  func.func @_bert_kernel(%arg0: i32, %arg1: i32, %arg2: memref<1x16x128xf32, #tpu.memory_space<vmem>>, %arg3: memref<1x1x16xf32, #tpu.memory_space<vmem>>, %arg4: memref<1x128xf32, #tpu.memory_space<vmem>>, %arg5: memref<1x128xf32, #tpu.memory_space<vmem>>, %arg6: memref<1x128x384xbf16, #tpu.memory_space<vmem>>, %arg7: memref<1x1x384xf32, #tpu.memory_space<vmem>>, %arg8: memref<1x128x128xbf16, #tpu.memory_space<vmem>>, %arg9: memref<1x1x128xf32, #tpu.memory_space<vmem>>, %arg10: memref<1x1x128xf32, #tpu.memory_space<vmem>>, %arg11: memref<1x1x128xf32, #tpu.memory_space<vmem>>, %arg12: memref<1x128x512xbf16, #tpu.memory_space<vmem>>, %arg13: memref<1x1x512xf32, #tpu.memory_space<vmem>>, %arg14: memref<1x512x128xbf16, #tpu.memory_space<vmem>>, %arg15: memref<1x1x128xf32, #tpu.memory_space<vmem>>, %arg16: memref<1x1x128xf32, #tpu.memory_space<vmem>>, %arg17: memref<1x1x128xf32, #tpu.memory_space<vmem>>, %arg18: memref<128x128xbf16, #tpu.memory_space<vmem>>, %arg19: memref<1x128xf32, #tpu.memory_space<vmem>>, %arg20: memref<128x128xbf16, #tpu.memory_space<vmem>>, %arg21: memref<1x128xf32, #tpu.memory_space<vmem>>, %arg22: memref<1x1x128xf32, #tpu.memory_space<vmem>>, %arg23: memref<16x128xf32, #tpu.memory_space<vmem>>) attributes {dimension_semantics = [#tpu.dimension_semantics<parallel>, #tpu.dimension_semantics<arbitrary>], iteration_bounds = array<i64: 2, 2>, scalar_prefetch = 0 : i64, scratch_operands = 1 : i64, tpu.core_type = #tpu.core_type<tc>, window_params = [{transform_indices = @transform_0, window_bounds = array<i64: 1, 16, 128>}, {transform_indices = @transform_1, window_bounds = array<i64: 1, 1, 16>}, {pipeline_mode = #tpu.pipeline_mode<synchronous>, transform_indices = @transform_2, window_bounds = array<i64: 1, 128>}, {pipeline_mode = #tpu.pipeline_mode<synchronous>, transform_indices = @transform_3, window_bounds = array<i64: 1, 128>}, {transform_indices = @transform_4, window_bounds = array<i64: 1, 128, 384>}, {transform_indices = @transform_5, window_bounds = array<i64: 1, 1, 384>}, {transform_indices = @transform_6, window_bounds = array<i64: 1, 128, 128>}, {transform_indices = @transform_7, window_bounds = array<i64: 1, 1, 128>}, {transform_indices = @transform_8, window_bounds = array<i64: 1, 1, 128>}, {transform_indices = @transform_9, window_bounds = array<i64: 1, 1, 128>}, {transform_indices = @transform_10, window_bounds = array<i64: 1, 128, 512>}, {transform_indices = @transform_11, window_bounds = array<i64: 1, 1, 512>}, {transform_indices = @transform_12, window_bounds = array<i64: 1, 512, 128>}, {transform_indices = @transform_13, window_bounds = array<i64: 1, 1, 128>}, {transform_indices = @transform_14, window_bounds = array<i64: 1, 1, 128>}, {transform_indices = @transform_15, window_bounds = array<i64: 1, 1, 128>}, {pipeline_mode = #tpu.pipeline_mode<synchronous>, transform_indices = @transform_16, window_bounds = array<i64: 128, 128>}, {pipeline_mode = #tpu.pipeline_mode<synchronous>, transform_indices = @transform_17, window_bounds = array<i64: 1, 128>}, {pipeline_mode = #tpu.pipeline_mode<synchronous>, transform_indices = @transform_18, window_bounds = array<i64: 128, 128>}, {pipeline_mode = #tpu.pipeline_mode<synchronous>, transform_indices = @transform_19, window_bounds = array<i64: 1, 128>}, {transform_indices = @transform_20, window_bounds = array<i64: 1, 1, 128>}]} {
    %c0_i32 = arith.constant 0 : i32
    %0 = arith.cmpi eq, %arg1, %c0_i32 : i32
    %1 = arith.extui %0 : i1 to i32
    %c0_i32_0 = arith.constant 0 : i32
    %2 = arith.cmpi ne, %1, %c0_i32_0 : i32
    scf.if %2 {
      %c0_83 = arith.constant 0 : index
      %c0_84 = arith.constant 0 : index
      %c0_85 = arith.constant 0 : index
      %198 = vector.load %arg2[%c0_83, %c0_84, %c0_85] : memref<1x16x128xf32, #tpu.memory_space<vmem>>, vector<1x16x128xf32>
      %199 = vector.shape_cast %198 : vector<1x16x128xf32> to vector<16x128xf32>
      %c0_86 = arith.constant 0 : index
      %c0_87 = arith.constant 0 : index
      %200 = vector.load %arg4[%c0_86, %c0_87] : memref<1x128xf32, #tpu.memory_space<vmem>>, vector<1x128xf32>
      %c0_88 = arith.constant 0 : index
      %c0_89 = arith.constant 0 : index
      %201 = vector.load %arg5[%c0_88, %c0_89] : memref<1x128xf32, #tpu.memory_space<vmem>>, vector<1x128xf32>
      %cst_90 = arith.constant dense<0.000000e+00> : vector<16xf32>
      %202 = vector.multi_reduction <add>, %199, %cst_90 [1] : vector<16x128xf32> to vector<16xf32>
      %203 = vector.shape_cast %202 : vector<16xf32> to vector<16x1xf32>
      %cst_91 = arith.constant 1.280000e+02 : f32
      %204 = vector.broadcast %cst_91 : f32 to vector<16x1xf32>
      %205 = arith.divf %203, %204 : vector<16x1xf32>
      %206 = vector.broadcast %205 : vector<16x1xf32> to vector<16x128xf32>
      %207 = arith.subf %199, %206 : vector<16x128xf32>
      %208 = arith.mulf %207, %207 : vector<16x128xf32>
      %cst_92 = arith.constant dense<0.000000e+00> : vector<16xf32>
      %209 = vector.multi_reduction <add>, %208, %cst_92 [1] : vector<16x128xf32> to vector<16xf32>
      %210 = vector.shape_cast %209 : vector<16xf32> to vector<16x1xf32>
      %cst_93 = arith.constant 1.280000e+02 : f32
      %211 = vector.broadcast %cst_93 : f32 to vector<16x1xf32>
      %212 = arith.divf %210, %211 : vector<16x1xf32>
      %cst_94 = arith.constant 9.99999996E-13 : f32
      %213 = vector.broadcast %cst_94 : f32 to vector<16x1xf32>
      %214 = arith.addf %212, %213 : vector<16x1xf32>
      %215 = math.rsqrt %214 : vector<16x1xf32>
      %216 = vector.broadcast %215 : vector<16x1xf32> to vector<16x128xf32>
      %217 = arith.mulf %207, %216 : vector<16x128xf32>
      %218 = vector.broadcast %200 : vector<1x128xf32> to vector<16x128xf32>
      %219 = arith.mulf %217, %218 : vector<16x128xf32>
      %220 = vector.broadcast %201 : vector<1x128xf32> to vector<16x128xf32>
      %221 = arith.addf %219, %220 : vector<16x128xf32>
      %c0_95 = arith.constant 0 : index
      %c0_96 = arith.constant 0 : index
      %222 = vector.load %arg23[%c0_95, %c0_96] : memref<16x128xf32, #tpu.memory_space<vmem>>, vector<16x128xf32>
      tpu.vector_store %arg23[%c0_95, %c0_96], %221 {strides = array<i32>} : memref<16x128xf32, #tpu.memory_space<vmem>>, vector<16x128xf32>,
    } else {
    }
    %c0 = arith.constant 0 : index
    %c0_1 = arith.constant 0 : index
    %3 = vector.load %arg23[%c0, %c0_1] : memref<16x128xf32, #tpu.memory_space<vmem>>, vector<16x128xf32>
    %4 = arith.truncf %3 : vector<16x128xf32> to vector<16x128xbf16>
    %c0_2 = arith.constant 0 : index
    %c0_3 = arith.constant 0 : index
    %c0_4 = arith.constant 0 : index
    %5 = vector.load %arg6[%c0_2, %c0_3, %c0_4] : memref<1x128x384xbf16, #tpu.memory_space<vmem>>, vector<1x128x384xbf16>
    %6 = vector.shape_cast %5 : vector<1x128x384xbf16> to vector<128x384xbf16>
    %cst = arith.constant dense<0.000000e+00> : vector<16x384xf32>
    %7 = tpu.matmul %4, %6, %cst {dimension_numbers = #tpu.dot_dimension_numbers<[1], [0], [0], [1], [0, 0, 1, 1], [], []>} : vector<16x128xbf16>, vector<128x384xbf16>, vector<16x384xf32> -> vector<16x384xf32>
    %c0_5 = arith.constant 0 : index
    %c0_6 = arith.constant 0 : index
    %c0_7 = arith.constant 0 : index
    %8 = vector.load %arg7[%c0_5, %c0_6, %c0_7] : memref<1x1x384xf32, #tpu.memory_space<vmem>>, vector<1x1x384xf32>
    %9 = vector.shape_cast %8 : vector<1x1x384xf32> to vector<1x384xf32>
    %10 = vector.broadcast %9 : vector<1x384xf32> to vector<16x384xf32>
    %11 = arith.addf %7, %10 : vector<16x384xf32>
    %c0_8 = arith.constant 0 : index
    %c0_9 = arith.constant 0 : index
    %c0_10 = arith.constant 0 : index
    %12 = vector.load %arg3[%c0_8, %c0_9, %c0_10] : memref<1x1x16xf32, #tpu.memory_space<vmem>>, vector<1x1x16xf32>
    %13 = vector.shape_cast %12 : vector<1x1x16xf32> to vector<1x16xf32>
    %cst_11 = arith.constant 1.000000e+00 : f32
    %14 = vector.broadcast %cst_11 : f32 to vector<1x16xf32>
    %15 = arith.subf %14, %13 : vector<1x16xf32>
    %cst_12 = arith.constant -1.000000e+04 : f32
    %16 = vector.broadcast %cst_12 : f32 to vector<1x16xf32>
    %17 = arith.mulf %15, %16 : vector<1x16xf32>
    %18 = vector.extract_strided_slice %11 {offsets = [0, 0], sizes = [16, 32], strides = [1, 1]} : vector<16x384xf32> to vector<16x32xf32>
    %19 = vector.extract_strided_slice %11 {offsets = [0, 128], sizes = [16, 32], strides = [1, 1]} : vector<16x384xf32> to vector<16x32xf32>
    %20 = vector.extract_strided_slice %11 {offsets = [0, 256], sizes = [16, 32], strides = [1, 1]} : vector<16x384xf32> to vector<16x32xf32>
    %21 = arith.truncf %18 : vector<16x32xf32> to vector<16x32xbf16>
    %22 = arith.truncf %19 : vector<16x32xf32> to vector<16x32xbf16>
    %cst_13 = arith.constant dense<0.000000e+00> : vector<16x16xf32>
    %23 = tpu.matmul %21, %22, %cst_13 {dimension_numbers = #tpu.dot_dimension_numbers<[1], [1], [0], [0], [0, 0, 1, 0], [], []>} : vector<16x32xbf16>, vector<16x32xbf16>, vector<16x16xf32> -> vector<16x16xf32>
    %cst_14 = arith.constant 0.176776692 : f32
    %24 = vector.broadcast %cst_14 : f32 to vector<16x16xf32>
    %25 = arith.mulf %23, %24 : vector<16x16xf32>
    %26 = vector.broadcast %17 : vector<1x16xf32> to vector<16x16xf32>
    %27 = arith.addf %25, %26 : vector<16x16xf32>
    %cst_15 = arith.constant dense<0xFF800000> : vector<16xf32>
    %28 = vector.multi_reduction <maximumf>, %27, %cst_15 [1] : vector<16x16xf32> to vector<16xf32>
    %29 = vector.shape_cast %28 : vector<16xf32> to vector<16x1xf32>
    %30 = vector.broadcast %29 : vector<16x1xf32> to vector<16x16xf32>
    %31 = arith.subf %27, %30 : vector<16x16xf32>
    %32 = math.exp %31 : vector<16x16xf32>
    %cst_16 = arith.constant dense<0.000000e+00> : vector<16xf32>
    %33 = vector.multi_reduction <add>, %32, %cst_16 [1] : vector<16x16xf32> to vector<16xf32>
    %34 = vector.shape_cast %33 : vector<16xf32> to vector<16x1xf32>
    %35 = vector.broadcast %34 : vector<16x1xf32> to vector<16x16xf32>
    %36 = arith.divf %32, %35 : vector<16x16xf32>
    %37 = arith.truncf %36 : vector<16x16xf32> to vector<16x16xbf16>
    %38 = arith.truncf %20 : vector<16x32xf32> to vector<16x32xbf16>
    %cst_17 = arith.constant dense<0.000000e+00> : vector<16x32xf32>
    %39 = tpu.matmul %37, %38, %cst_17 {dimension_numbers = #tpu.dot_dimension_numbers<[1], [0], [0], [1], [0, 0, 1, 1], [], []>} : vector<16x16xbf16>, vector<16x32xbf16>, vector<16x32xf32> -> vector<16x32xf32>
    %40 = vector.extract_strided_slice %11 {offsets = [0, 32], sizes = [16, 32], strides = [1, 1]} : vector<16x384xf32> to vector<16x32xf32>
    %41 = vector.extract_strided_slice %11 {offsets = [0, 160], sizes = [16, 32], strides = [1, 1]} : vector<16x384xf32> to vector<16x32xf32>
    %42 = vector.extract_strided_slice %11 {offsets = [0, 288], sizes = [16, 32], strides = [1, 1]} : vector<16x384xf32> to vector<16x32xf32>
    %43 = arith.truncf %40 : vector<16x32xf32> to vector<16x32xbf16>
    %44 = arith.truncf %41 : vector<16x32xf32> to vector<16x32xbf16>
    %cst_18 = arith.constant dense<0.000000e+00> : vector<16x16xf32>
    %45 = tpu.matmul %43, %44, %cst_18 {dimension_numbers = #tpu.dot_dimension_numbers<[1], [1], [0], [0], [0, 0, 1, 0], [], []>} : vector<16x32xbf16>, vector<16x32xbf16>, vector<16x16xf32> -> vector<16x16xf32>
    %cst_19 = arith.constant 0.176776692 : f32
    %46 = vector.broadcast %cst_19 : f32 to vector<16x16xf32>
    %47 = arith.mulf %45, %46 : vector<16x16xf32>
    %48 = vector.broadcast %17 : vector<1x16xf32> to vector<16x16xf32>
    %49 = arith.addf %47, %48 : vector<16x16xf32>
    %cst_20 = arith.constant dense<0xFF800000> : vector<16xf32>
    %50 = vector.multi_reduction <maximumf>, %49, %cst_20 [1] : vector<16x16xf32> to vector<16xf32>
    %51 = vector.shape_cast %50 : vector<16xf32> to vector<16x1xf32>
    %52 = vector.broadcast %51 : vector<16x1xf32> to vector<16x16xf32>
    %53 = arith.subf %49, %52 : vector<16x16xf32>
    %54 = math.exp %53 : vector<16x16xf32>
    %cst_21 = arith.constant dense<0.000000e+00> : vector<16xf32>
    %55 = vector.multi_reduction <add>, %54, %cst_21 [1] : vector<16x16xf32> to vector<16xf32>
    %56 = vector.shape_cast %55 : vector<16xf32> to vector<16x1xf32>
    %57 = vector.broadcast %56 : vector<16x1xf32> to vector<16x16xf32>
    %58 = arith.divf %54, %57 : vector<16x16xf32>
    %59 = arith.truncf %58 : vector<16x16xf32> to vector<16x16xbf16>
    %60 = arith.truncf %42 : vector<16x32xf32> to vector<16x32xbf16>
    %cst_22 = arith.constant dense<0.000000e+00> : vector<16x32xf32>
    %61 = tpu.matmul %59, %60, %cst_22 {dimension_numbers = #tpu.dot_dimension_numbers<[1], [0], [0], [1], [0, 0, 1, 1], [], []>} : vector<16x16xbf16>, vector<16x32xbf16>, vector<16x32xf32> -> vector<16x32xf32>
    %62 = vector.extract_strided_slice %11 {offsets = [0, 64], sizes = [16, 32], strides = [1, 1]} : vector<16x384xf32> to vector<16x32xf32>
    %63 = vector.extract_strided_slice %11 {offsets = [0, 192], sizes = [16, 32], strides = [1, 1]} : vector<16x384xf32> to vector<16x32xf32>
    %64 = vector.extract_strided_slice %11 {offsets = [0, 320], sizes = [16, 32], strides = [1, 1]} : vector<16x384xf32> to vector<16x32xf32>
    %65 = arith.truncf %62 : vector<16x32xf32> to vector<16x32xbf16>
    %66 = arith.truncf %63 : vector<16x32xf32> to vector<16x32xbf16>
    %cst_23 = arith.constant dense<0.000000e+00> : vector<16x16xf32>
    %67 = tpu.matmul %65, %66, %cst_23 {dimension_numbers = #tpu.dot_dimension_numbers<[1], [1], [0], [0], [0, 0, 1, 0], [], []>} : vector<16x32xbf16>, vector<16x32xbf16>, vector<16x16xf32> -> vector<16x16xf32>
    %cst_24 = arith.constant 0.176776692 : f32
    %68 = vector.broadcast %cst_24 : f32 to vector<16x16xf32>
    %69 = arith.mulf %67, %68 : vector<16x16xf32>
    %70 = vector.broadcast %17 : vector<1x16xf32> to vector<16x16xf32>
    %71 = arith.addf %69, %70 : vector<16x16xf32>
    %cst_25 = arith.constant dense<0xFF800000> : vector<16xf32>
    %72 = vector.multi_reduction <maximumf>, %71, %cst_25 [1] : vector<16x16xf32> to vector<16xf32>
    %73 = vector.shape_cast %72 : vector<16xf32> to vector<16x1xf32>
    %74 = vector.broadcast %73 : vector<16x1xf32> to vector<16x16xf32>
    %75 = arith.subf %71, %74 : vector<16x16xf32>
    %76 = math.exp %75 : vector<16x16xf32>
    %cst_26 = arith.constant dense<0.000000e+00> : vector<16xf32>
    %77 = vector.multi_reduction <add>, %76, %cst_26 [1] : vector<16x16xf32> to vector<16xf32>
    %78 = vector.shape_cast %77 : vector<16xf32> to vector<16x1xf32>
    %79 = vector.broadcast %78 : vector<16x1xf32> to vector<16x16xf32>
    %80 = arith.divf %76, %79 : vector<16x16xf32>
    %81 = arith.truncf %80 : vector<16x16xf32> to vector<16x16xbf16>
    %82 = arith.truncf %64 : vector<16x32xf32> to vector<16x32xbf16>
    %cst_27 = arith.constant dense<0.000000e+00> : vector<16x32xf32>
    %83 = tpu.matmul %81, %82, %cst_27 {dimension_numbers = #tpu.dot_dimension_numbers<[1], [0], [0], [1], [0, 0, 1, 1], [], []>} : vector<16x16xbf16>, vector<16x32xbf16>, vector<16x32xf32> -> vector<16x32xf32>
    %84 = vector.extract_strided_slice %11 {offsets = [0, 96], sizes = [16, 32], strides = [1, 1]} : vector<16x384xf32> to vector<16x32xf32>
    %85 = vector.extract_strided_slice %11 {offsets = [0, 224], sizes = [16, 32], strides = [1, 1]} : vector<16x384xf32> to vector<16x32xf32>
    %86 = vector.extract_strided_slice %11 {offsets = [0, 352], sizes = [16, 32], strides = [1, 1]} : vector<16x384xf32> to vector<16x32xf32>
    %87 = arith.truncf %84 : vector<16x32xf32> to vector<16x32xbf16>
    %88 = arith.truncf %85 : vector<16x32xf32> to vector<16x32xbf16>
    %cst_28 = arith.constant dense<0.000000e+00> : vector<16x16xf32>
    %89 = tpu.matmul %87, %88, %cst_28 {dimension_numbers = #tpu.dot_dimension_numbers<[1], [1], [0], [0], [0, 0, 1, 0], [], []>} : vector<16x32xbf16>, vector<16x32xbf16>, vector<16x16xf32> -> vector<16x16xf32>
    %cst_29 = arith.constant 0.176776692 : f32
    %90 = vector.broadcast %cst_29 : f32 to vector<16x16xf32>
    %91 = arith.mulf %89, %90 : vector<16x16xf32>
    %92 = vector.broadcast %17 : vector<1x16xf32> to vector<16x16xf32>
    %93 = arith.addf %91, %92 : vector<16x16xf32>
    %cst_30 = arith.constant dense<0xFF800000> : vector<16xf32>
    %94 = vector.multi_reduction <maximumf>, %93, %cst_30 [1] : vector<16x16xf32> to vector<16xf32>
    %95 = vector.shape_cast %94 : vector<16xf32> to vector<16x1xf32>
    %96 = vector.broadcast %95 : vector<16x1xf32> to vector<16x16xf32>
    %97 = arith.subf %93, %96 : vector<16x16xf32>
    %98 = math.exp %97 : vector<16x16xf32>
    %cst_31 = arith.constant dense<0.000000e+00> : vector<16xf32>
    %99 = vector.multi_reduction <add>, %98, %cst_31 [1] : vector<16x16xf32> to vector<16xf32>
    %100 = vector.shape_cast %99 : vector<16xf32> to vector<16x1xf32>
    %101 = vector.broadcast %100 : vector<16x1xf32> to vector<16x16xf32>
    %102 = arith.divf %98, %101 : vector<16x16xf32>
    %103 = arith.truncf %102 : vector<16x16xf32> to vector<16x16xbf16>
    %104 = arith.truncf %86 : vector<16x32xf32> to vector<16x32xbf16>
    %cst_32 = arith.constant dense<0.000000e+00> : vector<16x32xf32>
    %105 = tpu.matmul %103, %104, %cst_32 {dimension_numbers = #tpu.dot_dimension_numbers<[1], [0], [0], [1], [0, 0, 1, 1], [], []>} : vector<16x16xbf16>, vector<16x32xbf16>, vector<16x32xf32> -> vector<16x32xf32>
    %106 = tpu.concatenate %39, %61, %83, %105 in 1 : vector<16x32xf32>, vector<16x32xf32>, vector<16x32xf32>, vector<16x32xf32> -> vector<16x128xf32>
    %107 = arith.truncf %106 : vector<16x128xf32> to vector<16x128xbf16>
    %c0_33 = arith.constant 0 : index
    %c0_34 = arith.constant 0 : index
    %c0_35 = arith.constant 0 : index
    %108 = vector.load %arg8[%c0_33, %c0_34, %c0_35] : memref<1x128x128xbf16, #tpu.memory_space<vmem>>, vector<1x128x128xbf16>
    %109 = vector.shape_cast %108 : vector<1x128x128xbf16> to vector<128x128xbf16>
    %cst_36 = arith.constant dense<0.000000e+00> : vector<16x128xf32>
    %110 = tpu.matmul %107, %109, %cst_36 {dimension_numbers = #tpu.dot_dimension_numbers<[1], [0], [0], [1], [0, 0, 1, 1], [], []>} : vector<16x128xbf16>, vector<128x128xbf16>, vector<16x128xf32> -> vector<16x128xf32>
    %c0_37 = arith.constant 0 : index
    %c0_38 = arith.constant 0 : index
    %c0_39 = arith.constant 0 : index
    %111 = vector.load %arg9[%c0_37, %c0_38, %c0_39] : memref<1x1x128xf32, #tpu.memory_space<vmem>>, vector<1x1x128xf32>
    %112 = vector.shape_cast %111 : vector<1x1x128xf32> to vector<1x128xf32>
    %113 = vector.broadcast %112 : vector<1x128xf32> to vector<16x128xf32>
    %114 = arith.addf %110, %113 : vector<16x128xf32>
    %115 = arith.addf %114, %3 : vector<16x128xf32>
    %c0_40 = arith.constant 0 : index
    %c0_41 = arith.constant 0 : index
    %c0_42 = arith.constant 0 : index
    %116 = vector.load %arg10[%c0_40, %c0_41, %c0_42] : memref<1x1x128xf32, #tpu.memory_space<vmem>>, vector<1x1x128xf32>
    %117 = vector.shape_cast %116 : vector<1x1x128xf32> to vector<1x128xf32>
    %c0_43 = arith.constant 0 : index
    %c0_44 = arith.constant 0 : index
    %c0_45 = arith.constant 0 : index
    %118 = vector.load %arg11[%c0_43, %c0_44, %c0_45] : memref<1x1x128xf32, #tpu.memory_space<vmem>>, vector<1x1x128xf32>
    %119 = vector.shape_cast %118 : vector<1x1x128xf32> to vector<1x128xf32>
    %cst_46 = arith.constant dense<0.000000e+00> : vector<16xf32>
    %120 = vector.multi_reduction <add>, %115, %cst_46 [1] : vector<16x128xf32> to vector<16xf32>
    %121 = vector.shape_cast %120 : vector<16xf32> to vector<16x1xf32>
    %cst_47 = arith.constant 1.280000e+02 : f32
    %122 = vector.broadcast %cst_47 : f32 to vector<16x1xf32>
    %123 = arith.divf %121, %122 : vector<16x1xf32>
    %124 = vector.broadcast %123 : vector<16x1xf32> to vector<16x128xf32>
    %125 = arith.subf %115, %124 : vector<16x128xf32>
    %126 = arith.mulf %125, %125 : vector<16x128xf32>
    %cst_48 = arith.constant dense<0.000000e+00> : vector<16xf32>
    %127 = vector.multi_reduction <add>, %126, %cst_48 [1] : vector<16x128xf32> to vector<16xf32>
    %128 = vector.shape_cast %127 : vector<16xf32> to vector<16x1xf32>
    %cst_49 = arith.constant 1.280000e+02 : f32
    %129 = vector.broadcast %cst_49 : f32 to vector<16x1xf32>
    %130 = arith.divf %128, %129 : vector<16x1xf32>
    %cst_50 = arith.constant 9.99999996E-13 : f32
    %131 = vector.broadcast %cst_50 : f32 to vector<16x1xf32>
    %132 = arith.addf %130, %131 : vector<16x1xf32>
    %133 = math.rsqrt %132 : vector<16x1xf32>
    %134 = vector.broadcast %133 : vector<16x1xf32> to vector<16x128xf32>
    %135 = arith.mulf %125, %134 : vector<16x128xf32>
    %136 = vector.broadcast %117 : vector<1x128xf32> to vector<16x128xf32>
    %137 = arith.mulf %135, %136 : vector<16x128xf32>
    %138 = vector.broadcast %119 : vector<1x128xf32> to vector<16x128xf32>
    %139 = arith.addf %137, %138 : vector<16x128xf32>
    %140 = arith.truncf %139 : vector<16x128xf32> to vector<16x128xbf16>
    %c0_51 = arith.constant 0 : index
    %c0_52 = arith.constant 0 : index
    %c0_53 = arith.constant 0 : index
    %141 = vector.load %arg12[%c0_51, %c0_52, %c0_53] : memref<1x128x512xbf16, #tpu.memory_space<vmem>>, vector<1x128x512xbf16>
    %142 = vector.shape_cast %141 : vector<1x128x512xbf16> to vector<128x512xbf16>
    %cst_54 = arith.constant dense<0.000000e+00> : vector<16x512xf32>
    %143 = tpu.matmul %140, %142, %cst_54 {dimension_numbers = #tpu.dot_dimension_numbers<[1], [0], [0], [1], [0, 0, 1, 1], [], []>} : vector<16x128xbf16>, vector<128x512xbf16>, vector<16x512xf32> -> vector<16x512xf32>
    %c0_55 = arith.constant 0 : index
    %c0_56 = arith.constant 0 : index
    %c0_57 = arith.constant 0 : index
    %144 = vector.load %arg13[%c0_55, %c0_56, %c0_57] : memref<1x1x512xf32, #tpu.memory_space<vmem>>, vector<1x1x512xf32>
    %145 = vector.shape_cast %144 : vector<1x1x512xf32> to vector<1x512xf32>
    %146 = vector.broadcast %145 : vector<1x512xf32> to vector<16x512xf32>
    %147 = arith.addf %143, %146 : vector<16x512xf32>
    %148 = arith.mulf %147, %147 : vector<16x512xf32>
    %149 = arith.mulf %147, %148 : vector<16x512xf32>
    %cst_58 = arith.constant 4.471500e-02 : f32
    %150 = vector.broadcast %cst_58 : f32 to vector<16x512xf32>
    %151 = arith.mulf %150, %149 : vector<16x512xf32>
    %152 = arith.addf %147, %151 : vector<16x512xf32>
    %cst_59 = arith.constant 0.797884583 : f32
    %153 = vector.broadcast %cst_59 : f32 to vector<16x512xf32>
    %154 = arith.mulf %153, %152 : vector<16x512xf32>
    %155 = math.tanh %154 : vector<16x512xf32>
    %cst_60 = arith.constant 1.000000e+00 : f32
    %156 = vector.broadcast %cst_60 : f32 to vector<16x512xf32>
    %157 = arith.addf %156, %155 : vector<16x512xf32>
    %cst_61 = arith.constant 5.000000e-01 : f32
    %158 = vector.broadcast %cst_61 : f32 to vector<16x512xf32>
    %159 = arith.mulf %158, %157 : vector<16x512xf32>
    %160 = arith.mulf %147, %159 : vector<16x512xf32>
    %161 = arith.truncf %160 : vector<16x512xf32> to vector<16x512xbf16>
    %c0_62 = arith.constant 0 : index
    %c0_63 = arith.constant 0 : index
    %c0_64 = arith.constant 0 : index
    %162 = vector.load %arg14[%c0_62, %c0_63, %c0_64] : memref<1x512x128xbf16, #tpu.memory_space<vmem>>, vector<1x512x128xbf16>
    %163 = vector.shape_cast %162 : vector<1x512x128xbf16> to vector<512x128xbf16>
    %cst_65 = arith.constant dense<0.000000e+00> : vector<16x128xf32>
    %164 = tpu.matmul %161, %163, %cst_65 {dimension_numbers = #tpu.dot_dimension_numbers<[1], [0], [0], [1], [0, 0, 1, 1], [], []>} : vector<16x512xbf16>, vector<512x128xbf16>, vector<16x128xf32> -> vector<16x128xf32>
    %c0_66 = arith.constant 0 : index
    %c0_67 = arith.constant 0 : index
    %c0_68 = arith.constant 0 : index
    %165 = vector.load %arg15[%c0_66, %c0_67, %c0_68] : memref<1x1x128xf32, #tpu.memory_space<vmem>>, vector<1x1x128xf32>
    %166 = vector.shape_cast %165 : vector<1x1x128xf32> to vector<1x128xf32>
    %167 = vector.broadcast %166 : vector<1x128xf32> to vector<16x128xf32>
    %168 = arith.addf %164, %167 : vector<16x128xf32>
    %169 = arith.addf %168, %139 : vector<16x128xf32>
    %c0_69 = arith.constant 0 : index
    %c0_70 = arith.constant 0 : index
    %c0_71 = arith.constant 0 : index
    %170 = vector.load %arg16[%c0_69, %c0_70, %c0_71] : memref<1x1x128xf32, #tpu.memory_space<vmem>>, vector<1x1x128xf32>
    %171 = vector.shape_cast %170 : vector<1x1x128xf32> to vector<1x128xf32>
    %c0_72 = arith.constant 0 : index
    %c0_73 = arith.constant 0 : index
    %c0_74 = arith.constant 0 : index
    %172 = vector.load %arg17[%c0_72, %c0_73, %c0_74] : memref<1x1x128xf32, #tpu.memory_space<vmem>>, vector<1x1x128xf32>
    %173 = vector.shape_cast %172 : vector<1x1x128xf32> to vector<1x128xf32>
    %cst_75 = arith.constant dense<0.000000e+00> : vector<16xf32>
    %174 = vector.multi_reduction <add>, %169, %cst_75 [1] : vector<16x128xf32> to vector<16xf32>
    %175 = vector.shape_cast %174 : vector<16xf32> to vector<16x1xf32>
    %cst_76 = arith.constant 1.280000e+02 : f32
    %176 = vector.broadcast %cst_76 : f32 to vector<16x1xf32>
    %177 = arith.divf %175, %176 : vector<16x1xf32>
    %178 = vector.broadcast %177 : vector<16x1xf32> to vector<16x128xf32>
    %179 = arith.subf %169, %178 : vector<16x128xf32>
    %180 = arith.mulf %179, %179 : vector<16x128xf32>
    %cst_77 = arith.constant dense<0.000000e+00> : vector<16xf32>
    %181 = vector.multi_reduction <add>, %180, %cst_77 [1] : vector<16x128xf32> to vector<16xf32>
    %182 = vector.shape_cast %181 : vector<16xf32> to vector<16x1xf32>
    %cst_78 = arith.constant 1.280000e+02 : f32
    %183 = vector.broadcast %cst_78 : f32 to vector<16x1xf32>
    %184 = arith.divf %182, %183 : vector<16x1xf32>
    %cst_79 = arith.constant 9.99999996E-13 : f32
    %185 = vector.broadcast %cst_79 : f32 to vector<16x1xf32>
    %186 = arith.addf %184, %185 : vector<16x1xf32>
    %187 = math.rsqrt %186 : vector<16x1xf32>
    %188 = vector.broadcast %187 : vector<16x1xf32> to vector<16x128xf32>
    %189 = arith.mulf %179, %188 : vector<16x128xf32>
    %190 = vector.broadcast %171 : vector<1x128xf32> to vector<16x128xf32>
    %191 = arith.mulf %189, %190 : vector<16x128xf32>
    %192 = vector.broadcast %173 : vector<1x128xf32> to vector<16x128xf32>
    %193 = arith.addf %191, %192 : vector<16x128xf32>
    %c0_80 = arith.constant 0 : index
    %c0_81 = arith.constant 0 : index
    %194 = vector.load %arg23[%c0_80, %c0_81] : memref<16x128xf32, #tpu.memory_space<vmem>>, vector<16x128xf32>
    tpu.vector_store %arg23[%c0_80, %c0_81], %193 {strides = array<i32>} : memref<16x128xf32, #tpu.memory_space<vmem>>, vector<16x128xf32>,
    %c1_i32 = arith.constant 1 : i32
    %195 = arith.cmpi eq, %arg1, %c1_i32 : i32
    %196 = arith.extui %195 : i1 to i32
    %c0_i32_82 = arith.constant 0 : i32
    %197 = arith.cmpi ne, %196, %c0_i32_82 : i32
    scf.if %197 {
      %198 = vector.extract_strided_slice %193 {offsets = [0, 0], sizes = [1, 128], strides = [1, 1]} : vector<16x128xf32> to vector<1x128xf32>
      %199 = arith.truncf %198 : vector<1x128xf32> to vector<1x128xbf16>
      %c0_83 = arith.constant 0 : index
      %c0_84 = arith.constant 0 : index
      %200 = vector.load %arg18[%c0_83, %c0_84] : memref<128x128xbf16, #tpu.memory_space<vmem>>, vector<128x128xbf16>
      %cst_85 = arith.constant dense<0.000000e+00> : vector<1x128xf32>
      %201 = tpu.matmul %199, %200, %cst_85 {dimension_numbers = #tpu.dot_dimension_numbers<[1], [0], [0], [1], [0, 0, 1, 1], [], []>} : vector<1x128xbf16>, vector<128x128xbf16>, vector<1x128xf32> -> vector<1x128xf32>
      %c0_86 = arith.constant 0 : index
      %c0_87 = arith.constant 0 : index
      %202 = vector.load %arg19[%c0_86, %c0_87] : memref<1x128xf32, #tpu.memory_space<vmem>>, vector<1x128xf32>
      %203 = arith.addf %201, %202 : vector<1x128xf32>
      %204 = math.tanh %203 : vector<1x128xf32>
      %205 = arith.truncf %204 : vector<1x128xf32> to vector<1x128xbf16>
      %c0_88 = arith.constant 0 : index
      %c0_89 = arith.constant 0 : index
      %206 = vector.load %arg20[%c0_88, %c0_89] : memref<128x128xbf16, #tpu.memory_space<vmem>>, vector<128x128xbf16>
      %cst_90 = arith.constant dense<0.000000e+00> : vector<1x128xf32>
      %207 = tpu.matmul %205, %206, %cst_90 {dimension_numbers = #tpu.dot_dimension_numbers<[1], [0], [0], [1], [0, 0, 1, 1], [], []>} : vector<1x128xbf16>, vector<128x128xbf16>, vector<1x128xf32> -> vector<1x128xf32>
      %c0_91 = arith.constant 0 : index
      %c0_92 = arith.constant 0 : index
      %208 = vector.load %arg21[%c0_91, %c0_92] : memref<1x128xf32, #tpu.memory_space<vmem>>, vector<1x128xf32>
      %209 = arith.addf %207, %208 : vector<1x128xf32>
      %c0_93 = arith.constant 0 : index
      %c0_94 = arith.constant 0 : index
      %c0_95 = arith.constant 0 : index
      %210 = vector.load %arg22[%c0_93, %c0_94, %c0_95] : memref<1x1x128xf32, #tpu.memory_space<vmem>>, vector<1x1x128xf32>
      %211 = vector.shape_cast %210 : vector<1x1x128xf32> to vector<1x128xf32>
      %212 = vector.shape_cast %209 : vector<1x128xf32> to vector<1x1x128xf32>
      tpu.vector_store %arg22[%c0_93, %c0_94, %c0_95], %212 {strides = array<i32>} : memref<1x1x128xf32, #tpu.memory_space<vmem>>, vector<1x1x128xf32>,
    } else {
    }
    return
  }
  func.func @transform_0(%arg0: i32, %arg1: i32) -> (i32, i32, i32) {
    %c0_i32 = arith.constant 0 : i32
    %c0_i32_0 = arith.constant 0 : i32
    %c0_i32_1 = arith.constant 0 : i32
    return %arg0, %c0_i32, %c0_i32_0 : i32, i32, i32
  }
  func.func @transform_1(%arg0: i32, %arg1: i32) -> (i32, i32, i32) {
    %c0_i32 = arith.constant 0 : i32
    %c0_i32_0 = arith.constant 0 : i32
    %c0_i32_1 = arith.constant 0 : i32
    return %arg0, %c0_i32, %c0_i32_0 : i32, i32, i32
  }
  func.func @transform_2(%arg0: i32, %arg1: i32) -> (i32, i32) {
    %c0_i32 = arith.constant 0 : i32
    %c0_i32_0 = arith.constant 0 : i32
    %c0_i32_1 = arith.constant 0 : i32
    return %c0_i32, %c0_i32_0 : i32, i32
  }
  func.func @transform_3(%arg0: i32, %arg1: i32) -> (i32, i32) {
    %c0_i32 = arith.constant 0 : i32
    %c0_i32_0 = arith.constant 0 : i32
    %c0_i32_1 = arith.constant 0 : i32
    return %c0_i32, %c0_i32_0 : i32, i32
  }
  func.func @transform_4(%arg0: i32, %arg1: i32) -> (i32, i32, i32) {
    %c0_i32 = arith.constant 0 : i32
    %c0_i32_0 = arith.constant 0 : i32
    %c0_i32_1 = arith.constant 0 : i32
    return %arg1, %c0_i32, %c0_i32_0 : i32, i32, i32
  }
  func.func @transform_5(%arg0: i32, %arg1: i32) -> (i32, i32, i32) {
    %c0_i32 = arith.constant 0 : i32
    %c0_i32_0 = arith.constant 0 : i32
    %c0_i32_1 = arith.constant 0 : i32
    return %arg1, %c0_i32, %c0_i32_0 : i32, i32, i32
  }
  func.func @transform_6(%arg0: i32, %arg1: i32) -> (i32, i32, i32) {
    %c0_i32 = arith.constant 0 : i32
    %c0_i32_0 = arith.constant 0 : i32
    %c0_i32_1 = arith.constant 0 : i32
    return %arg1, %c0_i32, %c0_i32_0 : i32, i32, i32
  }
  func.func @transform_7(%arg0: i32, %arg1: i32) -> (i32, i32, i32) {
    %c0_i32 = arith.constant 0 : i32
    %c0_i32_0 = arith.constant 0 : i32
    %c0_i32_1 = arith.constant 0 : i32
    return %arg1, %c0_i32, %c0_i32_0 : i32, i32, i32
  }
  func.func @transform_8(%arg0: i32, %arg1: i32) -> (i32, i32, i32) {
    %c0_i32 = arith.constant 0 : i32
    %c0_i32_0 = arith.constant 0 : i32
    %c0_i32_1 = arith.constant 0 : i32
    return %arg1, %c0_i32, %c0_i32_0 : i32, i32, i32
  }
  func.func @transform_9(%arg0: i32, %arg1: i32) -> (i32, i32, i32) {
    %c0_i32 = arith.constant 0 : i32
    %c0_i32_0 = arith.constant 0 : i32
    %c0_i32_1 = arith.constant 0 : i32
    return %arg1, %c0_i32, %c0_i32_0 : i32, i32, i32
  }
  func.func @transform_10(%arg0: i32, %arg1: i32) -> (i32, i32, i32) {
    %c0_i32 = arith.constant 0 : i32
    %c0_i32_0 = arith.constant 0 : i32
    %c0_i32_1 = arith.constant 0 : i32
    return %arg1, %c0_i32, %c0_i32_0 : i32, i32, i32
  }
  func.func @transform_11(%arg0: i32, %arg1: i32) -> (i32, i32, i32) {
    %c0_i32 = arith.constant 0 : i32
    %c0_i32_0 = arith.constant 0 : i32
    %c0_i32_1 = arith.constant 0 : i32
    return %arg1, %c0_i32, %c0_i32_0 : i32, i32, i32
  }
  func.func @transform_12(%arg0: i32, %arg1: i32) -> (i32, i32, i32) {
    %c0_i32 = arith.constant 0 : i32
    %c0_i32_0 = arith.constant 0 : i32
    %c0_i32_1 = arith.constant 0 : i32
    return %arg1, %c0_i32, %c0_i32_0 : i32, i32, i32
  }
  func.func @transform_13(%arg0: i32, %arg1: i32) -> (i32, i32, i32) {
    %c0_i32 = arith.constant 0 : i32
    %c0_i32_0 = arith.constant 0 : i32
    %c0_i32_1 = arith.constant 0 : i32
    return %arg1, %c0_i32, %c0_i32_0 : i32, i32, i32
  }
  func.func @transform_14(%arg0: i32, %arg1: i32) -> (i32, i32, i32) {
    %c0_i32 = arith.constant 0 : i32
    %c0_i32_0 = arith.constant 0 : i32
    %c0_i32_1 = arith.constant 0 : i32
    return %arg1, %c0_i32, %c0_i32_0 : i32, i32, i32
  }
  func.func @transform_15(%arg0: i32, %arg1: i32) -> (i32, i32, i32) {
    %c0_i32 = arith.constant 0 : i32
    %c0_i32_0 = arith.constant 0 : i32
    %c0_i32_1 = arith.constant 0 : i32
    return %arg1, %c0_i32, %c0_i32_0 : i32, i32, i32
  }
  func.func @transform_16(%arg0: i32, %arg1: i32) -> (i32, i32) {
    %c0_i32 = arith.constant 0 : i32
    %c0_i32_0 = arith.constant 0 : i32
    %c0_i32_1 = arith.constant 0 : i32
    return %c0_i32, %c0_i32_0 : i32, i32
  }
  func.func @transform_17(%arg0: i32, %arg1: i32) -> (i32, i32) {
    %c0_i32 = arith.constant 0 : i32
    %c0_i32_0 = arith.constant 0 : i32
    %c0_i32_1 = arith.constant 0 : i32
    return %c0_i32, %c0_i32_0 : i32, i32
  }
  func.func @transform_18(%arg0: i32, %arg1: i32) -> (i32, i32) {
    %c0_i32 = arith.constant 0 : i32
    %c0_i32_0 = arith.constant 0 : i32
    %c0_i32_1 = arith.constant 0 : i32
    return %c0_i32, %c0_i32_0 : i32, i32
  }
  func.func @transform_19(%arg0: i32, %arg1: i32) -> (i32, i32) {
    %c0_i32 = arith.constant 0 : i32
    %c0_i32_0 = arith.constant 0 : i32
    %c0_i32_1 = arith.constant 0 : i32
    return %c0_i32, %c0_i32_0 : i32, i32
  }
  func.func @transform_20(%arg0: i32, %arg1: i32) -> (i32, i32, i32) {
    %c0_i32 = arith.constant 0 : i32
    %c0_i32_0 = arith.constant 0 : i32
    %c0_i32_1 = arith.constant 0 : i32
    return %arg0, %c0_i32, %c0_i32_0 : i32, i32, i32
  }
}

</mosaic_0001>

<llo_original>
// kernel: tpu_custom_call.1
$region0: #{tpu_custom_call.1}
  #allocation0 [shape = 'u32[]', space=smem, size = 0x4, offset = 0x4, fixed_abs, tag = 'smem constant byte address 0x4 - core index']
  #allocation1 [shape = 'u32[144,128]{1,0:T(1,128)}', space=vmem, size = 0x12000, scoped, tag = 'internal scratch']
  #allocation2 [shape = 'f32[16,128]{1,0:T(8,128)}', space=vmem, size = 0x2000, scoped, tag = 'scratch operand']
  %s0 = inlined_call_operand.hbm [shape: f32[2,16,128], index: 0, kind: input, shape index: {}]
  %s1 = inlined_call_operand.hbm [shape: f32[2,1,16], index: 1, kind: input, shape index: {}]
  %s2 = inlined_call_operand.hbm [shape: f32[1,128], index: 2, kind: input, shape index: {}]
  %s3 = inlined_call_operand.hbm [shape: f32[1,128], index: 3, kind: input, shape index: {}]
  %s4 = inlined_call_operand.hbm [shape: bf16[2,128,384], index: 4, kind: input, shape index: {}]
  %s5 = inlined_call_operand.vmem [shape: f32[2,1,384], index: 5, kind: input, shape index: {}]
  %s6 = inlined_call_operand.hbm [shape: bf16[2,128,128], index: 6, kind: input, shape index: {}]
  %s7 = inlined_call_operand.vmem [shape: f32[2,1,128], index: 7, kind: input, shape index: {}]
  %s8 = inlined_call_operand.hbm [shape: f32[2,1,128], index: 8, kind: input, shape index: {}]
  %s9 = inlined_call_operand.hbm [shape: f32[2,1,128], index: 9, kind: input, shape index: {}]
  %s10 = inlined_call_operand.hbm [shape: bf16[2,128,512], index: 10, kind: input, shape index: {}]
  %s11 = inlined_call_operand.vmem [shape: f32[2,1,512], index: 11, kind: input, shape index: {}]
  %s12 = inlined_call_operand.hbm [shape: bf16[2,512,128], index: 12, kind: input, shape index: {}]
  %s13 = inlined_call_operand.vmem [shape: f32[2,1,128], index: 13, kind: input, shape index: {}]
  %s14 = inlined_call_operand.vmem [shape: f32[2,1,128], index: 14, kind: input, shape index: {}]
  %s15 = inlined_call_operand.vmem [shape: f32[2,1,128], index: 15, kind: input, shape index: {}]
  %s16 = inlined_call_operand.hbm [shape: bf16[128,128], index: 16, kind: input, shape index: {}]
  %s17 = inlined_call_operand.vmem [shape: f32[1,128], index: 17, kind: input, shape index: {}]
  %s18 = inlined_call_operand.hbm [shape: bf16[128,128], index: 18, kind: input, shape index: {}]
  %s19 = inlined_call_operand.vmem [shape: f32[1,128], index: 19, kind: input, shape index: {}]
  %s20 = inlined_call_operand.hbm [shape: f32[2,1,128], index: 20, kind: output, shape index: {}]
  %s21 = sld [smem:[#allocation0]]
  $region169: #{tpu_custom_call.1} parent=0
    _
  %s23 = ssub.s32 1, %s21
  %s24 = scalar_select 0, %s23, %s21
  $region1: #{tpu_custom_call.1} parent=0
    #allocation3 [shape = 'u8[16384]{0}', space=vmem, size = 0x4000, scoped, tag = 'input window, operand 0']
    #allocation4 [shape = 's32[2]{0}', space=sflag, size = 0x8, scoped, tag = 'scoped memory for tpu_custom_call.1']
    #allocation5 [shape = 's32[2]{0}', space=sflag, size = 0x8, scoped, tag = 'scoped memory for tpu_custom_call.1']
    #allocation6 [shape = 'u8[1024]{0}', space=vmem, size = 0x400, scoped, tag = 'input window, operand 1']
    #allocation7 [shape = 's32[2]{0}', space=sflag, size = 0x8, scoped, tag = 'scoped memory for tpu_custom_call.1']
    #allocation8 [shape = 'u8[512]{0}', space=vmem, size = 0x400, scoped, tag = 'input window, operand 2, single buffered']
    #allocation9 [shape = 'u8[512]{0}', space=vmem, size = 0x400, scoped, tag = 'input window, operand 3, single buffered']
    #allocation10 [shape = 's32[1]{0}', space=sflag, size = 0x4, scoped, tag = 'scoped memory for tpu_custom_call.1']
    #allocation11 [shape = 'u8[196608]{0}', space=vmem, size = 0x30000, scoped, tag = 'input window, operand 4']
    #allocation12 [shape = 'u8[65536]{0}', space=vmem, size = 0x10000, scoped, tag = 'input window, operand 6']
    #allocation13 [shape = 'u8[1024]{0}', space=vmem, size = 0x400, scoped, tag = 'input window, operand 8']
    #allocation14 [shape = 'u8[1024]{0}', space=vmem, size = 0x400, scoped, tag = 'input window, operand 9']
    #allocation15 [shape = 'u8[262144]{0}', space=vmem, size = 0x40000, scoped, tag = 'input window, operand 10']
    #allocation16 [shape = 'u8[262144]{0}', space=vmem, size = 0x40000, scoped, tag = 'input window, operand 12']
    #allocation17 [shape = 'u8[32768]{0}', space=vmem, size = 0x8000, scoped, tag = 'input window, operand 16, single buffered']
    #allocation18 [shape = 'u8[32768]{0}', space=vmem, size = 0x8000, scoped, tag = 'input window, operand 18, single buffered']
    #allocation19 [shape = 's32[1]{0}', space=sflag, size = 0x4, scoped, tag = 'scoped memory for tpu_custom_call.1']
    #allocation20 [shape = 'u8[1024]{0}', space=vmem, size = 0x400, scoped, tag = 'output window, operand 0']
    %25 = vsyncpa [#allocation4], 0
    %s26 = scalar_lea.sflag [#allocation4], 1
    %27 = vsyncpa %s26, 0
    %28 = vsyncpa [#allocation7], 0
    %s29 = scalar_lea.sflag [#allocation7], 1
    %30 = vsyncpa %s29, 0
    %31 = vsyncpa [#allocation10], 0
    %32 = vsyncpa [#allocation19], 0
    %33 = vsyncpa [#allocation5], 0
    %s34 = scalar_lea.sflag [#allocation5], 1
    %35 = vsyncpa %s34, 0
    loop: start=0, step=1, limit=6
    $region2: #{tpu_custom_call.1} parent=1 // loop_pre_header
      _
    $region3: #{tpu_custom_call.1} parent=1 // loop_header
      %s37 = sphi 0, %s41
      %p38 = scmp.ge.s32.totalorder %s37, 6
      %s44 = sphi 0, %s56
      %s45 = sphi 0, %s52
      %s46 = sphi 0, %s44
      %s47 = sphi 0, %s45
      %s48 = sphi 0, %s46
      %s49 = sphi 0, %s47
      %s59 = sphi 0, %s61
      %s62 = sphi 0, %s59
      %s63 = sphi 0, %s62
      %s79 = sphi 0, %s63
      %s85 = sphi 0, %s87
      %s88 = sphi 0, %s85
      %s89 = sphi 0, %s88
      %s105 = sphi 0, %s89
      %s109 = sphi 0, %s109
      %s111 = sphi 0, %s109
      %s112 = sphi 0, %s111
      %s126 = sphi 0, %s112
      %s130 = sphi 0, %s130
      %s132 = sphi 0, %s130
      %s133 = sphi 0, %s132
      %s147 = sphi 0, %s133
      %s153 = sphi 0, %s155
      %s156 = sphi 0, %s153
      %s157 = sphi 0, %s156
      %s173 = sphi 0, %s157
      %s179 = sphi 0, %s181
      %s182 = sphi 0, %s179
      %s183 = sphi 0, %s182
      %s199 = sphi 0, %s183
      %s205 = sphi 0, %s207
      %s208 = sphi 0, %s205
      %s209 = sphi 0, %s208
      %s225 = sphi 0, %s209
      %s231 = sphi 0, %s233
      %s234 = sphi 0, %s231
      %s235 = sphi 0, %s234
      %s251 = sphi 0, %s235
      %s257 = sphi 0, %s259
      %s260 = sphi 0, %s257
      %s261 = sphi 0, %s260
      %s277 = sphi 0, %s261
      %s283 = sphi 0, %s285
      %s286 = sphi 0, %s283
      %s287 = sphi 0, %s286
      %s303 = sphi 0, %s287
      %s309 = sphi 0, %s311
      %s312 = sphi 0, %s309
      %s313 = sphi 0, %s312
      %s329 = sphi 0, %s313
      %s335 = sphi 0, %s337
      %s338 = sphi 0, %s335
      %s339 = sphi 0, %s338
      %s355 = sphi 0, %s339
      %s361 = sphi 0, %s363
      %s364 = sphi 0, %s361
      %s365 = sphi 0, %s364
      %s381 = sphi 0, %s365
      %s387 = sphi 0, %s389
      %s390 = sphi 0, %s387
      %s391 = sphi 0, %s390
      %s407 = sphi 0, %s391
      %s413 = sphi 0, %s415
      %s416 = sphi 0, %s413
      %s417 = sphi 0, %s416
      %s433 = sphi 0, %s417
      %s439 = sphi 0, %s441
      %s442 = sphi 0, %s439
      %s443 = sphi 0, %s442
      %s459 = sphi 0, %s443
      %s463 = sphi 0, %s463
      %s465 = sphi 0, %s463
      %s466 = sphi 0, %s465
      %s480 = sphi 0, %s466
      %s484 = sphi 0, %s484
      %s486 = sphi 0, %s484
      %s487 = sphi 0, %s486
      %s501 = sphi 0, %s487
      %s505 = sphi 0, %s505
      %s507 = sphi 0, %s505
      %s508 = sphi 0, %s507
      %s522 = sphi 0, %s508
      %s526 = sphi 0, %s526
      %s528 = sphi 0, %s526
      %s529 = sphi 0, %s528
      %s543 = sphi 0, %s529
      %s549 = sphi 0, %s551
      %s552 = sphi 0, %s549
      %s553 = sphi 0, %s552
      %s569 = sphi 0, %s553
    $region4: #{tpu_custom_call.1} parent=1 // loop_header_branch
      %40 = sbr.rel (%p38) target = $region8
    $region5: #{tpu_custom_call.1} parent=1 // loop_body
      %s42 = ssub.s32 %s37, 1
      %s43 = ssub.s32 %s37, 2
      %s50 = sadd.s32 1, %s45
      %p51 = scmp.ge.s32.totalorder %s50, 2
      %s52 = scalar_select %p51, 0, %s50
      %s53 = sadd.s32 1, %s44
      %s54 = scalar_select %p51, %s53, %s44
      %p55 = scmp.ge.s32.totalorder %s54, 2
      %s56 = scalar_select %p55, 0, %s54
      %s57 = ssub.s32 %s44, %s56
      %p58 = scmp.eq.s32.totalorder %s57, 0
      %s60 = sadd.s32 %s59, 1
      %s61 = scalar_select %p58, %s59, %s60
      %p64 = pneg %p58
      %p65 = scmp.eq.s32.totalorder %s37, 3
      %p66 = por %p64, %p65
      %p67 = scmp.ne.s32.totalorder %s59, %s62
      %p68 = scmp.eq.s32.totalorder %s37, 0
      %p69 = por %p67, %p68
      %p70 = scmp.ne.s32.totalorder %s59, %s62
      %p71 = scmp.eq.s32.totalorder %s42, 3
      %p72 = por %p70, %p71
      %p73 = scmp.ne.s32.totalorder %s62, %s63
      %p74 = scmp.eq.s32.totalorder %s42, 0
      %p75 = por %p73, %p74
      %p76 = scmp.ne.s32.totalorder %s62, %s63
      %p77 = scmp.eq.s32.totalorder %s43, 3
      %p78 = por %p76, %p77
      %p80 = scmp.ne.s32.totalorder %s63, %s79
      %p81 = scmp.eq.s32.totalorder %s43, 0
      %p82 = por %p80, %p81
      %s83 = ssub.s32 %s44, %s56
      %p84 = scmp.eq.s32.totalorder %s83, 0
      %s86 = sadd.s32 %s85, 1
      %s87 = scalar_select %p84, %s85, %s86
      %p90 = pneg %p84
      %p91 = scmp.eq.s32.totalorder %s37, 3
      %p92 = por %p90, %p91
      %p93 = scmp.ne.s32.totalorder %s85, %s88
      %p94 = scmp.eq.s32.totalorder %s37, 0
      %p95 = por %p93, %p94
      %p96 = scmp.ne.s32.totalorder %s85, %s88
      %p97 = scmp.eq.s32.totalorder %s42, 3
      %p98 = por %p96, %p97
      %p99 = scmp.ne.s32.totalorder %s88, %s89
      %p100 = scmp.eq.s32.totalorder %s42, 0
      %p101 = por %p99, %p100
      %p102 = scmp.ne.s32.totalorder %s88, %s89
      %p103 = scmp.eq.s32.totalorder %s43, 3
      %p104 = por %p102, %p103
      %p106 = scmp.ne.s32.totalorder %s89, %s105
      %p107 = scmp.eq.s32.totalorder %s43, 0
      %p108 = por %p106, %p107
      %s110 = sadd.s32 %s109, 1
      %p113 = scmp.eq.s32.totalorder %s37, 3
      %p114 = scmp.ne.s32.totalorder %s109, %s111
      %p115 = scmp.eq.s32.totalorder %s37, 0
      %p116 = por %p114, %p115
      %p117 = scmp.ne.s32.totalorder %s109, %s111
      %p118 = scmp.eq.s32.totalorder %s42, 3
      %p119 = por %p117, %p118
      %p120 = scmp.ne.s32.totalorder %s111, %s112
      %p121 = scmp.eq.s32.totalorder %s42, 0
      %p122 = por %p120, %p121
      %p123 = scmp.ne.s32.totalorder %s111, %s112
      %p124 = scmp.eq.s32.totalorder %s43, 3
      %p125 = por %p123, %p124
      %p127 = scmp.ne.s32.totalorder %s112, %s126
      %p128 = scmp.eq.s32.totalorder %s43, 0
      %p129 = por %p127, %p128
      %s131 = sadd.s32 %s130, 1
      %p134 = scmp.eq.s32.totalorder %s37, 3
      %p135 = scmp.ne.s32.totalorder %s130, %s132
      %p136 = scmp.eq.s32.totalorder %s37, 0
      %p137 = por %p135, %p136
      %p138 = scmp.ne.s32.totalorder %s130, %s132
      %p139 = scmp.eq.s32.totalorder %s42, 3
      %p140 = por %p138, %p139
      %p141 = scmp.ne.s32.totalorder %s132, %s133
      %p142 = scmp.eq.s32.totalorder %s42, 0
      %p143 = por %p141, %p142
      %p144 = scmp.ne.s32.totalorder %s132, %s133
      %p145 = scmp.eq.s32.totalorder %s43, 3
      %p146 = por %p144, %p145
      %p148 = scmp.ne.s32.totalorder %s133, %s147
      %p149 = scmp.eq.s32.totalorder %s43, 0
      %p150 = por %p148, %p149
      %s151 = ssub.s32 %s45, %s52
      %p152 = scmp.eq.s32.totalorder %s151, 0
      %s154 = sadd.s32 %s153, 1
      %s155 = scalar_select %p152, %s153, %s154
      %p158 = pneg %p152
      %p159 = scmp.eq.s32.totalorder %s37, 3
      %p160 = por %p158, %p159
      %p161 = scmp.ne.s32.totalorder %s153, %s156
      %p162 = scmp.eq.s32.totalorder %s37, 0
      %p163 = por %p161, %p162
      %p164 = scmp.ne.s32.totalorder %s153, %s156
      %p165 = scmp.eq.s32.totalorder %s42, 3
      %p166 = por %p164, %p165
      %p167 = scmp.ne.s32.totalorder %s156, %s157
      %p168 = scmp.eq.s32.totalorder %s42, 0
      %p169 = por %p167, %p168
      %p170 = scmp.ne.s32.totalorder %s156, %s157
      %p171 = scmp.eq.s32.totalorder %s43, 3
      %p172 = por %p170, %p171
      %p174 = scmp.ne.s32.totalorder %s157, %s173
      %p175 = scmp.eq.s32.totalorder %s43, 0
      %p176 = por %p174, %p175
      %s177 = ssub.s32 %s45, %s52
      %p178 = scmp.eq.s32.totalorder %s177, 0
      %s180 = sadd.s32 %s179, 1
      %s181 = scalar_select %p178, %s179, %s180
      %p184 = pneg %p178
      %p185 = scmp.eq.s32.totalorder %s37, 3
      %p186 = por %p184, %p185
      %p187 = scmp.ne.s32.totalorder %s179, %s182
      %p188 = scmp.eq.s32.totalorder %s37, 0
      %p189 = por %p187, %p188
      %p190 = scmp.ne.s32.totalorder %s179, %s182
      %p191 = scmp.eq.s32.totalorder %s42, 3
      %p192 = por %p190, %p191
      %p193 = scmp.ne.s32.totalorder %s182, %s183
      %p194 = scmp.eq.s32.totalorder %s42, 0
      %p195 = por %p193, %p194
      %p196 = scmp.ne.s32.totalorder %s182, %s183
      %p197 = scmp.eq.s32.totalorder %s43, 3
      %p198 = por %p196, %p197
      %p200 = scmp.ne.s32.totalorder %s183, %s199
      %p201 = scmp.eq.s32.totalorder %s43, 0
      %p202 = por %p200, %p201
      %s203 = ssub.s32 %s45, %s52
      %p204 = scmp.eq.s32.totalorder %s203, 0
      %s206 = sadd.s32 %s205, 1
      %s207 = scalar_select %p204, %s205, %s206
      %p210 = pneg %p204
      %p211 = scmp.eq.s32.totalorder %s37, 3
      %p212 = por %p210, %p211
      %p213 = scmp.ne.s32.totalorder %s205, %s208
      %p214 = scmp.eq.s32.totalorder %s37, 0
      %p215 = por %p213, %p214
      %p216 = scmp.ne.s32.totalorder %s205, %s208
      %p217 = scmp.eq.s32.totalorder %s42, 3
      %p218 = por %p216, %p217
      %p219 = scmp.ne.s32.totalorder %s208, %s209
      %p220 = scmp.eq.s32.totalorder %s42, 0
      %p221 = por %p219, %p220
      %p222 = scmp.ne.s32.totalorder %s208, %s209
      %p223 = scmp.eq.s32.totalorder %s43, 3
      %p224 = por %p222, %p223
      %p226 = scmp.ne.s32.totalorder %s209, %s225
      %p227 = scmp.eq.s32.totalorder %s43, 0
      %p228 = por %p226, %p227
      %s229 = ssub.s32 %s45, %s52
      %p230 = scmp.eq.s32.totalorder %s229, 0
      %s232 = sadd.s32 %s231, 1
      %s233 = scalar_select %p230, %s231, %s232
      %p236 = pneg %p230
      %p237 = scmp.eq.s32.totalorder %s37, 3
      %p238 = por %p236, %p237
      %p239 = scmp.ne.s32.totalorder %s231, %s234
      %p240 = scmp.eq.s32.totalorder %s37, 0
      %p241 = por %p239, %p240
      %p242 = scmp.ne.s32.totalorder %s231, %s234
      %p243 = scmp.eq.s32.totalorder %s42, 3
      %p244 = por %p242, %p243
      %p245 = scmp.ne.s32.totalorder %s234, %s235
      %p246 = scmp.eq.s32.totalorder %s42, 0
      %p247 = por %p245, %p246
      %p248 = scmp.ne.s32.totalorder %s234, %s235
      %p249 = scmp.eq.s32.totalorder %s43, 3
      %p250 = por %p248, %p249
      %p252 = scmp.ne.s32.totalorder %s235, %s251
      %p253 = scmp.eq.s32.totalorder %s43, 0
      %p254 = por %p252, %p253
      %s255 = ssub.s32 %s45, %s52
      %p256 = scmp.eq.s32.totalorder %s255, 0
      %s258 = sadd.s32 %s257, 1
      %s259 = scalar_select %p256, %s257, %s258
      %p262 = pneg %p256
      %p263 = scmp.eq.s32.totalorder %s37, 3
      %p264 = por %p262, %p263
      %p265 = scmp.ne.s32.totalorder %s257, %s260
      %p266 = scmp.eq.s32.totalorder %s37, 0
      %p267 = por %p265, %p266
      %p268 = scmp.ne.s32.totalorder %s257, %s260
      %p269 = scmp.eq.s32.totalorder %s42, 3
      %p270 = por %p268, %p269
      %p271 = scmp.ne.s32.totalorder %s260, %s261
      %p272 = scmp.eq.s32.totalorder %s42, 0
      %p273 = por %p271, %p272
      %p274 = scmp.ne.s32.totalorder %s260, %s261
      %p275 = scmp.eq.s32.totalorder %s43, 3
      %p276 = por %p274, %p275
      %p278 = scmp.ne.s32.totalorder %s261, %s277
      %p279 = scmp.eq.s32.totalorder %s43, 0
      %p280 = por %p278, %p279
      %s281 = ssub.s32 %s45, %s52
      %p282 = scmp.eq.s32.totalorder %s281, 0
      %s284 = sadd.s32 %s283, 1
      %s285 = scalar_select %p282, %s283, %s284
      %p288 = pneg %p282
      %p289 = scmp.eq.s32.totalorder %s37, 3
      %p290 = por %p288, %p289
      %p291 = scmp.ne.s32.totalorder %s283, %s286
      %p292 = scmp.eq.s32.totalorder %s37, 0
      %p293 = por %p291, %p292
      %p294 = scmp.ne.s32.totalorder %s283, %s286
      %p295 = scmp.eq.s32.totalorder %s42, 3
      %p296 = por %p294, %p295
      %p297 = scmp.ne.s32.totalorder %s286, %s287
      %p298 = scmp.eq.s32.totalorder %s42, 0
      %p299 = por %p297, %p298
      %p300 = scmp.ne.s32.totalorder %s286, %s287
      %p301 = scmp.eq.s32.totalorder %s43, 3
      %p302 = por %p300, %p301
      %p304 = scmp.ne.s32.totalorder %s287, %s303
      %p305 = scmp.eq.s32.totalorder %s43, 0
      %p306 = por %p304, %p305
      %s307 = ssub.s32 %s45, %s52
      %p308 = scmp.eq.s32.totalorder %s307, 0
      %s310 = sadd.s32 %s309, 1
      %s311 = scalar_select %p308, %s309, %s310
      %p314 = pneg %p308
      %p315 = scmp.eq.s32.totalorder %s37, 3
      %p316 = por %p314, %p315
      %p317 = scmp.ne.s32.totalorder %s309, %s312
      %p318 = scmp.eq.s32.totalorder %s37, 0
      %p319 = por %p317, %p318
      %p320 = scmp.ne.s32.totalorder %s309, %s312
      %p321 = scmp.eq.s32.totalorder %s42, 3
      %p322 = por %p320, %p321
      %p323 = scmp.ne.s32.totalorder %s312, %s313
      %p324 = scmp.eq.s32.totalorder %s42, 0
      %p325 = por %p323, %p324
      %p326 = scmp.ne.s32.totalorder %s312, %s313
      %p327 = scmp.eq.s32.totalorder %s43, 3
      %p328 = por %p326, %p327
      %p330 = scmp.ne.s32.totalorder %s313, %s329
      %p331 = scmp.eq.s32.totalorder %s43, 0
      %p332 = por %p330, %p331
      %s333 = ssub.s32 %s45, %s52
      %p334 = scmp.eq.s32.totalorder %s333, 0
      %s336 = sadd.s32 %s335, 1
      %s337 = scalar_select %p334, %s335, %s336
      %p340 = pneg %p334
      %p341 = scmp.eq.s32.totalorder %s37, 3
      %p342 = por %p340, %p341
      %p343 = scmp.ne.s32.totalorder %s335, %s338
      %p344 = scmp.eq.s32.totalorder %s37, 0
      %p345 = por %p343, %p344
      %p346 = scmp.ne.s32.totalorder %s335, %s338
      %p347 = scmp.eq.s32.totalorder %s42, 3
      %p348 = por %p346, %p347
      %p349 = scmp.ne.s32.totalorder %s338, %s339
      %p350 = scmp.eq.s32.totalorder %s42, 0
      %p351 = por %p349, %p350
      %p352 = scmp.ne.s32.totalorder %s338, %s339
      %p353 = scmp.eq.s32.totalorder %s43, 3
      %p354 = por %p352, %p353
      %p356 = scmp.ne.s32.totalorder %s339, %s355
      %p357 = scmp.eq.s32.totalorder %s43, 0
      %p358 = por %p356, %p357
      %s359 = ssub.s32 %s45, %s52
      %p360 = scmp.eq.s32.totalorder %s359, 0
      %s362 = sadd.s32 %s361, 1
      %s363 = scalar_select %p360, %s361, %s362
      %p366 = pneg %p360
      %p367 = scmp.eq.s32.totalorder %s37, 3
      %p368 = por %p366, %p367
      %p369 = scmp.ne.s32.totalorder %s361, %s364
      %p370 = scmp.eq.s32.totalorder %s37, 0
      %p371 = por %p369, %p370
      %p372 = scmp.ne.s32.totalorder %s361, %s364
      %p373 = scmp.eq.s32.totalorder %s42, 3
      %p374 = por %p372, %p373
      %p375 = scmp.ne.s32.totalorder %s364, %s365
      %p376 = scmp.eq.s32.totalorder %s42, 0
      %p377 = por %p375, %p376
      %p378 = scmp.ne.s32.totalorder %s364, %s365
      %p379 = scmp.eq.s32.totalorder %s43, 3
      %p380 = por %p378, %p379
      %p382 = scmp.ne.s32.totalorder %s365, %s381
      %p383 = scmp.eq.s32.totalorder %s43, 0
      %p384 = por %p382, %p383
      %s385 = ssub.s32 %s45, %s52
      %p386 = scmp.eq.s32.totalorder %s385, 0
      %s388 = sadd.s32 %s387, 1
      %s389 = scalar_select %p386, %s387, %s388
      %p392 = pneg %p386
      %p393 = scmp.eq.s32.totalorder %s37, 3
      %p394 = por %p392, %p393
      %p395 = scmp.ne.s32.totalorder %s387, %s390
      %p396 = scmp.eq.s32.totalorder %s37, 0
      %p397 = por %p395, %p396
      %p398 = scmp.ne.s32.totalorder %s387, %s390
      %p399 = scmp.eq.s32.totalorder %s42, 3
      %p400 = por %p398, %p399
      %p401 = scmp.ne.s32.totalorder %s390, %s391
      %p402 = scmp.eq.s32.totalorder %s42, 0
      %p403 = por %p401, %p402
      %p404 = scmp.ne.s32.totalorder %s390, %s391
      %p405 = scmp.eq.s32.totalorder %s43, 3
      %p406 = por %p404, %p405
      %p408 = scmp.ne.s32.totalorder %s391, %s407
      %p409 = scmp.eq.s32.totalorder %s43, 0
      %p410 = por %p408, %p409
      %s411 = ssub.s32 %s45, %s52
      %p412 = scmp.eq.s32.totalorder %s411, 0
      %s414 = sadd.s32 %s413, 1
      %s415 = scalar_select %p412, %s413, %s414
      %p418 = pneg %p412
      %p419 = scmp.eq.s32.totalorder %s37, 3
      %p420 = por %p418, %p419
      %p421 = scmp.ne.s32.totalorder %s413, %s416
      %p422 = scmp.eq.s32.totalorder %s37, 0
      %p423 = por %p421, %p422
      %p424 = scmp.ne.s32.totalorder %s413, %s416
      %p425 = scmp.eq.s32.totalorder %s42, 3
      %p426 = por %p424, %p425
      %p427 = scmp.ne.s32.totalorder %s416, %s417
      %p428 = scmp.eq.s32.totalorder %s42, 0
      %p429 = por %p427, %p428
      %p430 = scmp.ne.s32.totalorder %s416, %s417
      %p431 = scmp.eq.s32.totalorder %s43, 3
      %p432 = por %p430, %p431
      %p434 = scmp.ne.s32.totalorder %s417, %s433
      %p435 = scmp.eq.s32.totalorder %s43, 0
      %p436 = por %p434, %p435
      %s437 = ssub.s32 %s45, %s52
      %p438 = scmp.eq.s32.totalorder %s437, 0
      %s440 = sadd.s32 %s439, 1
      %s441 = scalar_select %p438, %s439, %s440
      %p444 = pneg %p438
      %p445 = scmp.eq.s32.totalorder %s37, 3
      %p446 = por %p444, %p445
      %p447 = scmp.ne.s32.totalorder %s439, %s442
      %p448 = scmp.eq.s32.totalorder %s37, 0
      %p449 = por %p447, %p448
      %p450 = scmp.ne.s32.totalorder %s439, %s442
      %p451 = scmp.eq.s32.totalorder %s42, 3
      %p452 = por %p450, %p451
      %p453 = scmp.ne.s32.totalorder %s442, %s443
      %p454 = scmp.eq.s32.totalorder %s42, 0
      %p455 = por %p453, %p454
      %p456 = scmp.ne.s32.totalorder %s442, %s443
      %p457 = scmp.eq.s32.totalorder %s43, 3
      %p458 = por %p456, %p457
      %p460 = scmp.ne.s32.totalorder %s443, %s459
      %p461 = scmp.eq.s32.totalorder %s43, 0
      %p462 = por %p460, %p461
      %s464 = sadd.s32 %s463, 1
      %p467 = scmp.eq.s32.totalorder %s37, 3
      %p468 = scmp.ne.s32.totalorder %s463, %s465
      %p469 = scmp.eq.s32.totalorder %s37, 0
      %p470 = por %p468, %p469
      %p471 = scmp.ne.s32.totalorder %s463, %s465
      %p472 = scmp.eq.s32.totalorder %s42, 3
      %p473 = por %p471, %p472
      %p474 = scmp.ne.s32.totalorder %s465, %s466
      %p475 = scmp.eq.s32.totalorder %s42, 0
      %p476 = por %p474, %p475
      %p477 = scmp.ne.s32.totalorder %s465, %s466
      %p478 = scmp.eq.s32.totalorder %s43, 3
      %p479 = por %p477, %p478
      %p481 = scmp.ne.s32.totalorder %s466, %s480
      %p482 = scmp.eq.s32.totalorder %s43, 0
      %p483 = por %p481, %p482
      %s485 = sadd.s32 %s484, 1
      %p488 = scmp.eq.s32.totalorder %s37, 3
      %p489 = scmp.ne.s32.totalorder %s484, %s486
      %p490 = scmp.eq.s32.totalorder %s37, 0
      %p491 = por %p489, %p490
      %p492 = scmp.ne.s32.totalorder %s484, %s486
      %p493 = scmp.eq.s32.totalorder %s42, 3
      %p494 = por %p492, %p493
      %p495 = scmp.ne.s32.totalorder %s486, %s487
      %p496 = scmp.eq.s32.totalorder %s42, 0
      %p497 = por %p495, %p496
      %p498 = scmp.ne.s32.totalorder %s486, %s487
      %p499 = scmp.eq.s32.totalorder %s43, 3
      %p500 = por %p498, %p499
      %p502 = scmp.ne.s32.totalorder %s487, %s501
      %p503 = scmp.eq.s32.totalorder %s43, 0
      %p504 = por %p502, %p503
      %s506 = sadd.s32 %s505, 1
      %p509 = scmp.eq.s32.totalorder %s37, 3
      %p510 = scmp.ne.s32.totalorder %s505, %s507
      %p511 = scmp.eq.s32.totalorder %s37, 0
      %p512 = por %p510, %p511
      %p513 = scmp.ne.s32.totalorder %s505, %s507
      %p514 = scmp.eq.s32.totalorder %s42, 3
      %p515 = por %p513, %p514
      %p516 = scmp.ne.s32.totalorder %s507, %s508
      %p517 = scmp.eq.s32.totalorder %s42, 0
      %p518 = por %p516, %p517
      %p519 = scmp.ne.s32.totalorder %s507, %s508
      %p520 = scmp.eq.s32.totalorder %s43, 3
      %p521 = por %p519, %p520
      %p523 = scmp.ne.s32.totalorder %s508, %s522
      %p524 = scmp.eq.s32.totalorder %s43, 0
      %p525 = por %p523, %p524
      %s527 = sadd.s32 %s526, 1
      %p530 = scmp.eq.s32.totalorder %s37, 3
      %p531 = scmp.ne.s32.totalorder %s526, %s528
      %p532 = scmp.eq.s32.totalorder %s37, 0
      %p533 = por %p531, %p532
      %p534 = scmp.ne.s32.totalorder %s526, %s528
      %p535 = scmp.eq.s32.totalorder %s42, 3
      %p536 = por %p534, %p535
      %p537 = scmp.ne.s32.totalorder %s528, %s529
      %p538 = scmp.eq.s32.totalorder %s42, 0
      %p539 = por %p537, %p538
      %p540 = scmp.ne.s32.totalorder %s528, %s529
      %p541 = scmp.eq.s32.totalorder %s43, 3
      %p542 = por %p540, %p541
      %p544 = scmp.ne.s32.totalorder %s529, %s543
      %p545 = scmp.eq.s32.totalorder %s43, 0
      %p546 = por %p544, %p545
      %s547 = ssub.s32 %s44, %s56
      %p548 = scmp.eq.s32.totalorder %s547, 0
      %s550 = sadd.s32 %s549, 1
      %s551 = scalar_select %p548, %s549, %s550
      %p554 = pneg %p548
      %p555 = scmp.eq.s32.totalorder %s37, 3
      %p556 = por %p554, %p555
      %p557 = scmp.ne.s32.totalorder %s549, %s552
      %p558 = scmp.eq.s32.totalorder %s37, 0
      %p559 = por %p557, %p558
      %p560 = scmp.ne.s32.totalorder %s549, %s552
      %p561 = scmp.eq.s32.totalorder %s42, 3
      %p562 = por %p560, %p561
      %p563 = scmp.ne.s32.totalorder %s552, %s553
      %p564 = scmp.eq.s32.totalorder %s42, 0
      %p565 = por %p563, %p564
      %p566 = scmp.ne.s32.totalorder %s552, %s553
      %p567 = scmp.eq.s32.totalorder %s43, 3
      %p568 = por %p566, %p567
      %p570 = scmp.ne.s32.totalorder %s553, %s569
      %p571 = scmp.eq.s32.totalorder %s43, 0
      %p572 = por %p570, %p571
      %p573 = scmp.le.s32.totalorder 1, %s37
      %p574 = scmp.lt.s32.totalorder %s37, 5
      %p575 = pnand %p573, %p574
      %p576 = pneg %p575
      // Predicated region
      $region9: #{tpu_custom_call.1} parent=5 // pred_check
        _
      $region10: #{tpu_custom_call.1} parent=5 // pred_check_branch
        %578 = sbr.rel (%p575) target = $region12
      $region11: #{tpu_custom_call.1} parent=5 // pred_region
        %s579 = ssub.s32 %s37, 1
        // Predicated region
        $region13: #{tpu_custom_call.1} parent=11 // pred_check
          %p580 = pneg %p122
        $region14: #{tpu_custom_call.1} parent=11 // pred_check_branch
          %582 = sbr.rel (%p580) target = $region16
        $region15: #{tpu_custom_call.1} parent=11 // pred_region
          %s584 = ssub.s32 16, 16
          %585 = vsyncadd [#allocation7], %s584
          %s587 = sshll.u32 [#allocation8], 4
          %s588 = int_to_ptr.vmem [resolvable:$true] %s587
          %590 = dma.hbm_to_vmem [thread:$0]  %s2, 16, %s588, [#allocation7]
        $region16: #{tpu_custom_call.1} parent=11 // pred_fallthru
          _
        // Predicated region
        $region17: #{tpu_custom_call.1} parent=11 // pred_check
          %p591 = pneg %p143
        $region18: #{tpu_custom_call.1} parent=11 // pred_check_branch
          %593 = sbr.rel (%p591) target = $region20
        $region19: #{tpu_custom_call.1} parent=11 // pred_region
          %s595 = ssub.s32 16, 16
          %596 = vsyncadd [#allocation10], %s595
          %s598 = sshll.u32 [#allocation9], 4
          %s599 = int_to_ptr.vmem [resolvable:$true] %s598
          %601 = dma.hbm_to_vmem [thread:$0]  %s3, 16, %s599, [#allocation10]
        $region20: #{tpu_custom_call.1} parent=11 // pred_fallthru
          _
        // Predicated region
        $region21: #{tpu_custom_call.1} parent=11 // pred_check
          %p602 = pneg %p476
        $region22: #{tpu_custom_call.1} parent=11 // pred_check_branch
          %604 = sbr.rel (%p602) target = $region24
        $region23: #{tpu_custom_call.1} parent=11 // pred_region
          %s606 = ssub.s32 1024, 1024
          %607 = vsyncadd [#allocation10], %s606
          %s608 = sshll.u32 [#allocation17], 4
          %s609 = int_to_ptr.vmem [resolvable:$true] %s608
          %614 = dma.hbm_to_vmem [thread:$0]  %s16, 1024, %s609, [#allocation10], 64, 64, 4
        $region24: #{tpu_custom_call.1} parent=11 // pred_fallthru
          _
        // Predicated region
        $region25: #{tpu_custom_call.1} parent=11 // pred_check
          %p615 = pneg %p497
        $region26: #{tpu_custom_call.1} parent=11 // pred_check_branch
          %617 = sbr.rel (%p615) target = $region28
        $region27: #{tpu_custom_call.1} parent=11 // pred_region
          _
        $region28: #{tpu_custom_call.1} parent=11 // pred_fallthru
          _
        // Predicated region
        $region29: #{tpu_custom_call.1} parent=11 // pred_check
          %p618 = pneg %p518
        $region30: #{tpu_custom_call.1} parent=11 // pred_check_branch
          %620 = sbr.rel (%p618) target = $region32
        $region31: #{tpu_custom_call.1} parent=11 // pred_region
          %s622 = ssub.s32 1024, 1024
          %623 = vsyncadd [#allocation19], %s622
          %s624 = sshll.u32 [#allocation18], 4
          %s625 = int_to_ptr.vmem [resolvable:$true] %s624
          %630 = dma.hbm_to_vmem [thread:$0]  %s18, 1024, %s625, [#allocation19], 64, 64, 4
        $region32: #{tpu_custom_call.1} parent=11 // pred_fallthru
          _
        // Predicated region
        $region33: #{tpu_custom_call.1} parent=11 // pred_check
          %p631 = pneg %p539
        $region34: #{tpu_custom_call.1} parent=11 // pred_check_branch
          %633 = sbr.rel (%p631) target = $region36
        $region35: #{tpu_custom_call.1} parent=11 // pred_region
          _
        $region36: #{tpu_custom_call.1} parent=11 // pred_fallthru
          _
      $region12: #{tpu_custom_call.1} parent=5 // pred_fallthru
        _
      %p634 = scmp.lt.s32.totalorder %s37, 4
      // Predicated region
      $region37: #{tpu_custom_call.1} parent=5 // pred_check
        %p635 = pneg %p634
      $region38: #{tpu_custom_call.1} parent=5 // pred_check_branch
        %637 = sbr.rel (%p635) target = $region40
      $region39: #{tpu_custom_call.1} parent=5 // pred_region
        // Predicated region
        $region41: #{tpu_custom_call.1} parent=39 // pred_check
          %p638 = pneg %p69
        $region42: #{tpu_custom_call.1} parent=39 // pred_check_branch
          %640 = sbr.rel (%p638) target = $region44
        $region43: #{tpu_custom_call.1} parent=39 // pred_region
          %s641 = sand.u32 %s37, 1
          %s642 = scalar_lea.sflag [#allocation4], %s641
          %s643 = sand.u32 %s59, 1
          %s644 = smul.addr %s643, 16
          %s645 = scalar_lea.vmem [#allocation3], %s644
          %s647 = ssub.s32 256, 256
          %648 = vsyncadd %s642, %s647
          %s649 = smul.addr %s44, 2
          %s650 = smul.addr %s649, 128
          %s651 = scalar_lea.hbm %s0, %s650
          %s652 = sshll.u32 %s645, 4
          %s653 = int_to_ptr.vmem [resolvable:$true] %s652
          %658 = dma.hbm_to_vmem [thread:$0]  %s651, 256, %s653, %s642, 128, 128, 8
        $region44: #{tpu_custom_call.1} parent=39 // pred_fallthru
          _
        // Predicated region
        $region45: #{tpu_custom_call.1} parent=39 // pred_check
          %p659 = pneg %p95
        $region46: #{tpu_custom_call.1} parent=39 // pred_check_branch
          %661 = sbr.rel (%p659) target = $region48
        $region47: #{tpu_custom_call.1} parent=39 // pred_region
          %s662 = sand.u32 %s37, 1
          %s663 = scalar_lea.sflag [#allocation7], %s662
          %s664 = sand.u32 %s85, 1
          %s665 = scalar_lea.vmem [#allocation6], %s664
          %s667 = ssub.s32 16, 16
          %668 = vsyncadd %s663, %s667
          %s669 = smul.addr %s44, 16
          %s670 = scalar_lea.hbm %s1, %s669
          %s672 = sshll.u32 %s665, 4
          %s673 = int_to_ptr.vmem [resolvable:$true] %s672
          %675 = dma.hbm_to_vmem [thread:$0]  %s670, 16, %s673, %s663
        $region48: #{tpu_custom_call.1} parent=39 // pred_fallthru
          _
        // Predicated region
        $region49: #{tpu_custom_call.1} parent=39 // pred_check
          %p676 = pneg %p163
        $region50: #{tpu_custom_call.1} parent=39 // pred_check_branch
          %678 = sbr.rel (%p676) target = $region52
        $region51: #{tpu_custom_call.1} parent=39 // pred_region
          %s679 = sand.u32 %s37, 1
          %s680 = scalar_lea.sflag [#allocation4], %s679
          %s681 = sand.u32 %s153, 1
          %s682 = smul.addr %s681, 192
          %s683 = scalar_lea.vmem [#allocation11], %s682
          %s685 = ssub.s32 3072, 3072
          %686 = vsyncadd %s680, %s685
          %s687 = smul.addr %s45, 48
          %s688 = smul.addr %s687, 64
          %s689 = scalar_lea.hbm %s4, %s688
          %s690 = sshll.u32 %s683, 4
          %s691 = int_to_ptr.vmem [resolvable:$true] %s690
          %696 = dma.hbm_to_vmem [thread:$0]  %s689, 3072, %s691, %s680, 192, 192, 12
        $region52: #{tpu_custom_call.1} parent=39 // pred_fallthru
          _
        // Predicated region
        $region53: #{tpu_custom_call.1} parent=39 // pred_check
          %p697 = pneg %p189
        $region54: #{tpu_custom_call.1} parent=39 // pred_check_branch
          %699 = sbr.rel (%p697) target = $region56
        $region55: #{tpu_custom_call.1} parent=39 // pred_region
          %p700 = scmp.lt.s32.totalorder %s45, 1
          %s701 = scalar_select %p700, %s45, 1
          %s702 = smul.addr %s701, 3
          %s703 = scalar_lea.vmem %s5, %s702
        $region56: #{tpu_custom_call.1} parent=39 // pred_fallthru
          _
        // Predicated region
        $region57: #{tpu_custom_call.1} parent=39 // pred_check
          %p704 = pneg %p215
        $region58: #{tpu_custom_call.1} parent=39 // pred_check_branch
          %706 = sbr.rel (%p704) target = $region60
        $region59: #{tpu_custom_call.1} parent=39 // pred_region
          %s707 = sand.u32 %s37, 1
          %s708 = scalar_lea.sflag [#allocation7], %s707
          %s709 = sand.u32 %s205, 1
          %s710 = smul.addr %s709, 64
          %s711 = scalar_lea.vmem [#allocation12], %s710
          %s713 = ssub.s32 1024, 1024
          %714 = vsyncadd %s708, %s713
          %s715 = smul.addr %s45, 16
          %s716 = smul.addr %s715, 64
          %s717 = scalar_lea.hbm %s6, %s716
          %s718 = sshll.u32 %s711, 4
          %s719 = int_to_ptr.vmem [resolvable:$true] %s718
          %724 = dma.hbm_to_vmem [thread:$0]  %s717, 1024, %s719, %s708, 64, 64, 4
        $region60: #{tpu_custom_call.1} parent=39 // pred_fallthru
          _
        // Predicated region
        $region61: #{tpu_custom_call.1} parent=39 // pred_check
          %p725 = pneg %p241
        $region62: #{tpu_custom_call.1} parent=39 // pred_check_branch
          %727 = sbr.rel (%p725) target = $region64
        $region63: #{tpu_custom_call.1} parent=39 // pred_region
          %p728 = scmp.lt.s32.totalorder %s45, 1
          %s729 = scalar_select %p728, %s45, 1
          %s730 = scalar_lea.vmem %s7, %s729
        $region64: #{tpu_custom_call.1} parent=39 // pred_fallthru
          _
        // Predicated region
        $region65: #{tpu_custom_call.1} parent=39 // pred_check
          %p731 = pneg %p267
        $region66: #{tpu_custom_call.1} parent=39 // pred_check_branch
          %733 = sbr.rel (%p731) target = $region68
        $region67: #{tpu_custom_call.1} parent=39 // pred_region
          %s734 = sand.u32 %s37, 1
          %s735 = scalar_lea.sflag [#allocation4], %s734
          %s736 = sand.u32 %s257, 1
          %s737 = scalar_lea.vmem [#allocation13], %s736
          %s739 = ssub.s32 16, 16
          %740 = vsyncadd %s735, %s739
          %s741 = smul.addr %s45, 16
          %s742 = scalar_lea.hbm %s8, %s741
          %s744 = sshll.u32 %s737, 4
          %s745 = int_to_ptr.vmem [resolvable:$true] %s744
          %747 = dma.hbm_to_vmem [thread:$0]  %s742, 16, %s745, %s735
        $region68: #{tpu_custom_call.1} parent=39 // pred_fallthru
          _
        // Predicated region
        $region69: #{tpu_custom_call.1} parent=39 // pred_check
          %p748 = pneg %p293
        $region70: #{tpu_custom_call.1} parent=39 // pred_check_branch
          %750 = sbr.rel (%p748) target = $region72
        $region71: #{tpu_custom_call.1} parent=39 // pred_region
          %s751 = sand.u32 %s37, 1
          %s752 = scalar_lea.sflag [#allocation7], %s751
          %s753 = sand.u32 %s283, 1
          %s754 = scalar_lea.vmem [#allocation14], %s753
          %s756 = ssub.s32 16, 16
          %757 = vsyncadd %s752, %s756
          %s758 = smul.addr %s45, 16
          %s759 = scalar_lea.hbm %s9, %s758
          %s761 = sshll.u32 %s754, 4
          %s762 = int_to_ptr.vmem [resolvable:$true] %s761
          %764 = dma.hbm_to_vmem [thread:$0]  %s759, 16, %s762, %s752
        $region72: #{tpu_custom_call.1} parent=39 // pred_fallthru
          _
        // Predicated region
        $region73: #{tpu_custom_call.1} parent=39 // pred_check
          %p765 = pneg %p319
        $region74: #{tpu_custom_call.1} parent=39 // pred_check_branch
          %767 = sbr.rel (%p765) target = $region76
        $region75: #{tpu_custom_call.1} parent=39 // pred_region
          %s768 = sand.u32 %s37, 1
          %s769 = scalar_lea.sflag [#allocation4], %s768
          %s770 = sand.u32 %s309, 1
          %s771 = smul.addr %s770, 256
          %s772 = scalar_lea.vmem [#allocation15], %s771
          %s774 = ssub.s32 4096, 4096
          %775 = vsyncadd %s769, %s774
          %s776 = smul.addr %s45, 64
          %s777 = smul.addr %s776, 64
          %s778 = scalar_lea.hbm %s10, %s777
          %s779 = sshll.u32 %s772, 4
          %s780 = int_to_ptr.vmem [resolvable:$true] %s779
          %785 = dma.hbm_to_vmem [thread:$0]  %s778, 4096, %s780, %s769, 256, 256, 16
        $region76: #{tpu_custom_call.1} parent=39 // pred_fallthru
          _
        // Predicated region
        $region77: #{tpu_custom_call.1} parent=39 // pred_check
          %p786 = pneg %p345
        $region78: #{tpu_custom_call.1} parent=39 // pred_check_branch
          %788 = sbr.rel (%p786) target = $region80
        $region79: #{tpu_custom_call.1} parent=39 // pred_region
          %p789 = scmp.lt.s32.totalorder %s45, 1
          %s790 = scalar_select %p789, %s45, 1
          %s791 = smul.addr %s790, 4
          %s792 = scalar_lea.vmem %s11, %s791
        $region80: #{tpu_custom_call.1} parent=39 // pred_fallthru
          _
        // Predicated region
        $region81: #{tpu_custom_call.1} parent=39 // pred_check
          %p793 = pneg %p371
        $region82: #{tpu_custom_call.1} parent=39 // pred_check_branch
          %795 = sbr.rel (%p793) target = $region84
        $region83: #{tpu_custom_call.1} parent=39 // pred_region
          %s796 = sand.u32 %s37, 1
          %s797 = scalar_lea.sflag [#allocation7], %s796
          %s798 = sand.u32 %s361, 1
          %s799 = smul.addr %s798, 256
          %s800 = scalar_lea.vmem [#allocation16], %s799
          %s802 = ssub.s32 4096, 4096
          %803 = vsyncadd %s797, %s802
          %s804 = smul.addr %s45, 64
          %s805 = smul.addr %s804, 64
          %s806 = scalar_lea.hbm %s12, %s805
          %s807 = sshll.u32 %s800, 4
          %s808 = int_to_ptr.vmem [resolvable:$true] %s807
          %813 = dma.hbm_to_vmem [thread:$0]  %s806, 4096, %s808, %s797, 64, 64, 4
        $region84: #{tpu_custom_call.1} parent=39 // pred_fallthru
          _
        // Predicated region
        $region85: #{tpu_custom_call.1} parent=39 // pred_check
          %p814 = pneg %p397
        $region86: #{tpu_custom_call.1} parent=39 // pred_check_branch
          %816 = sbr.rel (%p814) target = $region88
        $region87: #{tpu_custom_call.1} parent=39 // pred_region
          %p817 = scmp.lt.s32.totalorder %s45, 1
          %s818 = scalar_select %p817, %s45, 1
          %s819 = scalar_lea.vmem %s13, %s818
        $region88: #{tpu_custom_call.1} parent=39 // pred_fallthru
          _
        // Predicated region
        $region89: #{tpu_custom_call.1} parent=39 // pred_check
          %p820 = pneg %p423
        $region90: #{tpu_custom_call.1} parent=39 // pred_check_branch
          %822 = sbr.rel (%p820) target = $region92
        $region91: #{tpu_custom_call.1} parent=39 // pred_region
          %p823 = scmp.lt.s32.totalorder %s45, 1
          %s824 = scalar_select %p823, %s45, 1
          %s825 = scalar_lea.vmem %s14, %s824
        $region92: #{tpu_custom_call.1} parent=39 // pred_fallthru
          _
        // Predicated region
        $region93: #{tpu_custom_call.1} parent=39 // pred_check
          %p826 = pneg %p449
        $region94: #{tpu_custom_call.1} parent=39 // pred_check_branch
          %828 = sbr.rel (%p826) target = $region96
        $region95: #{tpu_custom_call.1} parent=39 // pred_region
          %p829 = scmp.lt.s32.totalorder %s45, 1
          %s830 = scalar_select %p829, %s45, 1
          %s831 = scalar_lea.vmem %s15, %s830
        $region96: #{tpu_custom_call.1} parent=39 // pred_fallthru
          _
      $region40: #{tpu_custom_call.1} parent=5 // pred_fallthru
        _
      %p832 = scmp.le.s32.totalorder 1, %s37
      %p833 = scmp.lt.s32.totalorder %s37, 5
      %p834 = pnand %p832, %p833
      %p835 = pneg %p834
      // Predicated region
      $region97: #{tpu_custom_call.1} parent=5 // pred_check
        _
      $region98: #{tpu_custom_call.1} parent=5 // pred_check_branch
        %837 = sbr.rel (%p834) target = $region100
      $region99: #{tpu_custom_call.1} parent=5 // pred_region
        %s838 = ssub.s32 %s37, 1
        %s839 = sand.u32 %s42, 1
        %s840 = scalar_lea.sflag [#allocation4], %s839
        %s841 = sand.u32 %s62, 1
        %s842 = smul.addr %s841, 16
        %s843 = scalar_lea.vmem [#allocation3], %s842
        // Predicated region
        $region101: #{tpu_custom_call.1} parent=99 // pred_check
          %p844 = pneg %p75
        $region102: #{tpu_custom_call.1} parent=99 // pred_check_branch
          %846 = sbr.rel (%p844) target = $region104
        $region103: #{tpu_custom_call.1} parent=99 // pred_region
          %847 = dma.done %s840, 256
        $region104: #{tpu_custom_call.1} parent=99 // pred_fallthru
          _
        %s848 = sand.u32 %s42, 1
        %s849 = scalar_lea.sflag [#allocation7], %s848
        %s850 = sand.u32 %s88, 1
        %s851 = scalar_lea.vmem [#allocation6], %s850
        // Predicated region
        $region105: #{tpu_custom_call.1} parent=99 // pred_check
          %p852 = pneg %p101
        $region106: #{tpu_custom_call.1} parent=99 // pred_check_branch
          %854 = sbr.rel (%p852) target = $region108
        $region107: #{tpu_custom_call.1} parent=99 // pred_region
          %855 = dma.done %s849, 16
        $region108: #{tpu_custom_call.1} parent=99 // pred_fallthru
          _
        // Predicated region
        $region109: #{tpu_custom_call.1} parent=99 // pred_check
          %p856 = pneg %p122
        $region110: #{tpu_custom_call.1} parent=99 // pred_check_branch
          %858 = sbr.rel (%p856) target = $region112
        $region111: #{tpu_custom_call.1} parent=99 // pred_region
          %859 = dma.done [#allocation7], 16
        $region112: #{tpu_custom_call.1} parent=99 // pred_fallthru
          _
        // Predicated region
        $region113: #{tpu_custom_call.1} parent=99 // pred_check
          %p860 = pneg %p143
        $region114: #{tpu_custom_call.1} parent=99 // pred_check_branch
          %862 = sbr.rel (%p860) target = $region116
        $region115: #{tpu_custom_call.1} parent=99 // pred_region
          %863 = dma.done [#allocation10], 16
        $region116: #{tpu_custom_call.1} parent=99 // pred_fallthru
          _
        %s864 = sand.u32 %s42, 1
        %s865 = scalar_lea.sflag [#allocation4], %s864
        %s866 = sand.u32 %s156, 1
        %s867 = smul.addr %s866, 192
        %s868 = scalar_lea.vmem [#allocation11], %s867
        // Predicated region
        $region117: #{tpu_custom_call.1} parent=99 // pred_check
          %p869 = pneg %p169
        $region118: #{tpu_custom_call.1} parent=99 // pred_check_branch
          %871 = sbr.rel (%p869) target = $region120
        $region119: #{tpu_custom_call.1} parent=99 // pred_region
          %872 = dma.done %s865, 3072
        $region120: #{tpu_custom_call.1} parent=99 // pred_fallthru
          _
        %s873 = sand.u32 %s42, 1
        %s874 = scalar_lea.sflag [#allocation7], %s873
        %s875 = sand.u32 %s208, 1
        %s876 = smul.addr %s875, 64
        %s877 = scalar_lea.vmem [#allocation12], %s876
        // Predicated region
        $region121: #{tpu_custom_call.1} parent=99 // pred_check
          %p878 = pneg %p221
        $region122: #{tpu_custom_call.1} parent=99 // pred_check_branch
          %880 = sbr.rel (%p878) target = $region124
        $region123: #{tpu_custom_call.1} parent=99 // pred_region
          %881 = dma.done %s874, 1024
        $region124: #{tpu_custom_call.1} parent=99 // pred_fallthru
          _
        %s882 = sand.u32 %s42, 1
        %s883 = scalar_lea.sflag [#allocation4], %s882
        %s884 = sand.u32 %s260, 1
        %s885 = scalar_lea.vmem [#allocation13], %s884
        // Predicated region
        $region125: #{tpu_custom_call.1} parent=99 // pred_check
          %p886 = pneg %p273
        $region126: #{tpu_custom_call.1} parent=99 // pred_check_branch
          %888 = sbr.rel (%p886) target = $region128
        $region127: #{tpu_custom_call.1} parent=99 // pred_region
          %889 = dma.done %s883, 16
        $region128: #{tpu_custom_call.1} parent=99 // pred_fallthru
          _
        %s890 = sand.u32 %s42, 1
        %s891 = scalar_lea.sflag [#allocation7], %s890
        %s892 = sand.u32 %s286, 1
        %s893 = scalar_lea.vmem [#allocation14], %s892
        // Predicated region
        $region129: #{tpu_custom_call.1} parent=99 // pred_check
          %p894 = pneg %p299
        $region130: #{tpu_custom_call.1} parent=99 // pred_check_branch
          %896 = sbr.rel (%p894) target = $region132
        $region131: #{tpu_custom_call.1} parent=99 // pred_region
          %897 = dma.done %s891, 16
        $region132: #{tpu_custom_call.1} parent=99 // pred_fallthru
          _
        %s898 = sand.u32 %s42, 1
        %s899 = scalar_lea.sflag [#allocation4], %s898
        %s900 = sand.u32 %s312, 1
        %s901 = smul.addr %s900, 256
        %s902 = scalar_lea.vmem [#allocation15], %s901
        // Predicated region
        $region133: #{tpu_custom_call.1} parent=99 // pred_check
          %p903 = pneg %p325
        $region134: #{tpu_custom_call.1} parent=99 // pred_check_branch
          %905 = sbr.rel (%p903) target = $region136
        $region135: #{tpu_custom_call.1} parent=99 // pred_region
          %906 = dma.done %s899, 4096
        $region136: #{tpu_custom_call.1} parent=99 // pred_fallthru
          _
        %s907 = sand.u32 %s42, 1
        %s908 = scalar_lea.sflag [#allocation7], %s907
        %s909 = sand.u32 %s364, 1
        %s910 = smul.addr %s909, 256
        %s911 = scalar_lea.vmem [#allocation16], %s910
        // Predicated region
        $region137: #{tpu_custom_call.1} parent=99 // pred_check
          %p912 = pneg %p377
        $region138: #{tpu_custom_call.1} parent=99 // pred_check_branch
          %914 = sbr.rel (%p912) target = $region140
        $region139: #{tpu_custom_call.1} parent=99 // pred_region
          %915 = dma.done %s908, 4096
        $region140: #{tpu_custom_call.1} parent=99 // pred_fallthru
          _
        // Predicated region
        $region141: #{tpu_custom_call.1} parent=99 // pred_check
          %p916 = pneg %p476
        $region142: #{tpu_custom_call.1} parent=99 // pred_check_branch
          %918 = sbr.rel (%p916) target = $region144
        $region143: #{tpu_custom_call.1} parent=99 // pred_region
          %919 = dma.done [#allocation10], 1024
        $region144: #{tpu_custom_call.1} parent=99 // pred_fallthru
          _
        // Predicated region
        $region145: #{tpu_custom_call.1} parent=99 // pred_check
          %p920 = pneg %p518
        $region146: #{tpu_custom_call.1} parent=99 // pred_check_branch
          %922 = sbr.rel (%p920) target = $region148
        $region147: #{tpu_custom_call.1} parent=99 // pred_region
          %923 = dma.done [#allocation19], 1024
        $region148: #{tpu_custom_call.1} parent=99 // pred_fallthru
          _
        %s924 = sand.u32 %s42, 1
        %s925 = scalar_lea.sflag [#allocation4], %s924
        %s926 = sand.u32 %s62, 1
        %s927 = smul.addr %s926, 16
        %s928 = scalar_lea.vmem [#allocation3], %s927
        %p929 = pneg %p75
        %p930 = pneg %p72
        %s931 = sand.u32 %s42, 1
        %s932 = scalar_lea.sflag [#allocation7], %s931
        %s933 = sand.u32 %s88, 1
        %s934 = scalar_lea.vmem [#allocation6], %s933
        %p935 = pneg %p101
        %p936 = pneg %p98
        %p937 = pneg %p122
        %p938 = pneg %p119
        %p939 = pneg %p143
        %p940 = pneg %p140
        %s941 = sand.u32 %s42, 1
        %s942 = scalar_lea.sflag [#allocation4], %s941
        %s943 = sand.u32 %s156, 1
        %s944 = smul.addr %s943, 192
        %s945 = scalar_lea.vmem [#allocation11], %s944
        %p946 = pneg %p169
        %p947 = pneg %p166
        %p948 = scmp.lt.s32.totalorder %s47, 1
        %s949 = scalar_select %p948, %s47, 1
        %s950 = smul.addr %s949, 3
        %s951 = scalar_lea.vmem %s5, %s950
        %p952 = pneg %p195
        %p953 = pneg %p192
        %s954 = sand.u32 %s42, 1
        %s955 = scalar_lea.sflag [#allocation7], %s954
        %s956 = sand.u32 %s208, 1
        %s957 = smul.addr %s956, 64
        %s958 = scalar_lea.vmem [#allocation12], %s957
        %p959 = pneg %p221
        %p960 = pneg %p218
        %p961 = scmp.lt.s32.totalorder %s47, 1
        %s962 = scalar_select %p961, %s47, 1
        %s963 = scalar_lea.vmem %s7, %s962
        %p964 = pneg %p247
        %p965 = pneg %p244
        %s966 = sand.u32 %s42, 1
        %s967 = scalar_lea.sflag [#allocation4], %s966
        %s968 = sand.u32 %s260, 1
        %s969 = scalar_lea.vmem [#allocation13], %s968
        %p970 = pneg %p273
        %p971 = pneg %p270
        %s972 = sand.u32 %s42, 1
        %s973 = scalar_lea.sflag [#allocation7], %s972
        %s974 = sand.u32 %s286, 1
        %s975 = scalar_lea.vmem [#allocation14], %s974
        %p976 = pneg %p299
        %p977 = pneg %p296
        %s978 = sand.u32 %s42, 1
        %s979 = scalar_lea.sflag [#allocation4], %s978
        %s980 = sand.u32 %s312, 1
        %s981 = smul.addr %s980, 256
        %s982 = scalar_lea.vmem [#allocation15], %s981
        %p983 = pneg %p325
        %p984 = pneg %p322
        %p985 = scmp.lt.s32.totalorder %s47, 1
        %s986 = scalar_select %p985, %s47, 1
        %s987 = smul.addr %s986, 4
        %s988 = scalar_lea.vmem %s11, %s987
        %p989 = pneg %p351
        %p990 = pneg %p348
        %s991 = sand.u32 %s42, 1
        %s992 = scalar_lea.sflag [#allocation7], %s991
        %s993 = sand.u32 %s364, 1
        %s994 = smul.addr %s993, 256
        %s995 = scalar_lea.vmem [#allocation16], %s994
        %p996 = pneg %p377
        %p997 = pneg %p374
        %p998 = scmp.lt.s32.totalorder %s47, 1
        %s999 = scalar_select %p998, %s47, 1
        %s1000 = scalar_lea.vmem %s13, %s999
        %p1001 = pneg %p403
        %p1002 = pneg %p400
        %p1003 = scmp.lt.s32.totalorder %s47, 1
        %s1004 = scalar_select %p1003, %s47, 1
        %s1005 = scalar_lea.vmem %s14, %s1004
        %p1006 = pneg %p429
        %p1007 = pneg %p426
        %p1008 = scmp.lt.s32.totalorder %s47, 1
        %s1009 = scalar_select %p1008, %s47, 1
        %s1010 = scalar_lea.vmem %s15, %s1009
        %p1011 = pneg %p455
        %p1012 = pneg %p452
        %p1013 = pneg %p476
        %p1014 = pneg %p473
        %p1015 = pneg %p497
        %p1016 = pneg %p494
        %p1017 = pneg %p518
        %p1018 = pneg %p515
        %p1019 = pneg %p539
        %p1020 = pneg %p536
        %p1021 = pneg %p565
        %p1022 = pneg %p562
        %s1023 = sand.u32 %s552, 1
        %s1024 = scalar_lea.sflag [#allocation5], %s1023
        %s1025 = sand.u32 %s552, 1
        %s1026 = scalar_lea.vmem [#allocation20], %s1025
        %p1027 = scmp.lt.s32.totalorder %s47, 1
        %s1028 = scalar_select %p1027, %s47, 1
        %s1029 = smul.addr %s1028, 3
        %s1030 = scalar_lea.vmem %s5, %s1029
        %p1031 = scmp.lt.s32.totalorder %s47, 1
        %s1032 = scalar_select %p1031, %s47, 1
        %s1033 = scalar_lea.vmem %s7, %s1032
        %p1034 = scmp.lt.s32.totalorder %s47, 1
        %s1035 = scalar_select %p1034, %s47, 1
        %s1036 = smul.addr %s1035, 4
        %s1037 = scalar_lea.vmem %s11, %s1036
        %p1038 = scmp.lt.s32.totalorder %s47, 1
        %s1039 = scalar_select %p1038, %s47, 1
        %s1040 = scalar_lea.vmem %s13, %s1039
        %p1041 = scmp.lt.s32.totalorder %s47, 1
        %s1042 = scalar_select %p1041, %s47, 1
        %s1043 = scalar_lea.vmem %s14, %s1042
        %p1044 = scmp.lt.s32.totalorder %s47, 1
        %s1045 = scalar_select %p1044, %s47, 1
        %s1046 = scalar_lea.vmem %s15, %s1045
        %p1048 = scmp.eq.s32.totalorder %s47, 0
        // Predicated region
        $region149: #{tpu_custom_call.1} parent=99 // pred_check
          %p1049 = pneg %p1048
        $region150: #{tpu_custom_call.1} parent=99 // pred_check_branch
          %1051 = sbr.rel (%p1049) target = $region152
        $region151: #{tpu_custom_call.1} parent=99 // pred_region
          %v1052 = vld [vmem:[%s843] sm:$0xff]
          %v1053 = vld [vmem:[%s843 + $0x8] sm:$0xff]
          %v1054 = vld [vmem:[#allocation8] sm:$0x1]
          %v1055 = vld [vmem:[#allocation9] sm:$0x1]
          %1056 = vadd.xlane.f32.xlu0 %v1052
          %v1057 = vpop.xlane.xlu0 %1056
          %1058 = vadd.xlane.f32.xlu0 %v1053
          %v1059 = vpop.xlane.xlu0 %1058
          %v1060 = vrcp.pop 128.0
          %v1061 = vmul.f32 %v1057, %v1060
          %v1062 = vmul.f32 %v1059, %v1060
          %v1063 = vsub.f32 %v1052, %v1061
          %v1064 = vsub.f32 %v1053, %v1062
          %v1065 = vmul.f32 %v1063, %v1063
          %v1066 = vmul.f32 %v1064, %v1064
          %1067 = vadd.xlane.f32.xlu0 %v1065
          %v1068 = vpop.xlane.xlu0 %1067
          %1069 = vadd.xlane.f32.xlu0 %v1066
          %v1070 = vpop.xlane.xlu0 %1069
          %v1071 = vmul.f32 %v1068, %v1060
          %v1072 = vmul.f32 %v1070, %v1060
          %v1073 = vadd.f32 %v1071, 1e-12
          %v1074 = vadd.f32 %v1072, 1e-12
          %v1075 = vrsqrt.pop %v1073
          %v1076 = vrsqrt.pop %v1074
          %v1077 = vmul.f32 %v1063, %v1075
          %v1078 = vmul.f32 %v1064, %v1076
          %v1080 = vlaneseq
          %v1081 = vshrl.u32 %v1080, 7
          %v1082 = vsub.s32 0, %v1081
          %v1083 = vrot.slane %v1054, %v1082
          %v1085 = vmul.f32 %v1077, %v1083
          %v1086 = vmul.f32 %v1078, %v1083
          %v1088 = vlaneseq
          %v1089 = vshrl.u32 %v1088, 7
          %v1090 = vsub.s32 0, %v1089
          %v1091 = vrot.slane %v1055, %v1090
          %v1093 = vadd.f32 %v1085, %v1091
          %v1094 = vadd.f32 %v1086, %v1091
          %1095 = vst [vmem:[#allocation2] sm:$0xff] %v1093
          %1096 = vst [vmem:[#allocation2 + $0x8] sm:$0xff] %v1094
        $region152: #{tpu_custom_call.1} parent=99 // pred_fallthru
          _
        %v1097 = vld [vmem:[#allocation2] sm:$0xff]
        %v1098 = vld [vmem:[#allocation2 + $0x8] sm:$0xff]
        %v1099 = vpack.c.bf16 %v1098, %v1097
        %v1100 = vld [vmem:[%s868] sm:$0xff]
        %v1101 = vld [vmem:[%s868 + $0x8] sm:$0xf]
        %v1102 = vld [vmem:[%s868 + $0xc] sm:$0xff]
        %v1103 = vld [vmem:[%s868 + $0x14] sm:$0xf]
        %v1104 = vld [vmem:[%s868 + $0x18] sm:$0xff]
        %v1105 = vld [vmem:[%s868 + $0x20] sm:$0xf]
        %v1106 = vld [vmem:[%s868 + $0x24] sm:$0xff]
        %v1107 = vld [vmem:[%s868 + $0x2c] sm:$0xf]
        %v1108 = vld [vmem:[%s868 + $0x30] sm:$0xff]
        %v1109 = vld [vmem:[%s868 + $0x38] sm:$0xf]
        %v1110 = vld [vmem:[%s868 + $0x3c] sm:$0xff]
        %v1111 = vld [vmem:[%s868 + $0x44] sm:$0xf]
        %v1112 = vld [vmem:[%s868 + $0x48] sm:$0xff]
        %v1113 = vld [vmem:[%s868 + $0x50] sm:$0xf]
        %v1114 = vld [vmem:[%s868 + $0x54] sm:$0xff]
        %v1115 = vld [vmem:[%s868 + $0x5c] sm:$0xf]
        %v1116 = vld [vmem:[%s868 + $0x60] sm:$0xff]
        %v1117 = vld [vmem:[%s868 + $0x68] sm:$0xf]
        %v1118 = vld [vmem:[%s868 + $0x6c] sm:$0xff]
        %v1119 = vld [vmem:[%s868 + $0x74] sm:$0xf]
        %v1120 = vld [vmem:[%s868 + $0x78] sm:$0xff]
        %v1121 = vld [vmem:[%s868 + $0x80] sm:$0xf]
        %v1122 = vld [vmem:[%s868 + $0x84] sm:$0xff]
        %v1123 = vld [vmem:[%s868 + $0x8c] sm:$0xf]
        %v1124 = vld [vmem:[%s868 + $0x90] sm:$0xff]
        %v1125 = vld [vmem:[%s868 + $0x98] sm:$0xf]
        %v1126 = vld [vmem:[%s868 + $0x9c] sm:$0xff]
        %v1127 = vld [vmem:[%s868 + $0xa4] sm:$0xf]
        %v1128 = vld [vmem:[%s868 + $0xa8] sm:$0xff]
        %v1129 = vld [vmem:[%s868 + $0xb0] sm:$0xf]
        %v1130 = vld [vmem:[%s868 + $0xb4] sm:$0xff]
        %v1131 = vld [vmem:[%s868 + $0xbc] sm:$0xf]
        %v1132 = vld [vmem:[%s1030] sm:$0x7]
        %v1134 = vlaneseq
        %v1135 = vshrl.u32 %v1134, 7
        %v1136 = vsub.s32 0, %v1135
        %v1137 = vrot.slane %v1132, %v1136
        %v1138 = vlaneseq
        %v1139 = vshrl.u32 %v1138, 7
        %v1140 = vsub.s32 1, %v1139
        %v1141 = vrot.slane %v1132, %v1140
        %v1142 = vlaneseq
        %v1143 = vshrl.u32 %v1142, 7
        %v1144 = vsub.s32 2, %v1143
        %v1145 = vrot.slane %v1132, %v1144
        %v1181 = vunpack.c.l.b16 %v1100
        %v1182 = vunpack.c.h.b16 %v1100
        %v1183 = vunpack.c.l.b16 %v1101
        %v1184 = vunpack.c.l.b16 %v1102
        %v1185 = vunpack.c.h.b16 %v1102
        %v1186 = vunpack.c.l.b16 %v1103
        %v1187 = vunpack.c.l.b16 %v1104
        %v1188 = vunpack.c.h.b16 %v1104
        %v1189 = vunpack.c.l.b16 %v1105
        %v1190 = vunpack.c.l.b16 %v1106
        %v1191 = vunpack.c.h.b16 %v1106
        %v1192 = vunpack.c.l.b16 %v1107
        %v1193 = vunpack.c.l.b16 %v1108
        %v1194 = vunpack.c.h.b16 %v1108
        %v1195 = vunpack.c.l.b16 %v1109
        %v1196 = vunpack.c.l.b16 %v1110
        %v1197 = vunpack.c.h.b16 %v1110
        %v1198 = vunpack.c.l.b16 %v1111
        %v1199 = vunpack.c.l.b16 %v1112
        %v1200 = vunpack.c.h.b16 %v1112
        %v1201 = vunpack.c.l.b16 %v1113
        %v1202 = vunpack.c.l.b16 %v1114
        %v1203 = vunpack.c.h.b16 %v1114
        %v1204 = vunpack.c.l.b16 %v1115
        %v1205 = vunpack.c.l.b16 %v1116
        %v1206 = vunpack.c.h.b16 %v1116
        %v1207 = vunpack.c.l.b16 %v1117
        %v1208 = vunpack.c.l.b16 %v1118
        %v1209 = vunpack.c.h.b16 %v1118
        %v1210 = vunpack.c.l.b16 %v1119
        %v1211 = vunpack.c.l.b16 %v1120
        %v1212 = vunpack.c.h.b16 %v1120
        %v1213 = vunpack.c.l.b16 %v1121
        %v1214 = vunpack.c.l.b16 %v1122
        %v1215 = vunpack.c.h.b16 %v1122
        %v1216 = vunpack.c.l.b16 %v1123
        %v1217 = vunpack.c.l.b16 %v1124
        %v1218 = vunpack.c.h.b16 %v1124
        %v1219 = vunpack.c.l.b16 %v1125
        %v1220 = vunpack.c.l.b16 %v1126
        %v1221 = vunpack.c.h.b16 %v1126
        %v1222 = vunpack.c.l.b16 %v1127
        %v1223 = vunpack.c.l.b16 %v1128
        %v1224 = vunpack.c.h.b16 %v1128
        %v1225 = vunpack.c.l.b16 %v1129
        %v1226 = vunpack.c.l.b16 %v1130
        %v1227 = vunpack.c.h.b16 %v1130
        %v1228 = vunpack.c.l.b16 %v1131
        %v1229 = vpack.c.b16 %v1184, %v1181
        %v1230 = vpack.c.b16 %v1185, %v1182
        %v1231 = vpack.c.b16 %v1186, %v1183
        %v1232 = vpack.c.b16 %v1190, %v1187
        %v1233 = vpack.c.b16 %v1191, %v1188
        %v1234 = vpack.c.b16 %v1192, %v1189
        %v1235 = vpack.c.b16 %v1196, %v1193
        %v1236 = vpack.c.b16 %v1197, %v1194
        %v1237 = vpack.c.b16 %v1198, %v1195
        %v1238 = vpack.c.b16 %v1202, %v1199
        %v1239 = vpack.c.b16 %v1203, %v1200
        %v1240 = vpack.c.b16 %v1204, %v1201
        %v1241 = vpack.c.b16 %v1208, %v1205
        %v1242 = vpack.c.b16 %v1209, %v1206
        %v1243 = vpack.c.b16 %v1210, %v1207
        %v1244 = vpack.c.b16 %v1214, %v1211
        %v1245 = vpack.c.b16 %v1215, %v1212
        %v1246 = vpack.c.b16 %v1216, %v1213
        %v1247 = vpack.c.b16 %v1220, %v1217
        %v1248 = vpack.c.b16 %v1221, %v1218
        %v1249 = vpack.c.b16 %v1222, %v1219
        %v1250 = vpack.c.b16 %v1226, %v1223
        %v1251 = vpack.c.b16 %v1227, %v1224
        %v1252 = vpack.c.b16 %v1228, %v1225
        %1277 = vmatprep.subr.bf16.mxu0 %v1251
        %1278 = vmatpush1.bf16.msra.mxu0 %v1250
        %1279 = vmatprep.subr.bf16.mxu0 %v1248
        %1280 = vmatpush1.bf16.msra.mxu0 %v1247
        %1281 = vmatprep.subr.bf16.mxu0 %v1245
        %1282 = vmatpush1.bf16.msra.mxu0 %v1244
        %1283 = vmatprep.subr.bf16.mxu0 %v1242
        %1284 = vmatpush1.bf16.msra.mxu0 %v1241
        %1285 = vmatprep.subr.bf16.mxu0 %v1239
        %1286 = vmatpush1.bf16.msra.mxu0 %v1238
        %1287 = vmatprep.subr.bf16.mxu0 %v1236
        %1288 = vmatpush1.bf16.msra.mxu0 %v1235
        %1289 = vmatprep.subr.bf16.mxu0 %v1233
        %1290 = vmatpush1.bf16.msra.mxu0 %v1232
        %1291 = vmatprep.subr.bf16.mxu0 %v1230
        %1292 = vmatpush1.bf16.msra.mxu0 %v1229
        %1293 = vmatprep.subr.bf16.mxu0 0
        %1294 = vmatpush2.bf16.msra.mxu0 0
        %1295 = vmatprep.subr.bf16.mxu0 0
        %1296 = vmatpush2.bf16.msra.mxu0 0
        %1297 = vmatprep.subr.bf16.mxu0 0
        %1298 = vmatpush2.bf16.msra.mxu0 0
        %1299 = vmatprep.subr.bf16.mxu0 0
        %1300 = vmatpush2.bf16.msra.mxu0 0
        %1301 = vmatprep.subr.bf16.mxu0 0
        %1302 = vmatpush2.bf16.msra.mxu0 0
        %1303 = vmatprep.subr.bf16.mxu0 0
        %1304 = vmatpush2.bf16.msra.mxu0 0
        %1305 = vmatprep.subr.bf16.mxu0 0
        %1306 = vmatpush2.bf16.msra.mxu0 0
        %1307 = vmatprep.subr.bf16.mxu0 0
        %1308 = vmatpush2.bf16.msra.mxu0 0
        %1309 = vmatprep.mubr.bf16.mxu0 0
        %1310 = vmatmul.mubr.bf16.gmra.mxu0 %v1099
        %v1311 = vpop.f32.mrf.mxu0
        %v1312 = vadd.f32 %v1137, %v1311
        %v1313 = vpop.f32.mrf.mxu0
        %v1314 = vadd.f32 %v1141, %v1313
        %v1315 = vpop.f32.mrf.mxu0
        %v1316 = vadd.f32 %v1137, %v1315
        %v1317 = vpop.f32.mrf.mxu0
        %v1318 = vadd.f32 %v1141, %v1317
        %1319 = vdwg.mxu0
        %1320 = vmatprep.subr.bf16.mxu0 0
        %1321 = vmatpush1.bf16.msra.mxu0 %v1252
        %1322 = vmatprep.subr.bf16.mxu0 0
        %1323 = vmatpush1.bf16.msra.mxu0 %v1249
        %1324 = vmatprep.subr.bf16.mxu0 0
        %1325 = vmatpush1.bf16.msra.mxu0 %v1246
        %1326 = vmatprep.subr.bf16.mxu0 0
        %1327 = vmatpush1.bf16.msra.mxu0 %v1243
        %1328 = vmatprep.subr.bf16.mxu0 0
        %1329 = vmatpush1.bf16.msra.mxu0 %v1240
        %1330 = vmatprep.subr.bf16.mxu0 0
        %1331 = vmatpush1.bf16.msra.mxu0 %v1237
        %1332 = vmatprep.subr.bf16.mxu0 0
        %1333 = vmatpush1.bf16.msra.mxu0 %v1234
        %1334 = vmatprep.subr.bf16.mxu0 0
        %1335 = vmatpush1.bf16.msra.mxu0 %v1231
        %1336 = vmatprep.subr.bf16.mxu0 0
        %1337 = vmatpush2.bf16.msra.mxu0 0
        %1338 = vmatprep.subr.bf16.mxu0 0
        %1339 = vmatpush2.bf16.msra.mxu0 0
        %1340 = vmatprep.subr.bf16.mxu0 0
        %1341 = vmatpush2.bf16.msra.mxu0 0
        %1342 = vmatprep.subr.bf16.mxu0 0
        %1343 = vmatpush2.bf16.msra.mxu0 0
        %1344 = vmatprep.subr.bf16.mxu0 0
        %1345 = vmatpush2.bf16.msra.mxu0 0
        %1346 = vmatprep.subr.bf16.mxu0 0
        %1347 = vmatpush2.bf16.msra.mxu0 0
        %1348 = vmatprep.subr.bf16.mxu0 0
        %1349 = vmatpush2.bf16.msra.mxu0 0
        %1350 = vmatprep.subr.bf16.mxu0 0
        %1351 = vmatpush2.bf16.msra.mxu0 0
        %1352 = vmatprep.mubr.bf16.mxu0 0
        %1353 = vmatmul.mubr.bf16.gmra.mxu0 %v1099
        %v1354 = vpop.f32.mrf.mxu0
        %v1355 = vadd.f32 %v1145, %v1354
        %v1356 = vpop.f32.mrf.mxu0
        %v1357 = vpop.f32.mrf.mxu0
        %v1358 = vadd.f32 %v1145, %v1357
        %v1359 = vpop.f32.mrf.mxu0
        %1360 = vdwg.mxu0
        %v1361 = vld [vmem:[%s851] sm:$0x1]
        %v1362 = vsub.f32 1.0, %v1361
        %v1363 = vmul.f32 %v1362, -10000.0
        %v1364 = vpack.c.bf16 %v1316, %v1312
        %v1365 = vpack.c.bf16 %v1318, %v1314
        %vm1366 = vcmask 261120
        %v1368 = vsel %vm1366, %v1364, 0
        %v1371 = vsel %vm1366, %v1365, 0
        %1373 = vmatprep.subr.bf16.mxu0 0
        %1374 = vmatpush1.bf16.xpose.msra.mxu0 0
        %1375 = vmatprep.subr.bf16.mxu0 0
        %1376 = vmatpush1.bf16.xpose.msra.mxu0 0
        %1377 = vmatprep.subr.bf16.mxu0 0
        %1378 = vmatpush1.bf16.xpose.msra.mxu0 0
        %1379 = vmatprep.subr.bf16.mxu0 0
        %1380 = vmatpush1.bf16.xpose.msra.mxu0 0
        %1381 = vmatprep.subr.bf16.mxu0 0
        %1382 = vmatpush1.bf16.xpose.msra.mxu0 0
        %1383 = vmatprep.subr.bf16.mxu0 0
        %1384 = vmatpush1.bf16.xpose.msra.mxu0 0
        %1385 = vmatprep.subr.bf16.mxu0 0
        %1386 = vmatpush1.bf16.xpose.msra.mxu0 0
        %1387 = vmatprep.subr.bf16.mxu0 0
        %1388 = vmatpush1.bf16.xpose.msra.mxu0 %v1371
        %1389 = vmatprep.subr.bf16.mxu0 0
        %1390 = vmatpush2.bf16.xpose.msra.mxu0 0
        %1391 = vmatprep.subr.bf16.mxu0 0
        %1392 = vmatpush2.bf16.xpose.msra.mxu0 0
        %1393 = vmatprep.subr.bf16.mxu0 0
        %1394 = vmatpush2.bf16.xpose.msra.mxu0 0
        %1395 = vmatprep.subr.bf16.mxu0 0
        %1396 = vmatpush2.bf16.xpose.msra.mxu0 0
        %1397 = vmatprep.subr.bf16.mxu0 0
        %1398 = vmatpush2.bf16.xpose.msra.mxu0 0
        %1399 = vmatprep.subr.bf16.mxu0 0
        %1400 = vmatpush2.bf16.xpose.msra.mxu0 0
        %1401 = vmatprep.subr.bf16.mxu0 0
        %1402 = vmatpush2.bf16.xpose.msra.mxu0 0
        %1403 = vmatprep.subr.bf16.mxu0 0
        %1404 = vmatpush2.bf16.xpose.msra.mxu0 0
        %1405 = vmatprep.mubr.bf16.mxu0 0
        %1406 = vmatmul.mubr.bf16.gmra.mxu0 %v1368
        %v1407 = vpop.f32.mrf.mxu0
        %v1408 = vadd.f32 0.0, %v1407
        %v1409 = vpop.f32.mrf.mxu0
        %v1410 = vpop.f32.mrf.mxu0
        %v1411 = vadd.f32 0.0, %v1410
        %v1412 = vpop.f32.mrf.mxu0
        %1413 = vdwg.mxu0
        %v1414 = vmul.f32 %v1408, 0.17677669
        %v1415 = vmul.f32 %v1411, 0.17677669
        %v1417 = vlaneseq
        %v1418 = vshrl.u32 %v1417, 7
        %v1419 = vsub.s32 0, %v1418
        %v1420 = vrot.slane %v1363, %v1419
        %v1422 = vadd.f32 %v1414, %v1420
        %v1423 = vadd.f32 %v1415, %v1420
        %vm1424 = vcmask 130048
        %v1425 = vsel %vm1424, %v1422, -inf
        %1426 = vmax.xlane.f32.xlu0 %v1425
        %v1427 = vpop.xlane.xlu0 %1426
        %v1428 = vsel %vm1424, %v1423, -inf
        %1429 = vmax.xlane.f32.xlu0 %v1428
        %v1430 = vpop.xlane.xlu0 %1429
        %v1431 = vsub.f32 %v1422, %v1427
        %v1432 = vsub.f32 %v1423, %v1430
        %v1433 = vmul.f32 %v1431, 1.442695
        %v1434 = vpow.pop %v1433
        %v1435 = vmul.f32 %v1432, 1.442695
        %v1436 = vpow.pop %v1435
        %v1437 = vsel %vm1424, %v1434, 0.0
        %1438 = vadd.xlane.f32.xlu0 %v1437
        %v1439 = vpop.xlane.xlu0 %1438
        %v1440 = vsel %vm1424, %v1436, 0.0
        %1441 = vadd.xlane.f32.xlu0 %v1440
        %v1442 = vpop.xlane.xlu0 %1441
        %v1443 = vrcp.pop %v1439
        %v1444 = vmul.f32 %v1434, %v1443
        %v1445 = vrcp.pop %v1442
        %v1446 = vmul.f32 %v1436, %v1445
        %v1447 = vpack.c.bf16 %v1446, %v1444
        %v1448 = vpack.c.bf16 %v1358, %v1355
        %v1450 = vsel %vm1424, %v1447, 0
        %1452 = vmatprep.subr.bf16.mxu0 0
        %1453 = vmatpush1.bf16.msra.mxu0 0
        %1454 = vmatprep.subr.bf16.mxu0 0
        %1455 = vmatpush1.bf16.msra.mxu0 0
        %1456 = vmatprep.subr.bf16.mxu0 0
        %1457 = vmatpush1.bf16.msra.mxu0 0
        %1458 = vmatprep.subr.bf16.mxu0 0
        %1459 = vmatpush1.bf16.msra.mxu0 0
        %1460 = vmatprep.subr.bf16.mxu0 0
        %1461 = vmatpush1.bf16.msra.mxu0 0
        %1462 = vmatprep.subr.bf16.mxu0 0
        %1463 = vmatpush1.bf16.msra.mxu0 0
        %1464 = vmatprep.subr.bf16.mxu0 0
        %1465 = vmatpush1.bf16.msra.mxu0 0
        %1466 = vmatprep.subr.bf16.mxu0 0
        %1467 = vmatpush1.bf16.msra.mxu0 %v1448
        %1468 = vmatprep.subr.bf16.mxu0 0
        %1469 = vmatpush2.bf16.msra.mxu0 0
        %1470 = vmatprep.subr.bf16.mxu0 0
        %1471 = vmatpush2.bf16.msra.mxu0 0
        %1472 = vmatprep.subr.bf16.mxu0 0
        %1473 = vmatpush2.bf16.msra.mxu0 0
        %1474 = vmatprep.subr.bf16.mxu0 0
        %1475 = vmatpush2.bf16.msra.mxu0 0
        %1476 = vmatprep.subr.bf16.mxu0 0
        %1477 = vmatpush2.bf16.msra.mxu0 0
        %1478 = vmatprep.subr.bf16.mxu0 0
        %1479 = vmatpush2.bf16.msra.mxu0 0
        %1480 = vmatprep.subr.bf16.mxu0 0
        %1481 = vmatpush2.bf16.msra.mxu0 0
        %1482 = vmatprep.subr.bf16.mxu0 0
        %1483 = vmatpush2.bf16.msra.mxu0 0
        %1484 = vmatprep.mubr.bf16.mxu0 0
        %1485 = vmatmul.mubr.bf16.gmra.mxu0 %v1450
        %v1486 = vpop.f32.mrf.mxu0
        %v1487 = vadd.f32 0.0, %v1486
        %v1488 = vpop.f32.mrf.mxu0
        %v1489 = vpop.f32.mrf.mxu0
        %v1490 = vadd.f32 0.0, %v1489
        %v1491 = vpop.f32.mrf.mxu0
        %1492 = vdwg.mxu0
        %1494 = vrot.lane.b32.xlu0 %v1364, 96
        %v1495 = vpop.permute.xlu0 %1494
        %1497 = vrot.lane.b32.xlu0 %v1365, 96
        %v1498 = vpop.permute.xlu0 %1497
        %v1500 = vsel %vm1366, %v1495, 0
        %v1503 = vsel %vm1366, %v1498, 0
        %1505 = vmatprep.subr.bf16.mxu0 0
        %1506 = vmatpush1.bf16.xpose.msra.mxu0 0
        %1507 = vmatprep.subr.bf16.mxu0 0
        %1508 = vmatpush1.bf16.xpose.msra.mxu0 0
        %1509 = vmatprep.subr.bf16.mxu0 0
        %1510 = vmatpush1.bf16.xpose.msra.mxu0 0
        %1511 = vmatprep.subr.bf16.mxu0 0
        %1512 = vmatpush1.bf16.xpose.msra.mxu0 0
        %1513 = vmatprep.subr.bf16.mxu0 0
        %1514 = vmatpush1.bf16.xpose.msra.mxu0 0
        %1515 = vmatprep.subr.bf16.mxu0 0
        %1516 = vmatpush1.bf16.xpose.msra.mxu0 0
        %1517 = vmatprep.subr.bf16.mxu0 0
        %1518 = vmatpush1.bf16.xpose.msra.mxu0 0
        %1519 = vmatprep.subr.bf16.mxu0 0
        %1520 = vmatpush1.bf16.xpose.msra.mxu0 %v1503
        %1521 = vmatprep.subr.bf16.mxu0 0
        %1522 = vmatpush2.bf16.xpose.msra.mxu0 0
        %1523 = vmatprep.subr.bf16.mxu0 0
        %1524 = vmatpush2.bf16.xpose.msra.mxu0 0
        %1525 = vmatprep.subr.bf16.mxu0 0
        %1526 = vmatpush2.bf16.xpose.msra.mxu0 0
        %1527 = vmatprep.subr.bf16.mxu0 0
        %1528 = vmatpush2.bf16.xpose.msra.mxu0 0
        %1529 = vmatprep.subr.bf16.mxu0 0
        %1530 = vmatpush2.bf16.xpose.msra.mxu0 0
        %1531 = vmatprep.subr.bf16.mxu0 0
        %1532 = vmatpush2.bf16.xpose.msra.mxu0 0
        %1533 = vmatprep.subr.bf16.mxu0 0
        %1534 = vmatpush2.bf16.xpose.msra.mxu0 0
        %1535 = vmatprep.subr.bf16.mxu0 0
        %1536 = vmatpush2.bf16.xpose.msra.mxu0 0
        %1537 = vmatprep.mubr.bf16.mxu0 0
        %1538 = vmatmul.mubr.bf16.gmra.mxu0 %v1500
        %v1539 = vpop.f32.mrf.mxu0
        %v1540 = vadd.f32 0.0, %v1539
        %v1541 = vpop.f32.mrf.mxu0
        %v1542 = vpop.f32.mrf.mxu0
        %v1543 = vadd.f32 0.0, %v1542
        %v1544 = vpop.f32.mrf.mxu0
        %1545 = vdwg.mxu0
        %v1546 = vmul.f32 %v1540, 0.17677669
        %v1547 = vmul.f32 %v1543, 0.17677669
        %v1548 = vadd.f32 %v1546, %v1420
        %v1549 = vadd.f32 %v1547, %v1420
        %v1550 = vsel %vm1424, %v1548, -inf
        %1551 = vmax.xlane.f32.xlu0 %v1550
        %v1552 = vpop.xlane.xlu0 %1551
        %v1553 = vsel %vm1424, %v1549, -inf
        %1554 = vmax.xlane.f32.xlu0 %v1553
        %v1555 = vpop.xlane.xlu0 %1554
        %v1556 = vsub.f32 %v1548, %v1552
        %v1557 = vsub.f32 %v1549, %v1555
        %v1558 = vmul.f32 %v1556, 1.442695
        %v1559 = vpow.pop %v1558
        %v1560 = vmul.f32 %v1557, 1.442695
        %v1561 = vpow.pop %v1560
        %v1562 = vsel %vm1424, %v1559, 0.0
        %1563 = vadd.xlane.f32.xlu0 %v1562
        %v1564 = vpop.xlane.xlu0 %1563
        %v1565 = vsel %vm1424, %v1561, 0.0
        %1566 = vadd.xlane.f32.xlu0 %v1565
        %v1567 = vpop.xlane.xlu0 %1566
        %v1568 = vrcp.pop %v1564
        %v1569 = vmul.f32 %v1559, %v1568
        %v1570 = vrcp.pop %v1567
        %v1571 = vmul.f32 %v1561, %v1570
        %v1572 = vpack.c.bf16 %v1571, %v1569
        %1574 = vrot.lane.b32.xlu0 %v1448, 96
        %v1575 = vpop.permute.xlu0 %1574
        %v1578 = vsel %vm1424, %v1572, 0
        %1580 = vmatprep.subr.bf16.mxu0 0
        %1581 = vmatpush1.bf16.msra.mxu0 0
        %1582 = vmatprep.subr.bf16.mxu0 0
        %1583 = vmatpush1.bf16.msra.mxu0 0
        %1584 = vmatprep.subr.bf16.mxu0 0
        %1585 = vmatpush1.bf16.msra.mxu0 0
        %1586 = vmatprep.subr.bf16.mxu0 0
        %1587 = vmatpush1.bf16.msra.mxu0 0
        %1588 = vmatprep.subr.bf16.mxu0 0
        %1589 = vmatpush1.bf16.msra.mxu0 0
        %1590 = vmatprep.subr.bf16.mxu0 0
        %1591 = vmatpush1.bf16.msra.mxu0 0
        %1592 = vmatprep.subr.bf16.mxu0 0
        %1593 = vmatpush1.bf16.msra.mxu0 0
        %1594 = vmatprep.subr.bf16.mxu0 0
        %1595 = vmatpush1.bf16.msra.mxu0 %v1575
        %1596 = vmatprep.subr.bf16.mxu0 0
        %1597 = vmatpush2.bf16.msra.mxu0 0
        %1598 = vmatprep.subr.bf16.mxu0 0
        %1599 = vmatpush2.bf16.msra.mxu0 0
        %1600 = vmatprep.subr.bf16.mxu0 0
        %1601 = vmatpush2.bf16.msra.mxu0 0
        %1602 = vmatprep.subr.bf16.mxu0 0
        %1603 = vmatpush2.bf16.msra.mxu0 0
        %1604 = vmatprep.subr.bf16.mxu0 0
        %1605 = vmatpush2.bf16.msra.mxu0 0
        %1606 = vmatprep.subr.bf16.mxu0 0
        %1607 = vmatpush2.bf16.msra.mxu0 0
        %1608 = vmatprep.subr.bf16.mxu0 0
        %1609 = vmatpush2.bf16.msra.mxu0 0
        %1610 = vmatprep.subr.bf16.mxu0 0
        %1611 = vmatpush2.bf16.msra.mxu0 0
        %1612 = vmatprep.mubr.bf16.mxu0 0
        %1613 = vmatmul.mubr.bf16.gmra.mxu0 %v1578
        %v1614 = vpop.f32.mrf.mxu0
        %v1615 = vadd.f32 0.0, %v1614
        %v1616 = vpop.f32.mrf.mxu0
        %v1617 = vpop.f32.mrf.mxu0
        %v1618 = vadd.f32 0.0, %v1617
        %v1619 = vpop.f32.mrf.mxu0
        %1620 = vdwg.mxu0
        %1621 = vrot.lane.b32.xlu0 %v1364, 64
        %v1622 = vpop.permute.xlu0 %1621
        %1623 = vrot.lane.b32.xlu0 %v1365, 64
        %v1624 = vpop.permute.xlu0 %1623
        %v1626 = vsel %vm1366, %v1622, 0
        %v1629 = vsel %vm1366, %v1624, 0
        %1631 = vmatprep.subr.bf16.mxu0 0
        %1632 = vmatpush1.bf16.xpose.msra.mxu0 0
        %1633 = vmatprep.subr.bf16.mxu0 0
        %1634 = vmatpush1.bf16.xpose.msra.mxu0 0
        %1635 = vmatprep.subr.bf16.mxu0 0
        %1636 = vmatpush1.bf16.xpose.msra.mxu0 0
        %1637 = vmatprep.subr.bf16.mxu0 0
        %1638 = vmatpush1.bf16.xpose.msra.mxu0 0
        %1639 = vmatprep.subr.bf16.mxu0 0
        %1640 = vmatpush1.bf16.xpose.msra.mxu0 0
        %1641 = vmatprep.subr.bf16.mxu0 0
        %1642 = vmatpush1.bf16.xpose.msra.mxu0 0
        %1643 = vmatprep.subr.bf16.mxu0 0
        %1644 = vmatpush1.bf16.xpose.msra.mxu0 0
        %1645 = vmatprep.subr.bf16.mxu0 0
        %1646 = vmatpush1.bf16.xpose.msra.mxu0 %v1629
        %1647 = vmatprep.subr.bf16.mxu0 0
        %1648 = vmatpush2.bf16.xpose.msra.mxu0 0
        %1649 = vmatprep.subr.bf16.mxu0 0
        %1650 = vmatpush2.bf16.xpose.msra.mxu0 0
        %1651 = vmatprep.subr.bf16.mxu0 0
        %1652 = vmatpush2.bf16.xpose.msra.mxu0 0
        %1653 = vmatprep.subr.bf16.mxu0 0
        %1654 = vmatpush2.bf16.xpose.msra.mxu0 0
        %1655 = vmatprep.subr.bf16.mxu0 0
        %1656 = vmatpush2.bf16.xpose.msra.mxu0 0
        %1657 = vmatprep.subr.bf16.mxu0 0
        %1658 = vmatpush2.bf16.xpose.msra.mxu0 0
        %1659 = vmatprep.subr.bf16.mxu0 0
        %1660 = vmatpush2.bf16.xpose.msra.mxu0 0
        %1661 = vmatprep.subr.bf16.mxu0 0
        %1662 = vmatpush2.bf16.xpose.msra.mxu0 0
        %1663 = vmatprep.mubr.bf16.mxu0 0
        %1664 = vmatmul.mubr.bf16.gmra.mxu0 %v1626
        %v1665 = vpop.f32.mrf.mxu0
        %v1666 = vadd.f32 0.0, %v1665
        %v1667 = vpop.f32.mrf.mxu0
        %v1668 = vpop.f32.mrf.mxu0
        %v1669 = vadd.f32 0.0, %v1668
        %v1670 = vpop.f32.mrf.mxu0
        %1671 = vdwg.mxu0
        %v1672 = vmul.f32 %v1666, 0.17677669
        %v1673 = vmul.f32 %v1669, 0.17677669
        %v1674 = vadd.f32 %v1672, %v1420
        %v1675 = vadd.f32 %v1673, %v1420
        %v1676 = vsel %vm1424, %v1674, -inf
        %1677 = vmax.xlane.f32.xlu0 %v1676
        %v1678 = vpop.xlane.xlu0 %1677
        %v1679 = vsel %vm1424, %v1675, -inf
        %1680 = vmax.xlane.f32.xlu0 %v1679
        %v1681 = vpop.xlane.xlu0 %1680
        %v1682 = vsub.f32 %v1674, %v1678
        %v1683 = vsub.f32 %v1675, %v1681
        %v1684 = vmul.f32 %v1682, 1.442695
        %v1685 = vpow.pop %v1684
        %v1686 = vmul.f32 %v1683, 1.442695
        %v1687 = vpow.pop %v1686
        %v1688 = vsel %vm1424, %v1685, 0.0
        %1689 = vadd.xlane.f32.xlu0 %v1688
        %v1690 = vpop.xlane.xlu0 %1689
        %v1691 = vsel %vm1424, %v1687, 0.0
        %1692 = vadd.xlane.f32.xlu0 %v1691
        %v1693 = vpop.xlane.xlu0 %1692
        %v1694 = vrcp.pop %v1690
        %v1695 = vmul.f32 %v1685, %v1694
        %v1696 = vrcp.pop %v1693
        %v1697 = vmul.f32 %v1687, %v1696
        %v1698 = vpack.c.bf16 %v1697, %v1695
        %1699 = vrot.lane.b32.xlu0 %v1448, 64
        %v1700 = vpop.permute.xlu0 %1699
        %v1703 = vsel %vm1424, %v1698, 0
        %1705 = vmatprep.subr.bf16.mxu0 0
        %1706 = vmatpush1.bf16.msra.mxu0 0
        %1707 = vmatprep.subr.bf16.mxu0 0
        %1708 = vmatpush1.bf16.msra.mxu0 0
        %1709 = vmatprep.subr.bf16.mxu0 0
        %1710 = vmatpush1.bf16.msra.mxu0 0
        %1711 = vmatprep.subr.bf16.mxu0 0
        %1712 = vmatpush1.bf16.msra.mxu0 0
        %1713 = vmatprep.subr.bf16.mxu0 0
        %1714 = vmatpush1.bf16.msra.mxu0 0
        %1715 = vmatprep.subr.bf16.mxu0 0
        %1716 = vmatpush1.bf16.msra.mxu0 0
        %1717 = vmatprep.subr.bf16.mxu0 0
        %1718 = vmatpush1.bf16.msra.mxu0 0
        %1719 = vmatprep.subr.bf16.mxu0 0
        %1720 = vmatpush1.bf16.msra.mxu0 %v1700
        %1721 = vmatprep.subr.bf16.mxu0 0
        %1722 = vmatpush2.bf16.msra.mxu0 0
        %1723 = vmatprep.subr.bf16.mxu0 0
        %1724 = vmatpush2.bf16.msra.mxu0 0
        %1725 = vmatprep.subr.bf16.mxu0 0
        %1726 = vmatpush2.bf16.msra.mxu0 0
        %1727 = vmatprep.subr.bf16.mxu0 0
        %1728 = vmatpush2.bf16.msra.mxu0 0
        %1729 = vmatprep.subr.bf16.mxu0 0
        %1730 = vmatpush2.bf16.msra.mxu0 0
        %1731 = vmatprep.subr.bf16.mxu0 0
        %1732 = vmatpush2.bf16.msra.mxu0 0
        %1733 = vmatprep.subr.bf16.mxu0 0
        %1734 = vmatpush2.bf16.msra.mxu0 0
        %1735 = vmatprep.subr.bf16.mxu0 0
        %1736 = vmatpush2.bf16.msra.mxu0 0
        %1737 = vmatprep.mubr.bf16.mxu0 0
        %1738 = vmatmul.mubr.bf16.gmra.mxu0 %v1703
        %v1739 = vpop.f32.mrf.mxu0
        %v1740 = vadd.f32 0.0, %v1739
        %v1741 = vpop.f32.mrf.mxu0
        %v1742 = vpop.f32.mrf.mxu0
        %v1743 = vadd.f32 0.0, %v1742
        %v1744 = vpop.f32.mrf.mxu0
        %1745 = vdwg.mxu0
        %1746 = vrot.lane.b32.xlu0 %v1364, 32
        %v1747 = vpop.permute.xlu0 %1746
        %1748 = vrot.lane.b32.xlu0 %v1365, 32
        %v1749 = vpop.permute.xlu0 %1748
        %v1751 = vsel %vm1366, %v1747, 0
        %v1754 = vsel %vm1366, %v1749, 0
        %1756 = vmatprep.subr.bf16.mxu0 0
        %1757 = vmatpush1.bf16.xpose.msra.mxu0 0
        %1758 = vmatprep.subr.bf16.mxu0 0
        %1759 = vmatpush1.bf16.xpose.msra.mxu0 0
        %1760 = vmatprep.subr.bf16.mxu0 0
        %1761 = vmatpush1.bf16.xpose.msra.mxu0 0
        %1762 = vmatprep.subr.bf16.mxu0 0
        %1763 = vmatpush1.bf16.xpose.msra.mxu0 0
        %1764 = vmatprep.subr.bf16.mxu0 0
        %1765 = vmatpush1.bf16.xpose.msra.mxu0 0
        %1766 = vmatprep.subr.bf16.mxu0 0
        %1767 = vmatpush1.bf16.xpose.msra.mxu0 0
        %1768 = vmatprep.subr.bf16.mxu0 0
        %1769 = vmatpush1.bf16.xpose.msra.mxu0 0
        %1770 = vmatprep.subr.bf16.mxu0 0
        %1771 = vmatpush1.bf16.xpose.msra.mxu0 %v1754
        %1772 = vmatprep.subr.bf16.mxu0 0
        %1773 = vmatpush2.bf16.xpose.msra.mxu0 0
        %1774 = vmatprep.subr.bf16.mxu0 0
        %1775 = vmatpush2.bf16.xpose.msra.mxu0 0
        %1776 = vmatprep.subr.bf16.mxu0 0
        %1777 = vmatpush2.bf16.xpose.msra.mxu0 0
        %1778 = vmatprep.subr.bf16.mxu0 0
        %1779 = vmatpush2.bf16.xpose.msra.mxu0 0
        %1780 = vmatprep.subr.bf16.mxu0 0
        %1781 = vmatpush2.bf16.xpose.msra.mxu0 0
        %1782 = vmatprep.subr.bf16.mxu0 0
        %1783 = vmatpush2.bf16.xpose.msra.mxu0 0
        %1784 = vmatprep.subr.bf16.mxu0 0
        %1785 = vmatpush2.bf16.xpose.msra.mxu0 0
        %1786 = vmatprep.subr.bf16.mxu0 0
        %1787 = vmatpush2.bf16.xpose.msra.mxu0 0
        %1788 = vmatprep.mubr.bf16.mxu0 0
        %1789 = vmatmul.mubr.bf16.gmra.mxu0 %v1751
        %v1790 = vpop.f32.mrf.mxu0
        %v1791 = vadd.f32 0.0, %v1790
        %v1792 = vpop.f32.mrf.mxu0
        %v1793 = vpop.f32.mrf.mxu0
        %v1794 = vadd.f32 0.0, %v1793
        %v1795 = vpop.f32.mrf.mxu0
        %1796 = vdwg.mxu0
        %v1797 = vmul.f32 %v1791, 0.17677669
        %v1798 = vmul.f32 %v1794, 0.17677669
        %v1799 = vadd.f32 %v1797, %v1420
        %v1800 = vadd.f32 %v1798, %v1420
        %v1801 = vsel %vm1424, %v1799, -inf
        %1802 = vmax.xlane.f32.xlu0 %v1801
        %v1803 = vpop.xlane.xlu0 %1802
        %v1804 = vsel %vm1424, %v1800, -inf
        %1805 = vmax.xlane.f32.xlu0 %v1804
        %v1806 = vpop.xlane.xlu0 %1805
        %v1807 = vsub.f32 %v1799, %v1803
        %v1808 = vsub.f32 %v1800, %v1806
        %v1809 = vmul.f32 %v1807, 1.442695
        %v1810 = vpow.pop %v1809
        %v1811 = vmul.f32 %v1808, 1.442695
        %v1812 = vpow.pop %v1811
        %v1813 = vsel %vm1424, %v1810, 0.0
        %1814 = vadd.xlane.f32.xlu0 %v1813
        %v1815 = vpop.xlane.xlu0 %1814
        %v1816 = vsel %vm1424, %v1812, 0.0
        %1817 = vadd.xlane.f32.xlu0 %v1816
        %v1818 = vpop.xlane.xlu0 %1817
        %v1819 = vrcp.pop %v1815
        %v1820 = vmul.f32 %v1810, %v1819
        %v1821 = vrcp.pop %v1818
        %v1822 = vmul.f32 %v1812, %v1821
        %v1823 = vpack.c.bf16 %v1822, %v1820
        %1824 = vrot.lane.b32.xlu0 %v1448, 32
        %v1825 = vpop.permute.xlu0 %1824
        %v1828 = vsel %vm1424, %v1823, 0
        %1830 = vmatprep.subr.bf16.mxu0 0
        %1831 = vmatpush1.bf16.msra.mxu0 0
        %1832 = vmatprep.subr.bf16.mxu0 0
        %1833 = vmatpush1.bf16.msra.mxu0 0
        %1834 = vmatprep.subr.bf16.mxu0 0
        %1835 = vmatpush1.bf16.msra.mxu0 0
        %1836 = vmatprep.subr.bf16.mxu0 0
        %1837 = vmatpush1.bf16.msra.mxu0 0
        %1838 = vmatprep.subr.bf16.mxu0 0
        %1839 = vmatpush1.bf16.msra.mxu0 0
        %1840 = vmatprep.subr.bf16.mxu0 0
        %1841 = vmatpush1.bf16.msra.mxu0 0
        %1842 = vmatprep.subr.bf16.mxu0 0
        %1843 = vmatpush1.bf16.msra.mxu0 0
        %1844 = vmatprep.subr.bf16.mxu0 0
        %1845 = vmatpush1.bf16.msra.mxu0 %v1825
        %1846 = vmatprep.subr.bf16.mxu0 0
        %1847 = vmatpush2.bf16.msra.mxu0 0
        %1848 = vmatprep.subr.bf16.mxu0 0
        %1849 = vmatpush2.bf16.msra.mxu0 0
        %1850 = vmatprep.subr.bf16.mxu0 0
        %1851 = vmatpush2.bf16.msra.mxu0 0
        %1852 = vmatprep.subr.bf16.mxu0 0
        %1853 = vmatpush2.bf16.msra.mxu0 0
        %1854 = vmatprep.subr.bf16.mxu0 0
        %1855 = vmatpush2.bf16.msra.mxu0 0
        %1856 = vmatprep.subr.bf16.mxu0 0
        %1857 = vmatpush2.bf16.msra.mxu0 0
        %1858 = vmatprep.subr.bf16.mxu0 0
        %1859 = vmatpush2.bf16.msra.mxu0 0
        %1860 = vmatprep.subr.bf16.mxu0 0
        %1861 = vmatpush2.bf16.msra.mxu0 0
        %1862 = vmatprep.mubr.bf16.mxu0 0
        %1863 = vmatmul.mubr.bf16.gmra.mxu0 %v1828
        %v1864 = vpop.f32.mrf.mxu0
        %v1865 = vadd.f32 0.0, %v1864
        %v1866 = vpop.f32.mrf.mxu0
        %v1867 = vpop.f32.mrf.mxu0
        %v1868 = vadd.f32 0.0, %v1867
        %v1869 = vpop.f32.mrf.mxu0
        %1870 = vdwg.mxu0
        %1873 = vrot.lane.b32.xlu0 %v1615, 32
        %v1874 = vpop.permute.xlu0 %1873
        %1875 = vrot.lane.b32.xlu0 %v1618, 32
        %v1876 = vpop.permute.xlu0 %1875
        %1881 = vrot.lane.b32.xlu0 %v1740, 64
        %v1882 = vpop.permute.xlu0 %1881
        %1883 = vrot.lane.b32.xlu0 %v1743, 64
        %v1884 = vpop.permute.xlu0 %1883
        %1889 = vrot.lane.b32.xlu0 %v1865, 96
        %v1890 = vpop.permute.xlu0 %1889
        %1891 = vrot.lane.b32.xlu0 %v1868, 96
        %v1892 = vpop.permute.xlu0 %1891
        %v1895 = vsel %vm1366, %v1487, %v1874
        %v1896 = vsel %vm1366, %v1490, %v1876
        %vm1897 = vcmask 523264
        %v1898 = vsel %vm1897, %v1895, %v1882
        %v1899 = vsel %vm1897, %v1896, %v1884
        %vm1900 = vcmask 785408
        %v1901 = vsel %vm1900, %v1898, %v1890
        %v1902 = vsel %vm1900, %v1899, %v1892
        %v1903 = vpack.c.bf16 %v1902, %v1901
        %v1904 = vld [vmem:[%s877] sm:$0xf]
        %v1905 = vld [vmem:[%s877 + $0x4] sm:$0xf]
        %v1906 = vld [vmem:[%s877 + $0x8] sm:$0xf]
        %v1907 = vld [vmem:[%s877 + $0xc] sm:$0xf]
        %v1908 = vld [vmem:[%s877 + $0x10] sm:$0xf]
        %v1909 = vld [vmem:[%s877 + $0x14] sm:$0xf]
        %v1910 = vld [vmem:[%s877 + $0x18] sm:$0xf]
        %v1911 = vld [vmem:[%s877 + $0x1c] sm:$0xf]
        %v1912 = vld [vmem:[%s877 + $0x20] sm:$0xf]
        %v1913 = vld [vmem:[%s877 + $0x24] sm:$0xf]
        %v1914 = vld [vmem:[%s877 + $0x28] sm:$0xf]
        %v1915 = vld [vmem:[%s877 + $0x2c] sm:$0xf]
        %v1916 = vld [vmem:[%s877 + $0x30] sm:$0xf]
        %v1917 = vld [vmem:[%s877 + $0x34] sm:$0xf]
        %v1918 = vld [vmem:[%s877 + $0x38] sm:$0xf]
        %v1919 = vld [vmem:[%s877 + $0x3c] sm:$0xf]
        %v1920 = vld [vmem:[%s1033] sm:$0x1]
        %v1922 = vlaneseq
        %v1923 = vshrl.u32 %v1922, 7
        %v1924 = vsub.s32 0, %v1923
        %v1925 = vrot.slane %v1920, %v1924
        %v1943 = vunpack.c.l.b16 %v1904
        %v1944 = vunpack.c.l.b16 %v1905
        %v1945 = vunpack.c.l.b16 %v1906
        %v1946 = vunpack.c.l.b16 %v1907
        %v1947 = vunpack.c.l.b16 %v1908
        %v1948 = vunpack.c.l.b16 %v1909
        %v1949 = vunpack.c.l.b16 %v1910
        %v1950 = vunpack.c.l.b16 %v1911
        %v1951 = vunpack.c.l.b16 %v1912
        %v1952 = vunpack.c.l.b16 %v1913
        %v1953 = vunpack.c.l.b16 %v1914
        %v1954 = vunpack.c.l.b16 %v1915
        %v1955 = vunpack.c.l.b16 %v1916
        %v1956 = vunpack.c.l.b16 %v1917
        %v1957 = vunpack.c.l.b16 %v1918
        %v1958 = vunpack.c.l.b16 %v1919
        %v1959 = vpack.c.b16 %v1944, %v1943
        %v1960 = vpack.c.b16 %v1946, %v1945
        %v1961 = vpack.c.b16 %v1948, %v1947
        %v1962 = vpack.c.b16 %v1950, %v1949
        %v1963 = vpack.c.b16 %v1952, %v1951
        %v1964 = vpack.c.b16 %v1954, %v1953
        %v1965 = vpack.c.b16 %v1956, %v1955
        %v1966 = vpack.c.b16 %v1958, %v1957
        %1975 = vmatprep.subr.bf16.mxu0 0
        %1976 = vmatpush1.bf16.msra.mxu0 %v1966
        %1977 = vmatprep.subr.bf16.mxu0 0
        %1978 = vmatpush1.bf16.msra.mxu0 %v1965
        %1979 = vmatprep.subr.bf16.mxu0 0
        %1980 = vmatpush1.bf16.msra.mxu0 %v1964
        %1981 = vmatprep.subr.bf16.mxu0 0
        %1982 = vmatpush1.bf16.msra.mxu0 %v1963
        %1983 = vmatprep.subr.bf16.mxu0 0
        %1984 = vmatpush1.bf16.msra.mxu0 %v1962
        %1985 = vmatprep.subr.bf16.mxu0 0
        %1986 = vmatpush1.bf16.msra.mxu0 %v1961
        %1987 = vmatprep.subr.bf16.mxu0 0
        %1988 = vmatpush1.bf16.msra.mxu0 %v1960
        %1989 = vmatprep.subr.bf16.mxu0 0
        %1990 = vmatpush1.bf16.msra.mxu0 %v1959
        %1991 = vmatprep.subr.bf16.mxu0 0
        %1992 = vmatpush2.bf16.msra.mxu0 0
        %1993 = vmatprep.subr.bf16.mxu0 0
        %1994 = vmatpush2.bf16.msra.mxu0 0
        %1995 = vmatprep.subr.bf16.mxu0 0
        %1996 = vmatpush2.bf16.msra.mxu0 0
        %1997 = vmatprep.subr.bf16.mxu0 0
        %1998 = vmatpush2.bf16.msra.mxu0 0
        %1999 = vmatprep.subr.bf16.mxu0 0
        %2000 = vmatpush2.bf16.msra.mxu0 0
        %2001 = vmatprep.subr.bf16.mxu0 0
        %2002 = vmatpush2.bf16.msra.mxu0 0
        %2003 = vmatprep.subr.bf16.mxu0 0
        %2004 = vmatpush2.bf16.msra.mxu0 0
        %2005 = vmatprep.subr.bf16.mxu0 0
        %2006 = vmatpush2.bf16.msra.mxu0 0
        %2007 = vmatprep.mubr.bf16.mxu0 0
        %2008 = vmatmul.mubr.bf16.gmra.mxu0 %v1903
        %v2009 = vpop.f32.mrf.mxu0
        %v2010 = vadd.f32 %v1925, %v2009
        %v2011 = vpop.f32.mrf.mxu0
        %v2012 = vpop.f32.mrf.mxu0
        %v2013 = vadd.f32 %v1925, %v2012
        %v2014 = vpop.f32.mrf.mxu0
        %2015 = vdwg.mxu0
        %v2016 = vadd.f32 %v2010, %v1097
        %v2017 = vadd.f32 %v2013, %v1098
        %v2018 = vld [vmem:[%s885] sm:$0x1]
        %v2019 = vld [vmem:[%s893] sm:$0x1]
        %2020 = vadd.xlane.f32.xlu0 %v2016
        %v2021 = vpop.xlane.xlu0 %2020
        %2022 = vadd.xlane.f32.xlu0 %v2017
        %v2023 = vpop.xlane.xlu0 %2022
        %v2024 = vrcp.pop 128.0
        %v2025 = vmul.f32 %v2021, %v2024
        %v2026 = vmul.f32 %v2023, %v2024
        %v2027 = vsub.f32 %v2016, %v2025
        %v2028 = vsub.f32 %v2017, %v2026
        %v2029 = vmul.f32 %v2027, %v2027
        %v2030 = vmul.f32 %v2028, %v2028
        %2031 = vadd.xlane.f32.xlu0 %v2029
        %v2032 = vpop.xlane.xlu0 %2031
        %2033 = vadd.xlane.f32.xlu0 %v2030
        %v2034 = vpop.xlane.xlu0 %2033
        %v2035 = vmul.f32 %v2032, %v2024
        %v2036 = vmul.f32 %v2034, %v2024
        %v2037 = vadd.f32 %v2035, 1e-12
        %v2038 = vadd.f32 %v2036, 1e-12
        %v2039 = vrsqrt.pop %v2037
        %v2040 = vrsqrt.pop %v2038
        %v2041 = vmul.f32 %v2027, %v2039
        %v2042 = vmul.f32 %v2028, %v2040
        %v2044 = vlaneseq
        %v2045 = vshrl.u32 %v2044, 7
        %v2046 = vsub.s32 0, %v2045
        %v2047 = vrot.slane %v2018, %v2046
        %v2049 = vmul.f32 %v2041, %v2047
        %v2050 = vmul.f32 %v2042, %v2047
        %v2052 = vlaneseq
        %v2053 = vshrl.u32 %v2052, 7
        %v2054 = vsub.s32 0, %v2053
        %v2055 = vrot.slane %v2019, %v2054
        %v2057 = vadd.f32 %v2049, %v2055
        %v2058 = vadd.f32 %v2050, %v2055
        %v2059 = vpack.c.bf16 %v2058, %v2057
        %v2060 = vld [vmem:[%s902] sm:$0xff]
        %v2061 = vld [vmem:[%s902 + $0x8] sm:$0xff]
        %v2062 = vld [vmem:[%s902 + $0x10] sm:$0xff]
        %v2063 = vld [vmem:[%s902 + $0x18] sm:$0xff]
        %v2064 = vld [vmem:[%s902 + $0x20] sm:$0xff]
        %v2065 = vld [vmem:[%s902 + $0x28] sm:$0xff]
        %v2066 = vld [vmem:[%s902 + $0x30] sm:$0xff]
        %v2067 = vld [vmem:[%s902 + $0x38] sm:$0xff]
        %v2068 = vld [vmem:[%s902 + $0x40] sm:$0xff]
        %v2069 = vld [vmem:[%s902 + $0x48] sm:$0xff]
        %v2070 = vld [vmem:[%s902 + $0x50] sm:$0xff]
        %v2071 = vld [vmem:[%s902 + $0x58] sm:$0xff]
        %v2072 = vld [vmem:[%s902 + $0x60] sm:$0xff]
        %v2073 = vld [vmem:[%s902 + $0x68] sm:$0xff]
        %v2074 = vld [vmem:[%s902 + $0x70] sm:$0xff]
        %v2075 = vld [vmem:[%s902 + $0x78] sm:$0xff]
        %v2076 = vld [vmem:[%s902 + $0x80] sm:$0xff]
        %v2077 = vld [vmem:[%s902 + $0x88] sm:$0xff]
        %v2078 = vld [vmem:[%s902 + $0x90] sm:$0xff]
        %v2079 = vld [vmem:[%s902 + $0x98] sm:$0xff]
        %v2080 = vld [vmem:[%s902 + $0xa0] sm:$0xff]
        %v2081 = vld [vmem:[%s902 + $0xa8] sm:$0xff]
        %v2082 = vld [vmem:[%s902 + $0xb0] sm:$0xff]
        %v2083 = vld [vmem:[%s902 + $0xb8] sm:$0xff]
        %v2084 = vld [vmem:[%s902 + $0xc0] sm:$0xff]
        %v2085 = vld [vmem:[%s902 + $0xc8] sm:$0xff]
        %v2086 = vld [vmem:[%s902 + $0xd0] sm:$0xff]
        %v2087 = vld [vmem:[%s902 + $0xd8] sm:$0xff]
        %v2088 = vld [vmem:[%s902 + $0xe0] sm:$0xff]
        %v2089 = vld [vmem:[%s902 + $0xe8] sm:$0xff]
        %v2090 = vld [vmem:[%s902 + $0xf0] sm:$0xff]
        %v2091 = vld [vmem:[%s902 + $0xf8] sm:$0xff]
        %v2092 = vld [vmem:[%s1037] sm:$0xf]
        %v2094 = vlaneseq
        %v2095 = vshrl.u32 %v2094, 7
        %v2096 = vsub.s32 0, %v2095
        %v2097 = vrot.slane %v2092, %v2096
        %v2098 = vlaneseq
        %v2099 = vshrl.u32 %v2098, 7
        %v2100 = vsub.s32 1, %v2099
        %v2101 = vrot.slane %v2092, %v2100
        %v2102 = vlaneseq
        %v2103 = vshrl.u32 %v2102, 7
        %v2104 = vsub.s32 2, %v2103
        %v2105 = vrot.slane %v2092, %v2104
        %v2106 = vlaneseq
        %v2107 = vshrl.u32 %v2106, 7
        %v2108 = vsub.s32 3, %v2107
        %v2109 = vrot.slane %v2092, %v2108
        %v2146 = vunpack.c.l.b16 %v2060
        %v2147 = vunpack.c.h.b16 %v2060
        %v2148 = vunpack.c.l.b16 %v2061
        %v2149 = vunpack.c.h.b16 %v2061
        %v2150 = vunpack.c.l.b16 %v2062
        %v2151 = vunpack.c.h.b16 %v2062
        %v2152 = vunpack.c.l.b16 %v2063
        %v2153 = vunpack.c.h.b16 %v2063
        %v2154 = vunpack.c.l.b16 %v2064
        %v2155 = vunpack.c.h.b16 %v2064
        %v2156 = vunpack.c.l.b16 %v2065
        %v2157 = vunpack.c.h.b16 %v2065
        %v2158 = vunpack.c.l.b16 %v2066
        %v2159 = vunpack.c.h.b16 %v2066
        %v2160 = vunpack.c.l.b16 %v2067
        %v2161 = vunpack.c.h.b16 %v2067
        %v2162 = vunpack.c.l.b16 %v2068
        %v2163 = vunpack.c.h.b16 %v2068
        %v2164 = vunpack.c.l.b16 %v2069
        %v2165 = vunpack.c.h.b16 %v2069
        %v2166 = vunpack.c.l.b16 %v2070
        %v2167 = vunpack.c.h.b16 %v2070
        %v2168 = vunpack.c.l.b16 %v2071
        %v2169 = vunpack.c.h.b16 %v2071
        %v2170 = vunpack.c.l.b16 %v2072
        %v2171 = vunpack.c.h.b16 %v2072
        %v2172 = vunpack.c.l.b16 %v2073
        %v2173 = vunpack.c.h.b16 %v2073
        %v2174 = vunpack.c.l.b16 %v2074
        %v2175 = vunpack.c.h.b16 %v2074
        %v2176 = vunpack.c.l.b16 %v2075
        %v2177 = vunpack.c.h.b16 %v2075
        %v2178 = vunpack.c.l.b16 %v2076
        %v2179 = vunpack.c.h.b16 %v2076
        %v2180 = vunpack.c.l.b16 %v2077
        %v2181 = vunpack.c.h.b16 %v2077
        %v2182 = vunpack.c.l.b16 %v2078
        %v2183 = vunpack.c.h.b16 %v2078
        %v2184 = vunpack.c.l.b16 %v2079
        %v2185 = vunpack.c.h.b16 %v2079
        %v2186 = vunpack.c.l.b16 %v2080
        %v2187 = vunpack.c.h.b16 %v2080
        %v2188 = vunpack.c.l.b16 %v2081
        %v2189 = vunpack.c.h.b16 %v2081
        %v2190 = vunpack.c.l.b16 %v2082
        %v2191 = vunpack.c.h.b16 %v2082
        %v2192 = vunpack.c.l.b16 %v2083
        %v2193 = vunpack.c.h.b16 %v2083
        %v2194 = vunpack.c.l.b16 %v2084
        %v2195 = vunpack.c.h.b16 %v2084
        %v2196 = vunpack.c.l.b16 %v2085
        %v2197 = vunpack.c.h.b16 %v2085
        %v2198 = vunpack.c.l.b16 %v2086
        %v2199 = vunpack.c.h.b16 %v2086
        %v2200 = vunpack.c.l.b16 %v2087
        %v2201 = vunpack.c.h.b16 %v2087
        %v2202 = vunpack.c.l.b16 %v2088
        %v2203 = vunpack.c.h.b16 %v2088
        %v2204 = vunpack.c.l.b16 %v2089
        %v2205 = vunpack.c.h.b16 %v2089
        %v2206 = vunpack.c.l.b16 %v2090
        %v2207 = vunpack.c.h.b16 %v2090
        %v2208 = vunpack.c.l.b16 %v2091
        %v2209 = vunpack.c.h.b16 %v2091
        %v2210 = vpack.c.b16 %v2150, %v2146
        %v2211 = vpack.c.b16 %v2151, %v2147
        %v2212 = vpack.c.b16 %v2152, %v2148
        %v2213 = vpack.c.b16 %v2153, %v2149
        %v2214 = vpack.c.b16 %v2158, %v2154
        %v2215 = vpack.c.b16 %v2159, %v2155
        %v2216 = vpack.c.b16 %v2160, %v2156
        %v2217 = vpack.c.b16 %v2161, %v2157
        %v2218 = vpack.c.b16 %v2166, %v2162
        %v2219 = vpack.c.b16 %v2167, %v2163
        %v2220 = vpack.c.b16 %v2168, %v2164
        %v2221 = vpack.c.b16 %v2169, %v2165
        %v2222 = vpack.c.b16 %v2174, %v2170
        %v2223 = vpack.c.b16 %v2175, %v2171
        %v2224 = vpack.c.b16 %v2176, %v2172
        %v2225 = vpack.c.b16 %v2177, %v2173
        %v2226 = vpack.c.b16 %v2182, %v2178
        %v2227 = vpack.c.b16 %v2183, %v2179
        %v2228 = vpack.c.b16 %v2184, %v2180
        %v2229 = vpack.c.b16 %v2185, %v2181
        %v2230 = vpack.c.b16 %v2190, %v2186
        %v2231 = vpack.c.b16 %v2191, %v2187
        %v2232 = vpack.c.b16 %v2192, %v2188
        %v2233 = vpack.c.b16 %v2193, %v2189
        %v2234 = vpack.c.b16 %v2198, %v2194
        %v2235 = vpack.c.b16 %v2199, %v2195
        %v2236 = vpack.c.b16 %v2200, %v2196
        %v2237 = vpack.c.b16 %v2201, %v2197
        %v2238 = vpack.c.b16 %v2206, %v2202
        %v2239 = vpack.c.b16 %v2207, %v2203
        %v2240 = vpack.c.b16 %v2208, %v2204
        %v2241 = vpack.c.b16 %v2209, %v2205
        %2274 = vmatprep.subr.bf16.mxu0 %v2239
        %2275 = vmatpush1.bf16.msra.mxu0 %v2238
        %2276 = vmatprep.subr.bf16.mxu0 %v2235
        %2277 = vmatpush1.bf16.msra.mxu0 %v2234
        %2278 = vmatprep.subr.bf16.mxu0 %v2231
        %2279 = vmatpush1.bf16.msra.mxu0 %v2230
        %2280 = vmatprep.subr.bf16.mxu0 %v2227
        %2281 = vmatpush1.bf16.msra.mxu0 %v2226
        %2282 = vmatprep.subr.bf16.mxu0 %v2223
        %2283 = vmatpush1.bf16.msra.mxu0 %v2222
        %2284 = vmatprep.subr.bf16.mxu0 %v2219
        %2285 = vmatpush1.bf16.msra.mxu0 %v2218
        %2286 = vmatprep.subr.bf16.mxu0 %v2215
        %2287 = vmatpush1.bf16.msra.mxu0 %v2214
        %2288 = vmatprep.subr.bf16.mxu0 %v2211
        %2289 = vmatpush1.bf16.msra.mxu0 %v2210
        %2290 = vmatprep.subr.bf16.mxu0 0
        %2291 = vmatpush2.bf16.msra.mxu0 0
        %2292 = vmatprep.subr.bf16.mxu0 0
        %2293 = vmatpush2.bf16.msra.mxu0 0
        %2294 = vmatprep.subr.bf16.mxu0 0
        %2295 = vmatpush2.bf16.msra.mxu0 0
        %2296 = vmatprep.subr.bf16.mxu0 0
        %2297 = vmatpush2.bf16.msra.mxu0 0
        %2298 = vmatprep.subr.bf16.mxu0 0
        %2299 = vmatpush2.bf16.msra.mxu0 0
        %2300 = vmatprep.subr.bf16.mxu0 0
        %2301 = vmatpush2.bf16.msra.mxu0 0
        %2302 = vmatprep.subr.bf16.mxu0 0
        %2303 = vmatpush2.bf16.msra.mxu0 0
        %2304 = vmatprep.subr.bf16.mxu0 0
        %2305 = vmatpush2.bf16.msra.mxu0 0
        %2306 = vmatprep.mubr.bf16.mxu0 0
        %2307 = vmatmul.mubr.bf16.gmra.mxu0 %v2059
        %v2308 = vpop.f32.mrf.mxu0
        %v2309 = vadd.f32 %v2097, %v2308
        %v2310 = vpop.f32.mrf.mxu0
        %v2311 = vadd.f32 %v2101, %v2310
        %v2312 = vpop.f32.mrf.mxu0
        %v2313 = vadd.f32 %v2097, %v2312
        %v2314 = vpop.f32.mrf.mxu0
        %v2315 = vadd.f32 %v2101, %v2314
        %2316 = vdwg.mxu0
        %2317 = vmatprep.subr.bf16.mxu0 %v2241
        %2318 = vmatpush1.bf16.msra.mxu0 %v2240
        %2319 = vmatprep.subr.bf16.mxu0 %v2237
        %2320 = vmatpush1.bf16.msra.mxu0 %v2236
        %2321 = vmatprep.subr.bf16.mxu0 %v2233
        %2322 = vmatpush1.bf16.msra.mxu0 %v2232
        %2323 = vmatprep.subr.bf16.mxu0 %v2229
        %2324 = vmatpush1.bf16.msra.mxu0 %v2228
        %2325 = vmatprep.subr.bf16.mxu0 %v2225
        %2326 = vmatpush1.bf16.msra.mxu0 %v2224
        %2327 = vmatprep.subr.bf16.mxu0 %v2221
        %2328 = vmatpush1.bf16.msra.mxu0 %v2220
        %2329 = vmatprep.subr.bf16.mxu0 %v2217
        %2330 = vmatpush1.bf16.msra.mxu0 %v2216
        %2331 = vmatprep.subr.bf16.mxu0 %v2213
        %2332 = vmatpush1.bf16.msra.mxu0 %v2212
        %2333 = vmatprep.subr.bf16.mxu0 0
        %2334 = vmatpush2.bf16.msra.mxu0 0
        %2335 = vmatprep.subr.bf16.mxu0 0
        %2336 = vmatpush2.bf16.msra.mxu0 0
        %2337 = vmatprep.subr.bf16.mxu0 0
        %2338 = vmatpush2.bf16.msra.mxu0 0
        %2339 = vmatprep.subr.bf16.mxu0 0
        %2340 = vmatpush2.bf16.msra.mxu0 0
        %2341 = vmatprep.subr.bf16.mxu0 0
        %2342 = vmatpush2.bf16.msra.mxu0 0
        %2343 = vmatprep.subr.bf16.mxu0 0
        %2344 = vmatpush2.bf16.msra.mxu0 0
        %2345 = vmatprep.subr.bf16.mxu0 0
        %2346 = vmatpush2.bf16.msra.mxu0 0
        %2347 = vmatprep.subr.bf16.mxu0 0
        %2348 = vmatpush2.bf16.msra.mxu0 0
        %2349 = vmatprep.mubr.bf16.mxu0 0
        %2350 = vmatmul.mubr.bf16.gmra.mxu0 %v2059
        %v2351 = vpop.f32.mrf.mxu0
        %v2352 = vadd.f32 %v2105, %v2351
        %v2353 = vpop.f32.mrf.mxu0
        %v2354 = vadd.f32 %v2109, %v2353
        %v2355 = vpop.f32.mrf.mxu0
        %v2356 = vadd.f32 %v2105, %v2355
        %v2357 = vpop.f32.mrf.mxu0
        %v2358 = vadd.f32 %v2109, %v2357
        %2359 = vdwg.mxu0
        %v2360 = vmul.f32 %v2309, %v2309
        %v2361 = vmul.f32 %v2311, %v2311
        %v2362 = vmul.f32 %v2352, %v2352
        %v2363 = vmul.f32 %v2354, %v2354
        %v2364 = vmul.f32 %v2313, %v2313
        %v2365 = vmul.f32 %v2315, %v2315
        %v2366 = vmul.f32 %v2356, %v2356
        %v2367 = vmul.f32 %v2358, %v2358
        %v2368 = vmul.f32 %v2309, %v2360
        %v2369 = vmul.f32 %v2311, %v2361
        %v2370 = vmul.f32 %v2352, %v2362
        %v2371 = vmul.f32 %v2354, %v2363
        %v2372 = vmul.f32 %v2313, %v2364
        %v2373 = vmul.f32 %v2315, %v2365
        %v2374 = vmul.f32 %v2356, %v2366
        %v2375 = vmul.f32 %v2358, %v2367
        %v2376 = vmul.f32 %v2368, 0.044715
        %v2377 = vmul.f32 %v2369, 0.044715
        %v2378 = vmul.f32 %v2370, 0.044715
        %v2379 = vmul.f32 %v2371, 0.044715
        %v2380 = vmul.f32 %v2372, 0.044715
        %v2381 = vmul.f32 %v2373, 0.044715
        %v2382 = vmul.f32 %v2374, 0.044715
        %v2383 = vmul.f32 %v2375, 0.044715
        %v2384 = vadd.f32 %v2309, %v2376
        %v2385 = vadd.f32 %v2311, %v2377
        %v2386 = vadd.f32 %v2352, %v2378
        %v2387 = vadd.f32 %v2354, %v2379
        %v2388 = vadd.f32 %v2313, %v2380
        %v2389 = vadd.f32 %v2315, %v2381
        %v2390 = vadd.f32 %v2356, %v2382
        %v2391 = vadd.f32 %v2358, %v2383
        %v2392 = vmul.f32 %v2384, 0.7978846
        %v2393 = vmul.f32 %v2385, 0.7978846
        %v2394 = vmul.f32 %v2386, 0.7978846
        %v2395 = vmul.f32 %v2387, 0.7978846
        %v2396 = vmul.f32 %v2388, 0.7978846
        %v2397 = vmul.f32 %v2389, 0.7978846
        %v2398 = vmul.f32 %v2390, 0.7978846
        %v2399 = vmul.f32 %v2391, 0.7978846
        %v2400 = vtanh.pop %v2392
        %v2401 = vtanh.pop %v2393
        %v2402 = vtanh.pop %v2394
        %v2403 = vtanh.pop %v2395
        %v2404 = vtanh.pop %v2396
        %v2405 = vtanh.pop %v2397
        %v2406 = vtanh.pop %v2398
        %v2407 = vtanh.pop %v2399
        %v2408 = vadd.f32 %v2400, 1.0
        %v2409 = vadd.f32 %v2401, 1.0
        %v2410 = vadd.f32 %v2402, 1.0
        %v2411 = vadd.f32 %v2403, 1.0
        %v2412 = vadd.f32 %v2404, 1.0
        %v2413 = vadd.f32 %v2405, 1.0
        %v2414 = vadd.f32 %v2406, 1.0
        %v2415 = vadd.f32 %v2407, 1.0
        %v2416 = vmul.f32 %v2408, 0.5
        %v2417 = vmul.f32 %v2409, 0.5
        %v2418 = vmul.f32 %v2410, 0.5
        %v2419 = vmul.f32 %v2411, 0.5
        %v2420 = vmul.f32 %v2412, 0.5
        %v2421 = vmul.f32 %v2413, 0.5
        %v2422 = vmul.f32 %v2414, 0.5
        %v2423 = vmul.f32 %v2415, 0.5
        %v2424 = vmul.f32 %v2309, %v2416
        %v2425 = vmul.f32 %v2311, %v2417
        %v2426 = vmul.f32 %v2352, %v2418
        %v2427 = vmul.f32 %v2354, %v2419
        %v2428 = vmul.f32 %v2313, %v2420
        %v2429 = vmul.f32 %v2315, %v2421
        %v2430 = vmul.f32 %v2356, %v2422
        %v2431 = vmul.f32 %v2358, %v2423
        %v2432 = vpack.c.bf16 %v2428, %v2424
        %v2433 = vpack.c.bf16 %v2429, %v2425
        %v2434 = vpack.c.bf16 %v2430, %v2426
        %v2435 = vpack.c.bf16 %v2431, %v2427
        %v2436 = vld [vmem:[%s911] sm:$0xf]
        %v2437 = vld [vmem:[%s911 + $0x4] sm:$0xf]
        %v2438 = vld [vmem:[%s911 + $0x8] sm:$0xf]
        %v2439 = vld [vmem:[%s911 + $0xc] sm:$0xf]
        %v2440 = vld [vmem:[%s911 + $0x10] sm:$0xf]
        %v2441 = vld [vmem:[%s911 + $0x14] sm:$0xf]
        %v2442 = vld [vmem:[%s911 + $0x18] sm:$0xf]
        %v2443 = vld [vmem:[%s911 + $0x1c] sm:$0xf]
        %v2444 = vld [vmem:[%s911 + $0x20] sm:$0xf]
        %v2445 = vld [vmem:[%s911 + $0x24] sm:$0xf]
        %v2446 = vld [vmem:[%s911 + $0x28] sm:$0xf]
        %v2447 = vld [vmem:[%s911 + $0x2c] sm:$0xf]
        %v2448 = vld [vmem:[%s911 + $0x30] sm:$0xf]
        %v2449 = vld [vmem:[%s911 + $0x34] sm:$0xf]
        %v2450 = vld [vmem:[%s911 + $0x38] sm:$0xf]
        %v2451 = vld [vmem:[%s911 + $0x3c] sm:$0xf]
        %v2452 = vld [vmem:[%s911 + $0x40] sm:$0xf]
        %v2453 = vld [vmem:[%s911 + $0x44] sm:$0xf]
        %v2454 = vld [vmem:[%s911 + $0x48] sm:$0xf]
        %v2455 = vld [vmem:[%s911 + $0x4c] sm:$0xf]
        %v2456 = vld [vmem:[%s911 + $0x50] sm:$0xf]
        %v2457 = vld [vmem:[%s911 + $0x54] sm:$0xf]
        %v2458 = vld [vmem:[%s911 + $0x58] sm:$0xf]
        %v2459 = vld [vmem:[%s911 + $0x5c] sm:$0xf]
        %v2460 = vld [vmem:[%s911 + $0x60] sm:$0xf]
        %v2461 = vld [vmem:[%s911 + $0x64] sm:$0xf]
        %v2462 = vld [vmem:[%s911 + $0x68] sm:$0xf]
        %v2463 = vld [vmem:[%s911 + $0x6c] sm:$0xf]
        %v2464 = vld [vmem:[%s911 + $0x70] sm:$0xf]
        %v2465 = vld [vmem:[%s911 + $0x74] sm:$0xf]
        %v2466 = vld [vmem:[%s911 + $0x78] sm:$0xf]
        %v2467 = vld [vmem:[%s911 + $0x7c] sm:$0xf]
        %v2468 = vld [vmem:[%s911 + $0x80] sm:$0xf]
        %v2469 = vld [vmem:[%s911 + $0x84] sm:$0xf]
        %v2470 = vld [vmem:[%s911 + $0x88] sm:$0xf]
        %v2471 = vld [vmem:[%s911 + $0x8c] sm:$0xf]
        %v2472 = vld [vmem:[%s911 + $0x90] sm:$0xf]
        %v2473 = vld [vmem:[%s911 + $0x94] sm:$0xf]
        %v2474 = vld [vmem:[%s911 + $0x98] sm:$0xf]
        %v2475 = vld [vmem:[%s911 + $0x9c] sm:$0xf]
        %v2476 = vld [vmem:[%s911 + $0xa0] sm:$0xf]
        %v2477 = vld [vmem:[%s911 + $0xa4] sm:$0xf]
        %v2478 = vld [vmem:[%s911 + $0xa8] sm:$0xf]
        %v2479 = vld [vmem:[%s911 + $0xac] sm:$0xf]
        %v2480 = vld [vmem:[%s911 + $0xb0] sm:$0xf]
        %v2481 = vld [vmem:[%s911 + $0xb4] sm:$0xf]
        %v2482 = vld [vmem:[%s911 + $0xb8] sm:$0xf]
        %v2483 = vld [vmem:[%s911 + $0xbc] sm:$0xf]
        %v2484 = vld [vmem:[%s911 + $0xc0] sm:$0xf]
        %v2485 = vld [vmem:[%s911 + $0xc4] sm:$0xf]
        %v2486 = vld [vmem:[%s911 + $0xc8] sm:$0xf]
        %v2487 = vld [vmem:[%s911 + $0xcc] sm:$0xf]
        %v2488 = vld [vmem:[%s911 + $0xd0] sm:$0xf]
        %v2489 = vld [vmem:[%s911 + $0xd4] sm:$0xf]
        %v2490 = vld [vmem:[%s911 + $0xd8] sm:$0xf]
        %v2491 = vld [vmem:[%s911 + $0xdc] sm:$0xf]
        %v2492 = vld [vmem:[%s911 + $0xe0] sm:$0xf]
        %v2493 = vld [vmem:[%s911 + $0xe4] sm:$0xf]
        %v2494 = vld [vmem:[%s911 + $0xe8] sm:$0xf]
        %v2495 = vld [vmem:[%s911 + $0xec] sm:$0xf]
        %v2496 = vld [vmem:[%s911 + $0xf0] sm:$0xf]
        %v2497 = vld [vmem:[%s911 + $0xf4] sm:$0xf]
        %v2498 = vld [vmem:[%s911 + $0xf8] sm:$0xf]
        %v2499 = vld [vmem:[%s911 + $0xfc] sm:$0xf]
        %v2500 = vld [vmem:[%s1040] sm:$0x1]
        %v2502 = vlaneseq
        %v2503 = vshrl.u32 %v2502, 7
        %v2504 = vsub.s32 0, %v2503
        %v2505 = vrot.slane %v2500, %v2504
        %v2571 = vunpack.c.l.b16 %v2436
        %v2572 = vunpack.c.l.b16 %v2437
        %v2573 = vunpack.c.l.b16 %v2438
        %v2574 = vunpack.c.l.b16 %v2439
        %v2575 = vunpack.c.l.b16 %v2440
        %v2576 = vunpack.c.l.b16 %v2441
        %v2577 = vunpack.c.l.b16 %v2442
        %v2578 = vunpack.c.l.b16 %v2443
        %v2579 = vunpack.c.l.b16 %v2444
        %v2580 = vunpack.c.l.b16 %v2445
        %v2581 = vunpack.c.l.b16 %v2446
        %v2582 = vunpack.c.l.b16 %v2447
        %v2583 = vunpack.c.l.b16 %v2448
        %v2584 = vunpack.c.l.b16 %v2449
        %v2585 = vunpack.c.l.b16 %v2450
        %v2586 = vunpack.c.l.b16 %v2451
        %v2587 = vunpack.c.l.b16 %v2452
        %v2588 = vunpack.c.l.b16 %v2453
        %v2589 = vunpack.c.l.b16 %v2454
        %v2590 = vunpack.c.l.b16 %v2455
        %v2591 = vunpack.c.l.b16 %v2456
        %v2592 = vunpack.c.l.b16 %v2457
        %v2593 = vunpack.c.l.b16 %v2458
        %v2594 = vunpack.c.l.b16 %v2459
        %v2595 = vunpack.c.l.b16 %v2460
        %v2596 = vunpack.c.l.b16 %v2461
        %v2597 = vunpack.c.l.b16 %v2462
        %v2598 = vunpack.c.l.b16 %v2463
        %v2599 = vunpack.c.l.b16 %v2464
        %v2600 = vunpack.c.l.b16 %v2465
        %v2601 = vunpack.c.l.b16 %v2466
        %v2602 = vunpack.c.l.b16 %v2467
        %v2603 = vunpack.c.l.b16 %v2468
        %v2604 = vunpack.c.l.b16 %v2469
        %v2605 = vunpack.c.l.b16 %v2470
        %v2606 = vunpack.c.l.b16 %v2471
        %v2607 = vunpack.c.l.b16 %v2472
        %v2608 = vunpack.c.l.b16 %v2473
        %v2609 = vunpack.c.l.b16 %v2474
        %v2610 = vunpack.c.l.b16 %v2475
        %v2611 = vunpack.c.l.b16 %v2476
        %v2612 = vunpack.c.l.b16 %v2477
        %v2613 = vunpack.c.l.b16 %v2478
        %v2614 = vunpack.c.l.b16 %v2479
        %v2615 = vunpack.c.l.b16 %v2480
        %v2616 = vunpack.c.l.b16 %v2481
        %v2617 = vunpack.c.l.b16 %v2482
        %v2618 = vunpack.c.l.b16 %v2483
        %v2619 = vunpack.c.l.b16 %v2484
        %v2620 = vunpack.c.l.b16 %v2485
        %v2621 = vunpack.c.l.b16 %v2486
        %v2622 = vunpack.c.l.b16 %v2487
        %v2623 = vunpack.c.l.b16 %v2488
        %v2624 = vunpack.c.l.b16 %v2489
        %v2625 = vunpack.c.l.b16 %v2490
        %v2626 = vunpack.c.l.b16 %v2491
        %v2627 = vunpack.c.l.b16 %v2492
        %v2628 = vunpack.c.l.b16 %v2493
        %v2629 = vunpack.c.l.b16 %v2494
        %v2630 = vunpack.c.l.b16 %v2495
        %v2631 = vunpack.c.l.b16 %v2496
        %v2632 = vunpack.c.l.b16 %v2497
        %v2633 = vunpack.c.l.b16 %v2498
        %v2634 = vunpack.c.l.b16 %v2499
        %v2635 = vpack.c.b16 %v2572, %v2571
        %v2636 = vpack.c.b16 %v2574, %v2573
        %v2637 = vpack.c.b16 %v2576, %v2575
        %v2638 = vpack.c.b16 %v2578, %v2577
        %v2639 = vpack.c.b16 %v2580, %v2579
        %v2640 = vpack.c.b16 %v2582, %v2581
        %v2641 = vpack.c.b16 %v2584, %v2583
        %v2642 = vpack.c.b16 %v2586, %v2585
        %v2643 = vpack.c.b16 %v2588, %v2587
        %v2644 = vpack.c.b16 %v2590, %v2589
        %v2645 = vpack.c.b16 %v2592, %v2591
        %v2646 = vpack.c.b16 %v2594, %v2593
        %v2647 = vpack.c.b16 %v2596, %v2595
        %v2648 = vpack.c.b16 %v2598, %v2597
        %v2649 = vpack.c.b16 %v2600, %v2599
        %v2650 = vpack.c.b16 %v2602, %v2601
        %v2651 = vpack.c.b16 %v2604, %v2603
        %v2652 = vpack.c.b16 %v2606, %v2605
        %v2653 = vpack.c.b16 %v2608, %v2607
        %v2654 = vpack.c.b16 %v2610, %v2609
        %v2655 = vpack.c.b16 %v2612, %v2611
        %v2656 = vpack.c.b16 %v2614, %v2613
        %v2657 = vpack.c.b16 %v2616, %v2615
        %v2658 = vpack.c.b16 %v2618, %v2617
        %v2659 = vpack.c.b16 %v2620, %v2619
        %v2660 = vpack.c.b16 %v2622, %v2621
        %v2661 = vpack.c.b16 %v2624, %v2623
        %v2662 = vpack.c.b16 %v2626, %v2625
        %v2663 = vpack.c.b16 %v2628, %v2627
        %v2664 = vpack.c.b16 %v2630, %v2629
        %v2665 = vpack.c.b16 %v2632, %v2631
        %v2666 = vpack.c.b16 %v2634, %v2633
        %2699 = vmatprep.subr.bf16.mxu0 0
        %2700 = vmatpush1.bf16.msra.mxu0 %v2642
        %2701 = vmatprep.subr.bf16.mxu0 0
        %2702 = vmatpush1.bf16.msra.mxu0 %v2641
        %2703 = vmatprep.subr.bf16.mxu0 0
        %2704 = vmatpush1.bf16.msra.mxu0 %v2640
        %2705 = vmatprep.subr.bf16.mxu0 0
        %2706 = vmatpush1.bf16.msra.mxu0 %v2639
        %2707 = vmatprep.subr.bf16.mxu0 0
        %2708 = vmatpush1.bf16.msra.mxu0 %v2638
        %2709 = vmatprep.subr.bf16.mxu0 0
        %2710 = vmatpush1.bf16.msra.mxu0 %v2637
        %2711 = vmatprep.subr.bf16.mxu0 0
        %2712 = vmatpush1.bf16.msra.mxu0 %v2636
        %2713 = vmatprep.subr.bf16.mxu0 0
        %2714 = vmatpush1.bf16.msra.mxu0 %v2635
        %2715 = vmatprep.subr.bf16.mxu0 0
        %2716 = vmatpush2.bf16.msra.mxu0 %v2650
        %2717 = vmatprep.subr.bf16.mxu0 0
        %2718 = vmatpush2.bf16.msra.mxu0 %v2649
        %2719 = vmatprep.subr.bf16.mxu0 0
        %2720 = vmatpush2.bf16.msra.mxu0 %v2648
        %2721 = vmatprep.subr.bf16.mxu0 0
        %2722 = vmatpush2.bf16.msra.mxu0 %v2647
        %2723 = vmatprep.subr.bf16.mxu0 0
        %2724 = vmatpush2.bf16.msra.mxu0 %v2646
        %2725 = vmatprep.subr.bf16.mxu0 0
        %2726 = vmatpush2.bf16.msra.mxu0 %v2645
        %2727 = vmatprep.subr.bf16.mxu0 0
        %2728 = vmatpush2.bf16.msra.mxu0 %v2644
        %2729 = vmatprep.subr.bf16.mxu0 0
        %2730 = vmatpush2.bf16.msra.mxu0 %v2643
        %2731 = vmatprep.mubr.bf16.mxu0 %v2433
        %2732 = vmatmul.mubr.bf16.gmra.mxu0 %v2432
        %v2733 = vpop.f32.mrf.mxu0
        %v2734 = vadd.f32 %v2505, %v2733
        %v2735 = vpop.f32.mrf.mxu0
        %v2736 = vpop.f32.mrf.mxu0
        %v2737 = vadd.f32 %v2505, %v2736
        %v2738 = vpop.f32.mrf.mxu0
        %2739 = vdwg.mxu0
        %2740 = vmatprep.subr.bf16.mxu0 0
        %2741 = vmatpush1.bf16.msra.mxu0 %v2658
        %2742 = vmatprep.subr.bf16.mxu0 0
        %2743 = vmatpush1.bf16.msra.mxu0 %v2657
        %2744 = vmatprep.subr.bf16.mxu0 0
        %2745 = vmatpush1.bf16.msra.mxu0 %v2656
        %2746 = vmatprep.subr.bf16.mxu0 0
        %2747 = vmatpush1.bf16.msra.mxu0 %v2655
        %2748 = vmatprep.subr.bf16.mxu0 0
        %2749 = vmatpush1.bf16.msra.mxu0 %v2654
        %2750 = vmatprep.subr.bf16.mxu0 0
        %2751 = vmatpush1.bf16.msra.mxu0 %v2653
        %2752 = vmatprep.subr.bf16.mxu0 0
        %2753 = vmatpush1.bf16.msra.mxu0 %v2652
        %2754 = vmatprep.subr.bf16.mxu0 0
        %2755 = vmatpush1.bf16.msra.mxu0 %v2651
        %2756 = vmatprep.subr.bf16.mxu0 0
        %2757 = vmatpush2.bf16.msra.mxu0 %v2666
        %2758 = vmatprep.subr.bf16.mxu0 0
        %2759 = vmatpush2.bf16.msra.mxu0 %v2665
        %2760 = vmatprep.subr.bf16.mxu0 0
        %2761 = vmatpush2.bf16.msra.mxu0 %v2664
        %2762 = vmatprep.subr.bf16.mxu0 0
        %2763 = vmatpush2.bf16.msra.mxu0 %v2663
        %2764 = vmatprep.subr.bf16.mxu0 0
        %2765 = vmatpush2.bf16.msra.mxu0 %v2662
        %2766 = vmatprep.subr.bf16.mxu0 0
        %2767 = vmatpush2.bf16.msra.mxu0 %v2661
        %2768 = vmatprep.subr.bf16.mxu0 0
        %2769 = vmatpush2.bf16.msra.mxu0 %v2660
        %2770 = vmatprep.subr.bf16.mxu0 0
        %2771 = vmatpush2.bf16.msra.mxu0 %v2659
        %2772 = vmatprep.mubr.bf16.mxu0 %v2435
        %2773 = vmatmul.mubr.bf16.gmra.mxu0 %v2434
        %v2774 = vpop.f32.mrf.mxu0
        %v2775 = vadd.f32 %v2734, %v2774
        %v2776 = vpop.f32.mrf.mxu0
        %v2777 = vpop.f32.mrf.mxu0
        %v2778 = vadd.f32 %v2737, %v2777
        %v2779 = vpop.f32.mrf.mxu0
        %2780 = vdwg.mxu0
        %v2781 = vadd.f32 %v2775, %v2057
        %v2782 = vadd.f32 %v2778, %v2058
        %v2783 = vld [vmem:[%s1043] sm:$0x1]
        %v2784 = vld [vmem:[%s1046] sm:$0x1]
        %2785 = vadd.xlane.f32.xlu0 %v2781
        %v2786 = vpop.xlane.xlu0 %2785
        %2787 = vadd.xlane.f32.xlu0 %v2782
        %v2788 = vpop.xlane.xlu0 %2787
        %v2789 = vmul.f32 %v2786, %v2024
        %v2790 = vmul.f32 %v2788, %v2024
        %v2791 = vsub.f32 %v2781, %v2789
        %v2792 = vsub.f32 %v2782, %v2790
        %v2793 = vmul.f32 %v2791, %v2791
        %v2794 = vmul.f32 %v2792, %v2792
        %2795 = vadd.xlane.f32.xlu0 %v2793
        %v2796 = vpop.xlane.xlu0 %2795
        %2797 = vadd.xlane.f32.xlu0 %v2794
        %v2798 = vpop.xlane.xlu0 %2797
        %v2799 = vmul.f32 %v2796, %v2024
        %v2800 = vmul.f32 %v2798, %v2024
        %v2801 = vadd.f32 %v2799, 1e-12
        %v2802 = vadd.f32 %v2800, 1e-12
        %v2803 = vrsqrt.pop %v2801
        %v2804 = vrsqrt.pop %v2802
        %v2805 = vmul.f32 %v2791, %v2803
        %v2806 = vmul.f32 %v2792, %v2804
        %v2808 = vlaneseq
        %v2809 = vshrl.u32 %v2808, 7
        %v2810 = vsub.s32 0, %v2809
        %v2811 = vrot.slane %v2783, %v2810
        %v2813 = vmul.f32 %v2805, %v2811
        %v2814 = vmul.f32 %v2806, %v2811
        %v2816 = vlaneseq
        %v2817 = vshrl.u32 %v2816, 7
        %v2818 = vsub.s32 0, %v2817
        %v2819 = vrot.slane %v2784, %v2818
        %v2821 = vadd.f32 %v2813, %v2819
        %v2822 = vadd.f32 %v2814, %v2819
        %2823 = vst [vmem:[#allocation2] sm:$0xff] %v2821
        %2824 = vst [vmem:[#allocation2 + $0x8] sm:$0xff] %v2822
        %p2825 = scmp.eq.s32.totalorder %s47, 1
        // Predicated region
        $region153: #{tpu_custom_call.1} parent=99 // pred_check
          %p2826 = pneg %p2825
        $region154: #{tpu_custom_call.1} parent=99 // pred_check_branch
          %2828 = sbr.rel (%p2826) target = $region156
        $region155: #{tpu_custom_call.1} parent=99 // pred_region
          %v2829 = vpack.c.bf16 %v2821, %v2821
          %v2830 = vld [vmem:[#allocation17] sm:$0xf]
          %v2831 = vld [vmem:[#allocation17 + $0x4] sm:$0xf]
          %v2832 = vld [vmem:[#allocation17 + $0x8] sm:$0xf]
          %v2833 = vld [vmem:[#allocation17 + $0xc] sm:$0xf]
          %v2834 = vld [vmem:[#allocation17 + $0x10] sm:$0xf]
          %v2835 = vld [vmem:[#allocation17 + $0x14] sm:$0xf]
          %v2836 = vld [vmem:[#allocation17 + $0x18] sm:$0xf]
          %v2837 = vld [vmem:[#allocation17 + $0x1c] sm:$0xf]
          %v2838 = vld [vmem:[#allocation17 + $0x20] sm:$0xf]
          %v2839 = vld [vmem:[#allocation17 + $0x24] sm:$0xf]
          %v2840 = vld [vmem:[#allocation17 + $0x28] sm:$0xf]
          %v2841 = vld [vmem:[#allocation17 + $0x2c] sm:$0xf]
          %v2842 = vld [vmem:[#allocation17 + $0x30] sm:$0xf]
          %v2843 = vld [vmem:[#allocation17 + $0x34] sm:$0xf]
          %v2844 = vld [vmem:[#allocation17 + $0x38] sm:$0xf]
          %v2845 = vld [vmem:[#allocation17 + $0x3c] sm:$0xf]
          %v2846 = vld [vmem:[%s17] sm:$0x1]
          %v2863 = vunpack.c.l.b16 %v2830
          %v2864 = vunpack.c.l.b16 %v2831
          %v2865 = vunpack.c.l.b16 %v2832
          %v2866 = vunpack.c.l.b16 %v2833
          %v2867 = vunpack.c.l.b16 %v2834
          %v2868 = vunpack.c.l.b16 %v2835
          %v2869 = vunpack.c.l.b16 %v2836
          %v2870 = vunpack.c.l.b16 %v2837
          %v2871 = vunpack.c.l.b16 %v2838
          %v2872 = vunpack.c.l.b16 %v2839
          %v2873 = vunpack.c.l.b16 %v2840
          %v2874 = vunpack.c.l.b16 %v2841
          %v2875 = vunpack.c.l.b16 %v2842
          %v2876 = vunpack.c.l.b16 %v2843
          %v2877 = vunpack.c.l.b16 %v2844
          %v2878 = vunpack.c.l.b16 %v2845
          %v2879 = vpack.c.b16 %v2864, %v2863
          %v2880 = vpack.c.b16 %v2866, %v2865
          %v2881 = vpack.c.b16 %v2868, %v2867
          %v2882 = vpack.c.b16 %v2870, %v2869
          %v2883 = vpack.c.b16 %v2872, %v2871
          %v2884 = vpack.c.b16 %v2874, %v2873
          %v2885 = vpack.c.b16 %v2876, %v2875
          %v2886 = vpack.c.b16 %v2878, %v2877
          %2895 = vmatprep.subr.bf16.mxu0 0
          %2896 = vmatpush1.bf16.msra.mxu0 %v2886
          %2897 = vmatprep.subr.bf16.mxu0 0
          %2898 = vmatpush1.bf16.msra.mxu0 %v2885
          %2899 = vmatprep.subr.bf16.mxu0 0
          %2900 = vmatpush1.bf16.msra.mxu0 %v2884
          %2901 = vmatprep.subr.bf16.mxu0 0
          %2902 = vmatpush1.bf16.msra.mxu0 %v2883
          %2903 = vmatprep.subr.bf16.mxu0 0
          %2904 = vmatpush1.bf16.msra.mxu0 %v2882
          %2905 = vmatprep.subr.bf16.mxu0 0
          %2906 = vmatpush1.bf16.msra.mxu0 %v2881
          %2907 = vmatprep.subr.bf16.mxu0 0
          %2908 = vmatpush1.bf16.msra.mxu0 %v2880
          %2909 = vmatprep.subr.bf16.mxu0 0
          %2910 = vmatpush1.bf16.msra.mxu0 %v2879
          %2911 = vmatprep.subr.bf16.mxu0 0
          %2912 = vmatpush2.bf16.msra.mxu0 0
          %2913 = vmatprep.subr.bf16.mxu0 0
          %2914 = vmatpush2.bf16.msra.mxu0 0
          %2915 = vmatprep.subr.bf16.mxu0 0
          %2916 = vmatpush2.bf16.msra.mxu0 0
          %2917 = vmatprep.subr.bf16.mxu0 0
          %2918 = vmatpush2.bf16.msra.mxu0 0
          %2919 = vmatprep.subr.bf16.mxu0 0
          %2920 = vmatpush2.bf16.msra.mxu0 0
          %2921 = vmatprep.subr.bf16.mxu0 0
          %2922 = vmatpush2.bf16.msra.mxu0 0
          %2923 = vmatprep.subr.bf16.mxu0 0
          %2924 = vmatpush2.bf16.msra.mxu0 0
          %2925 = vmatprep.subr.bf16.mxu0 0
          %2926 = vmatpush2.bf16.msra.mxu0 0
          %2927 = vmatprep.mubr.bf16.mxu0 0
          %2928 = vmatmul.mubr.bf16.gmra.mxu0 %v2829
          %v2929 = vpop.f32.mrf.mxu0
          %v2930 = vadd.f32 %v2846, %v2929
          %v2931 = vpop.f32.mrf.mxu0
          %v2932 = vpop.f32.mrf.mxu0
          %v2933 = vpop.f32.mrf.mxu0
          %2934 = vdwg.mxu0
          %v2935 = vtanh.pop %v2930
          %v2936 = vpack.c.bf16 %v2935, %v2935
          %v2937 = vld [vmem:[#allocation18] sm:$0xf]
          %v2938 = vld [vmem:[#allocation18 + $0x4] sm:$0xf]
          %v2939 = vld [vmem:[#allocation18 + $0x8] sm:$0xf]
          %v2940 = vld [vmem:[#allocation18 + $0xc] sm:$0xf]
          %v2941 = vld [vmem:[#allocation18 + $0x10] sm:$0xf]
          %v2942 = vld [vmem:[#allocation18 + $0x14] sm:$0xf]
          %v2943 = vld [vmem:[#allocation18 + $0x18] sm:$0xf]
          %v2944 = vld [vmem:[#allocation18 + $0x1c] sm:$0xf]
          %v2945 = vld [vmem:[#allocation18 + $0x20] sm:$0xf]
          %v2946 = vld [vmem:[#allocation18 + $0x24] sm:$0xf]
          %v2947 = vld [vmem:[#allocation18 + $0x28] sm:$0xf]
          %v2948 = vld [vmem:[#allocation18 + $0x2c] sm:$0xf]
          %v2949 = vld [vmem:[#allocation18 + $0x30] sm:$0xf]
          %v2950 = vld [vmem:[#allocation18 + $0x34] sm:$0xf]
          %v2951 = vld [vmem:[#allocation18 + $0x38] sm:$0xf]
          %v2952 = vld [vmem:[#allocation18 + $0x3c] sm:$0xf]
          %v2953 = vld [vmem:[%s19] sm:$0x1]
          %v2970 = vunpack.c.l.b16 %v2937
          %v2971 = vunpack.c.l.b16 %v2938
          %v2972 = vunpack.c.l.b16 %v2939
          %v2973 = vunpack.c.l.b16 %v2940
          %v2974 = vunpack.c.l.b16 %v2941
          %v2975 = vunpack.c.l.b16 %v2942
          %v2976 = vunpack.c.l.b16 %v2943
          %v2977 = vunpack.c.l.b16 %v2944
          %v2978 = vunpack.c.l.b16 %v2945
          %v2979 = vunpack.c.l.b16 %v2946
          %v2980 = vunpack.c.l.b16 %v2947
          %v2981 = vunpack.c.l.b16 %v2948
          %v2982 = vunpack.c.l.b16 %v2949
          %v2983 = vunpack.c.l.b16 %v2950
          %v2984 = vunpack.c.l.b16 %v2951
          %v2985 = vunpack.c.l.b16 %v2952
          %v2986 = vpack.c.b16 %v2971, %v2970
          %v2987 = vpack.c.b16 %v2973, %v2972
          %v2988 = vpack.c.b16 %v2975, %v2974
          %v2989 = vpack.c.b16 %v2977, %v2976
          %v2990 = vpack.c.b16 %v2979, %v2978
          %v2991 = vpack.c.b16 %v2981, %v2980
          %v2992 = vpack.c.b16 %v2983, %v2982
          %v2993 = vpack.c.b16 %v2985, %v2984
          %3002 = vmatprep.subr.bf16.mxu0 0
          %3003 = vmatpush1.bf16.msra.mxu0 %v2993
          %3004 = vmatprep.subr.bf16.mxu0 0
          %3005 = vmatpush1.bf16.msra.mxu0 %v2992
          %3006 = vmatprep.subr.bf16.mxu0 0
          %3007 = vmatpush1.bf16.msra.mxu0 %v2991
          %3008 = vmatprep.subr.bf16.mxu0 0
          %3009 = vmatpush1.bf16.msra.mxu0 %v2990
          %3010 = vmatprep.subr.bf16.mxu0 0
          %3011 = vmatpush1.bf16.msra.mxu0 %v2989
          %3012 = vmatprep.subr.bf16.mxu0 0
          %3013 = vmatpush1.bf16.msra.mxu0 %v2988
          %3014 = vmatprep.subr.bf16.mxu0 0
          %3015 = vmatpush1.bf16.msra.mxu0 %v2987
          %3016 = vmatprep.subr.bf16.mxu0 0
          %3017 = vmatpush1.bf16.msra.mxu0 %v2986
          %3018 = vmatprep.subr.bf16.mxu0 0
          %3019 = vmatpush2.bf16.msra.mxu0 0
          %3020 = vmatprep.subr.bf16.mxu0 0
          %3021 = vmatpush2.bf16.msra.mxu0 0
          %3022 = vmatprep.subr.bf16.mxu0 0
          %3023 = vmatpush2.bf16.msra.mxu0 0
          %3024 = vmatprep.subr.bf16.mxu0 0
          %3025 = vmatpush2.bf16.msra.mxu0 0
          %3026 = vmatprep.subr.bf16.mxu0 0
          %3027 = vmatpush2.bf16.msra.mxu0 0
          %3028 = vmatprep.subr.bf16.mxu0 0
          %3029 = vmatpush2.bf16.msra.mxu0 0
          %3030 = vmatprep.subr.bf16.mxu0 0
          %3031 = vmatpush2.bf16.msra.mxu0 0
          %3032 = vmatprep.subr.bf16.mxu0 0
          %3033 = vmatpush2.bf16.msra.mxu0 0
          %3034 = vmatprep.mubr.bf16.mxu0 0
          %3035 = vmatmul.mubr.bf16.gmra.mxu0 %v2936
          %v3036 = vpop.f32.mrf.mxu0
          %v3037 = vadd.f32 %v2953, %v3036
          %v3038 = vpop.f32.mrf.mxu0
          %v3039 = vpop.f32.mrf.mxu0
          %v3040 = vpop.f32.mrf.mxu0
          %3041 = vdwg.mxu0
          %3042 = vst [vmem:[%s1026] sm:$0x1] %v3037
        $region156: #{tpu_custom_call.1} parent=99 // pred_fallthru
          _
        %s3043 = sand.u32 %s552, 1
        %s3044 = scalar_lea.sflag [#allocation5], %s3043
        %s3045 = sand.u32 %s552, 1
        %s3046 = scalar_lea.vmem [#allocation20], %s3045
        // Predicated region
        $region157: #{tpu_custom_call.1} parent=99 // pred_check
          %p3047 = pneg %p562
        $region158: #{tpu_custom_call.1} parent=99 // pred_check_branch
          %3049 = sbr.rel (%p3047) target = $region160
        $region159: #{tpu_custom_call.1} parent=99 // pred_region
          %s3051 = ssub.s32 16, 16
          %3052 = vsyncadd %s3044, %s3051
          %s3053 = smul.addr %s46, 16
          %s3054 = scalar_lea.hbm %s20, %s3053
          %s3056 = sshll.u32 %s3046, 4
          %s3057 = int_to_ptr.vmem [resolvable:$true] %s3056
          %3059 = dma.vmem_to_hbm [thread:$0]  %s3057, 16, %s3054, %s3044
        $region160: #{tpu_custom_call.1} parent=99 // pred_fallthru
          _
      $region100: #{tpu_custom_call.1} parent=5 // pred_fallthru
        _
      %p3060 = scmp.le.s32.totalorder 2, %s37
      // Predicated region
      $region161: #{tpu_custom_call.1} parent=5 // pred_check
        %p3061 = pneg %p3060
      $region162: #{tpu_custom_call.1} parent=5 // pred_check_branch
        %3063 = sbr.rel (%p3061) target = $region164
      $region163: #{tpu_custom_call.1} parent=5 // pred_region
        %s3064 = ssub.s32 %s37, 2
        // Predicated region
        $region165: #{tpu_custom_call.1} parent=163 // pred_check
          %p3065 = pneg %p568
        $region166: #{tpu_custom_call.1} parent=163 // pred_check_branch
          %3067 = sbr.rel (%p3065) target = $region168
        $region167: #{tpu_custom_call.1} parent=163 // pred_region
          %s3068 = sand.u32 %s553, 1
          %s3069 = scalar_lea.sflag [#allocation5], %s3068
          %s3070 = sand.u32 %s553, 1
          %s3071 = scalar_lea.vmem [#allocation20], %s3070
          %3072 = dma.done %s3069, 16
        $region168: #{tpu_custom_call.1} parent=163 // pred_fallthru
          _
      $region164: #{tpu_custom_call.1} parent=5 // pred_fallthru
        _
    $region6: #{tpu_custom_call.1} parent=1 // loop_footer
      %s41 = sadd.s32 1, %s37
    $region7: #{tpu_custom_call.1} parent=1 // loop_footer_branch
      %36 = sbr.rel target = $region3
    $region8: #{tpu_custom_call.1} parent=1 // loop_exit
      _
    %3073 = vsyncpa [#allocation4], 1
    %s3074 = scalar_lea.sflag [#allocation4], 1
    %3075 = vsyncpa %s3074, 1
    %3076 = vsyncpa [#allocation7], 1
    %s3077 = scalar_lea.sflag [#allocation7], 1
    %3078 = vsyncpa %s3077, 1
    %3079 = vsyncpa [#allocation10], 1
    %3080 = vsyncpa [#allocation19], 1
    %3081 = vsyncpa [#allocation5], 1
    %s3082 = scalar_lea.sflag [#allocation5], 1
    %3083 = vsyncpa %s3082, 1

</llo_original>
